<compile_context>
chip_gen: v6e
topology: v6e:2x2x1
jax: 0.10.0
libtpu: 0.0.40
codegen_flags: <defaults>
</compile_context>

<pallas_src>
import numpy as np
import jax
import jax.numpy as jnp
from jax.experimental import pallas as pl
from jax.experimental.pallas import tpu as pltpu


# --------------------------------------------------------------------------
# Pallas kernel
# --------------------------------------------------------------------------
def _lstm_gates(gates, c, H):
    """LSTM gate math with wrapper-permuted gate column order (i, f, o, g).

    i/f/o occupy the contiguous [0:3H) lanes -> a single sigmoid push; g at
    [3H:4H) gets one tanh; plus tanh(c_new): 3 EUP pushes per step.
    """
    ifo = jax.nn.sigmoid(gates[:, 0:3 * H])
    g = jnp.tanh(gates[:, 3 * H:4 * H])
    i = ifo[:, 0:H]
    f = ifo[:, H:2 * H]
    o = ifo[:, 2 * H:3 * H]
    c_new = f * c + i * g
    h_new = o * jnp.tanh(c_new)
    return h_new, c_new


def _recognizer_kernel(hwrt_ref, char_ref,
                       wx_e_ref, wh_e_ref, b_e_ref,
                       w_att_c_ref, b_att_ref,
                       w_cmb_c_ref, w_cmb_a_ref, b_cmb_ref,
                       wx_d_ref, b_d_ref,
                       w_hfused_ref, w_out_ref, b_out_ref,
                       out_ref):
    H = wh_e_ref.shape[0]
    T_enc = hwrt_ref.shape[0]
    T_dec_m1 = out_ref.shape[0]
    S = b_att_ref.shape[1]          # max_stroke_length

    # ---------------- encoder LSTM (batch=1, seq over T_enc) ----------------
    # Input projection hoisted out of the recurrence: one batched MXU pass.
    x_proj_e = (jnp.dot(hwrt_ref[...], wx_e_ref[...],
                        preferred_element_type=jnp.float32)
                + b_e_ref[...])                              # (T_enc, 4H)
    wh_e = wh_e_ref[...]

    h = jnp.zeros((1, H), jnp.float32)
    c = jnp.zeros((1, H), jnp.float32)
    enc_rows = []
    # Fully unrolled recurrence (static trip count) -> straight-line code,
    # only one serial matmul (h @ W_hh) per step remains on the critical chain.
    for t in range(T_enc):
        gates = x_proj_e[t:t + 1, :] + jnp.dot(
            h, wh_e, preferred_element_type=jnp.float32)
        h, c = _lstm_gates(gates, c, H)
        enc_rows.append(h)

    # Register-resident encoder outputs, zero-padded up to max_stroke_length.
    # Rows >= T_enc are 0, which reproduces softmax over the full
    # max_stroke_length logits followed by attention_weights[:, :hwrt_seq_len]
    # @ encoder_outputs, exactly like the PyTorch code.
    if S > T_enc:
        enc_rows.append(jnp.zeros((S - T_enc, H), jnp.float32))
    enc_pad = jnp.concatenate(enc_rows, axis=0)              # (S, H)

    # Fold attention_combine's attention-half into the loop-invariant encoder
    # outputs: (att_w @ enc) @ W_cmb_a == att_w @ (enc @ W_cmb_a).
    enc_cmb = jnp.dot(enc_pad, w_cmb_a_ref[...],
                      preferred_element_type=jnp.float32)    # (S, O)

    # ---------------- attention decoder (char_seq_len - 1 steps) ------------
    # Char-dependent projections do not feed the recurrence -> precompute as
    # two batched matmuls.
    char_cur = char_ref[:T_dec_m1, :]                        # (T_dec-1, O)
    char_att = (jnp.dot(char_cur, w_att_c_ref[...],
                        preferred_element_type=jnp.float32)
                + b_att_ref[...])                            # (T_dec-1, S)
    char_cmb = (jnp.dot(char_cur, w_cmb_c_ref[...],
                        preferred_element_type=jnp.float32)
                + b_cmb_ref[...])                            # (T_dec-1, O)

    wx_d = wx_d_ref[...]
    b_d = b_d_ref[...]
    w_hf = w_hfused_ref[...]        # (H, 4H + S) = [W_hh_dec(permuted) | W_att_h]

    hdec_rows = []
    for t in range(T_dec_m1):
        # One fused matmul on the old hidden state: recurrent gates + attention logits.
        h_proj = jnp.dot(h, w_hf, preferred_element_type=jnp.float32)   # (1, 4H+S)
        gate_h = h_proj[:, :4 * H]                           # lane-aligned first vreg
        att_h = h_proj[:, 4 * H:]                            # (1, S)

        # attention(cat(char, h)) -> concat folded into precomputed + fused parts
        att_w = jax.nn.softmax(char_att[t:t + 1, :] + att_h, axis=1)

        # relu(attention_combine(cat(char, attention_applied))) with the
        # attention-half matmul folded into enc_cmb (one dot instead of two).
        dec_in = jnp.maximum(
            char_cmb[t:t + 1, :]
            + jnp.dot(att_w, enc_cmb, preferred_element_type=jnp.float32),
            0.0)                                             # (1, O)

        gates = (jnp.dot(dec_in, wx_d, preferred_element_type=jnp.float32)
                 + gate_h + b_d)
        h, c = _lstm_gates(gates, c, H)
        hdec_rows.append(h)

    # ---------------- output head (off the serial chain) --------------------
    h_dec = jnp.concatenate(hdec_rows, axis=0)               # (T_dec-1, H)
    logits = (jnp.dot(h_dec, w_out_ref[...],
                      preferred_element_type=jnp.float32)
              + b_out_ref[...])                              # (T_dec-1, O)
    out_ref[...] = jax.nn.softmax(logits, axis=1)            # single dense store


# --------------------------------------------------------------------------
# Wrapper: parameter plumbing + pallas_call
# --------------------------------------------------------------------------
def _permute_gates(w, axis):
    """Reorder the 4H gate blocks from PyTorch (i, f, g, o) to (i, f, o, g)."""
    i, f, g, o = jnp.split(w, 4, axis=axis)
    return jnp.concatenate([i, f, o, g], axis=axis)


def handwriting_recognizer(hwrt_seq, char_seq, params, max_stroke_length):
    O = char_seq.shape[1]
    T_dec = char_seq.shape[0]

    # Pre-transpose PyTorch (out, in) weights to (in, out); fuse the two LSTM
    # biases; permute gate columns to the (i, f, o, g) layout the kernel uses.
    wx_e = _permute_gates(params["enc_w_ih"].T, axis=1)      # (I, 4H)
    wh_e = _permute_gates(params["enc_w_hh"].T, axis=1)      # (H, 4H)
    b_e = _permute_gates(
        (params["enc_b_ih"] + params["enc_b_hh"])[None, :], axis=1)

    w_att_T = params["att_w"].T                              # (O+H, S)
    w_att_c = w_att_T[:O]                                    # char part   (O, S)
    w_att_h = w_att_T[O:]                                    # hidden part (H, S)
    b_att = params["att_b"][None, :]

    w_cmb_T = params["cmb_w"].T                              # (O+H, O)
    w_cmb_c = w_cmb_T[:O]
    w_cmb_a = w_cmb_T[O:]
    b_cmb = params["cmb_b"][None, :]

    wx_d = _permute_gates(params["dec_w_ih"].T, axis=1)      # (O, 4H)
    wh_d = _permute_gates(params["dec_w_hh"].T, axis=1)      # (H, 4H)
    b_d = _permute_gates(
        (params["dec_b_ih"] + params["dec_b_hh"])[None, :], axis=1)

    # Fused old-hidden projection: [W_hh_dec(permuted) | W_att_h] -> one matmul
    # per step. Gate block first so the (1, 4H=128) slice is lane-aligned.
    w_hfused = jnp.concatenate([wh_d, w_att_h], axis=1)      # (H, 4H + S)

    w_out = params["out_w"].T                                # (H, O)
    b_out = params["out_b"][None, :]

    args = (hwrt_seq, char_seq, wx_e, wh_e, b_e,
            w_att_c, b_att,
            w_cmb_c, w_cmb_a, b_cmb,
            wx_d, b_d, w_hfused, w_out, b_out)

    # Total footprint (inputs + weights + output) is < 100 KiB -> whole-array
    # VMEM residency, no grid / pipelining (a grid would only add per-step
    # invocation overhead to a latency-bound kernel).
    in_specs = [pl.BlockSpec(memory_space=pltpu.MemorySpace.VMEM)
                for _ in args]

    return pl.pallas_call(
        _recognizer_kernel,
        out_shape=jax.ShapeDtypeStruct((T_dec - 1, O), jnp.float32),
        in_specs=in_specs,
        out_specs=pl.BlockSpec(memory_space=pltpu.MemorySpace.VMEM),
    )(*args)


# --------------------------------------------------------------------------
# Pure-JAX reference (mirrors the PyTorch forward 1:1) for verification
# --------------------------------------------------------------------------
def reference_forward(hwrt_seq, char_seq, params):
    H = params["enc_w_hh"].shape[1]

    def lstm_cell(x, h, c, w_ih, w_hh, b_ih, b_hh):
        gates = x @ w_ih.T + b_ih + h @ w_hh.T + b_hh
        i, f, g, o = jnp.split(gates, 4, axis=-1)
        c = jax.nn.sigmoid(f) * c + jax.nn.sigmoid(i) * jnp.tanh(g)
        h = jax.nn.sigmoid(o) * jnp.tanh(c)
        return h, c

    h = jnp.zeros((1, H), jnp.float32)
    c = jnp.zeros((1, H), jnp.float32)
    enc_outs = []
    for t in range(hwrt_seq.shape[0]):
        h, c = lstm_cell(hwrt_seq[t:t + 1], h, c,
                         params["enc_w_ih"], params["enc_w_hh"],
                         params["enc_b_ih"], params["enc_b_hh"])
        enc_outs.append(h[0])
    enc_outs = jnp.stack(enc_outs)

    outs = []
    for t in range(char_seq.shape[0] - 1):
        cur = char_seq[t:t + 1]
        att_in = jnp.concatenate([cur, h], axis=1)
        att_w = jax.nn.softmax(att_in @ params["att_w"].T + params["att_b"],
                               axis=1)
        att_applied = att_w[:, :hwrt_seq.shape[0]] @ enc_outs
        att_out = jnp.concatenate([cur, att_applied], axis=1)
        dec_in = jax.nn.relu(att_out @ params["cmb_w"].T + params["cmb_b"])
        h, c = lstm_cell(dec_in, h, c,
                         params["dec_w_ih"], params["dec_w_hh"],
                         params["dec_b_ih"], params["dec_b_hh"])
        logits = h @ params["out_w"].T + params["out_b"]
        outs.append(jax.nn.softmax(logits, axis=1)[0])
    return jnp.stack(outs)


# --------------------------------------------------------------------------
# Deterministic parameter init (PyTorch-style uniform(-1/sqrt(fan), +1/sqrt(fan)))
# --------------------------------------------------------------------------
def init_params(key, input_dim, hidden_dim, output_dim, max_stroke_length):
    def uni(key, shape, fan):
        bound = 1.0 / np.sqrt(fan)
        return jax.random.uniform(key, shape, jnp.float32, -bound, bound)

    keys = jax.random.split(key, 14)
    H, I, O, S = hidden_dim, input_dim, output_dim, max_stroke_length
    return {
        "enc_w_ih": uni(keys[0], (4 * H, I), H),
        "enc_w_hh": uni(keys[1], (4 * H, H), H),
        "enc_b_ih": uni(keys[2], (4 * H,), H),
        "enc_b_hh": uni(keys[3], (4 * H,), H),
        "att_w":    uni(keys[4], (S, H + O), H + O),
        "att_b":    uni(keys[5], (S,), H + O),
        "cmb_w":    uni(keys[6], (O, H + O), H + O),
        "cmb_b":    uni(keys[7], (O,), H + O),
        "dec_w_ih": uni(keys[8], (4 * H, O), H),
        "dec_w_hh": uni(keys[9], (4 * H, H), H),
        "dec_b_ih": uni(keys[10], (4 * H,), H),
        "dec_b_hh": uni(keys[11], (4 * H,), H),
        "out_w":    uni(keys[12], (O, H), H),
        "out_b":    uni(keys[13], (O,), H),
    }


# --------------------------------------------------------------------------
if __name__ == "__main__":
    input_dim = 4          # handwriting point features
    hidden_dim = 32
    output_dim = 8         # character one-hot / embedding size
    max_stroke_length = 16 # config.max_stroke_length
    hwrt_seq_len = 12      # <= max_stroke_length (required by the module)
    char_seq_len = 8

    key = jax.random.PRNGKey(0)
    k_p, k_x, k_c = jax.random.split(key, 3)
    params = init_params(k_p, input_dim, hidden_dim, output_dim,
                         max_stroke_length)

    hwrt_sequence = jax.random.normal(k_x, (hwrt_seq_len, input_dim),
                                      jnp.float32)
    char_sequence = jax.random.normal(k_c, (char_seq_len, output_dim),
                                      jnp.float32)

    out = handwriting_recognizer(hwrt_sequence, char_sequence, params,
                                 max_stroke_length)
    out = jax.block_until_ready(out)

    ref = reference_forward(hwrt_sequence, char_sequence, params)
    # Slightly loosened tolerance: fused/hoisted matmuls re-associate f32 adds.
    np.testing.assert_allclose(np.asarray(out), np.asarray(ref),
                               rtol=1e-4, atol=1e-5)
    assert out.shape == (char_seq_len - 1, output_dim)

    print("KERNEL_OK")
</pallas_src>

<mosaic_0001>
module attributes {stable_mosaic.version = 11 : i64} {
  func.func @_recognizer_kernel(%arg0: memref<12x4xf32, #tpu.memory_space<vmem>>, %arg1: memref<8x8xf32, #tpu.memory_space<vmem>>, %arg2: memref<4x128xf32, #tpu.memory_space<vmem>>, %arg3: memref<32x128xf32, #tpu.memory_space<vmem>>, %arg4: memref<1x128xf32, #tpu.memory_space<vmem>>, %arg5: memref<8x16xf32, #tpu.memory_space<vmem>>, %arg6: memref<1x16xf32, #tpu.memory_space<vmem>>, %arg7: memref<8x8xf32, #tpu.memory_space<vmem>>, %arg8: memref<32x8xf32, #tpu.memory_space<vmem>>, %arg9: memref<1x8xf32, #tpu.memory_space<vmem>>, %arg10: memref<8x128xf32, #tpu.memory_space<vmem>>, %arg11: memref<1x128xf32, #tpu.memory_space<vmem>>, %arg12: memref<32x144xf32, #tpu.memory_space<vmem>>, %arg13: memref<32x8xf32, #tpu.memory_space<vmem>>, %arg14: memref<1x8xf32, #tpu.memory_space<vmem>>, %arg15: memref<7x8xf32, #tpu.memory_space<vmem>>) attributes {dimension_semantics = [], scalar_prefetch = 0 : i64, scratch_operands = 0 : i64, tpu.core_type = #tpu.core_type<tc>} {
    %c0 = arith.constant 0 : index
    %c0_0 = arith.constant 0 : index
    %0 = vector.load %arg0[%c0, %c0_0] : memref<12x4xf32, #tpu.memory_space<vmem>>, vector<12x4xf32>
    %c0_1 = arith.constant 0 : index
    %c0_2 = arith.constant 0 : index
    %1 = vector.load %arg2[%c0_1, %c0_2] : memref<4x128xf32, #tpu.memory_space<vmem>>, vector<4x128xf32>
    %cst = arith.constant dense<0.000000e+00> : vector<12x128xf32>
    %2 = tpu.matmul %0, %1, %cst {dimension_numbers = #tpu.dot_dimension_numbers<[1], [0], [0], [1], [0, 0, 1, 1], [], []>} : vector<12x4xf32>, vector<4x128xf32>, vector<12x128xf32> -> vector<12x128xf32>
    %c0_3 = arith.constant 0 : index
    %c0_4 = arith.constant 0 : index
    %3 = vector.load %arg4[%c0_3, %c0_4] : memref<1x128xf32, #tpu.memory_space<vmem>>, vector<1x128xf32>
    %4 = vector.broadcast %3 : vector<1x128xf32> to vector<12x128xf32>
    %5 = arith.addf %2, %4 : vector<12x128xf32>
    %c0_5 = arith.constant 0 : index
    %c0_6 = arith.constant 0 : index
    %6 = vector.load %arg3[%c0_5, %c0_6] : memref<32x128xf32, #tpu.memory_space<vmem>>, vector<32x128xf32>
    %cst_7 = arith.constant 0.000000e+00 : f32
    %7 = vector.broadcast %cst_7 : f32 to vector<1x32xf32>
    %cst_8 = arith.constant 0.000000e+00 : f32
    %8 = vector.broadcast %cst_8 : f32 to vector<1x32xf32>
    %9 = vector.extract_strided_slice %5 {offsets = [0, 0], sizes = [1, 128], strides = [1, 1]} : vector<12x128xf32> to vector<1x128xf32>
    %cst_9 = arith.constant dense<0.000000e+00> : vector<1x128xf32>
    %10 = tpu.matmul %7, %6, %cst_9 {dimension_numbers = #tpu.dot_dimension_numbers<[1], [0], [0], [1], [0, 0, 1, 1], [], []>} : vector<1x32xf32>, vector<32x128xf32>, vector<1x128xf32> -> vector<1x128xf32>
    %11 = arith.addf %9, %10 : vector<1x128xf32>
    %12 = vector.extract_strided_slice %11 {offsets = [0, 0], sizes = [1, 96], strides = [1, 1]} : vector<1x128xf32> to vector<1x96xf32>
    %13 = arith.negf %12 : vector<1x96xf32>
    %14 = math.exp %13 : vector<1x96xf32>
    %cst_10 = arith.constant 1.000000e+00 : f32
    %15 = vector.broadcast %cst_10 : f32 to vector<1x96xf32>
    %16 = arith.addf %15, %14 : vector<1x96xf32>
    %17 = arith.divf %15, %16 : vector<1x96xf32>
    %18 = vector.extract_strided_slice %11 {offsets = [0, 96], sizes = [1, 32], strides = [1, 1]} : vector<1x128xf32> to vector<1x32xf32>
    %19 = math.tanh %18 : vector<1x32xf32>
    %20 = vector.extract_strided_slice %17 {offsets = [0, 0], sizes = [1, 32], strides = [1, 1]} : vector<1x96xf32> to vector<1x32xf32>
    %21 = vector.extract_strided_slice %17 {offsets = [0, 32], sizes = [1, 32], strides = [1, 1]} : vector<1x96xf32> to vector<1x32xf32>
    %22 = vector.extract_strided_slice %17 {offsets = [0, 64], sizes = [1, 32], strides = [1, 1]} : vector<1x96xf32> to vector<1x32xf32>
    %23 = arith.mulf %21, %8 : vector<1x32xf32>
    %24 = arith.mulf %20, %19 : vector<1x32xf32>
    %25 = arith.addf %23, %24 : vector<1x32xf32>
    %26 = math.tanh %25 : vector<1x32xf32>
    %27 = arith.mulf %22, %26 : vector<1x32xf32>
    %28 = vector.extract_strided_slice %5 {offsets = [1, 0], sizes = [1, 128], strides = [1, 1]} : vector<12x128xf32> to vector<1x128xf32>
    %cst_11 = arith.constant dense<0.000000e+00> : vector<1x128xf32>
    %29 = tpu.matmul %27, %6, %cst_11 {dimension_numbers = #tpu.dot_dimension_numbers<[1], [0], [0], [1], [0, 0, 1, 1], [], []>} : vector<1x32xf32>, vector<32x128xf32>, vector<1x128xf32> -> vector<1x128xf32>
    %30 = arith.addf %28, %29 : vector<1x128xf32>
    %31 = vector.extract_strided_slice %30 {offsets = [0, 0], sizes = [1, 96], strides = [1, 1]} : vector<1x128xf32> to vector<1x96xf32>
    %32 = arith.negf %31 : vector<1x96xf32>
    %33 = math.exp %32 : vector<1x96xf32>
    %cst_12 = arith.constant 1.000000e+00 : f32
    %34 = vector.broadcast %cst_12 : f32 to vector<1x96xf32>
    %35 = arith.addf %34, %33 : vector<1x96xf32>
    %36 = arith.divf %34, %35 : vector<1x96xf32>
    %37 = vector.extract_strided_slice %30 {offsets = [0, 96], sizes = [1, 32], strides = [1, 1]} : vector<1x128xf32> to vector<1x32xf32>
    %38 = math.tanh %37 : vector<1x32xf32>
    %39 = vector.extract_strided_slice %36 {offsets = [0, 0], sizes = [1, 32], strides = [1, 1]} : vector<1x96xf32> to vector<1x32xf32>
    %40 = vector.extract_strided_slice %36 {offsets = [0, 32], sizes = [1, 32], strides = [1, 1]} : vector<1x96xf32> to vector<1x32xf32>
    %41 = vector.extract_strided_slice %36 {offsets = [0, 64], sizes = [1, 32], strides = [1, 1]} : vector<1x96xf32> to vector<1x32xf32>
    %42 = arith.mulf %40, %25 : vector<1x32xf32>
    %43 = arith.mulf %39, %38 : vector<1x32xf32>
    %44 = arith.addf %42, %43 : vector<1x32xf32>
    %45 = math.tanh %44 : vector<1x32xf32>
    %46 = arith.mulf %41, %45 : vector<1x32xf32>
    %47 = vector.extract_strided_slice %5 {offsets = [2, 0], sizes = [1, 128], strides = [1, 1]} : vector<12x128xf32> to vector<1x128xf32>
    %cst_13 = arith.constant dense<0.000000e+00> : vector<1x128xf32>
    %48 = tpu.matmul %46, %6, %cst_13 {dimension_numbers = #tpu.dot_dimension_numbers<[1], [0], [0], [1], [0, 0, 1, 1], [], []>} : vector<1x32xf32>, vector<32x128xf32>, vector<1x128xf32> -> vector<1x128xf32>
    %49 = arith.addf %47, %48 : vector<1x128xf32>
    %50 = vector.extract_strided_slice %49 {offsets = [0, 0], sizes = [1, 96], strides = [1, 1]} : vector<1x128xf32> to vector<1x96xf32>
    %51 = arith.negf %50 : vector<1x96xf32>
    %52 = math.exp %51 : vector<1x96xf32>
    %cst_14 = arith.constant 1.000000e+00 : f32
    %53 = vector.broadcast %cst_14 : f32 to vector<1x96xf32>
    %54 = arith.addf %53, %52 : vector<1x96xf32>
    %55 = arith.divf %53, %54 : vector<1x96xf32>
    %56 = vector.extract_strided_slice %49 {offsets = [0, 96], sizes = [1, 32], strides = [1, 1]} : vector<1x128xf32> to vector<1x32xf32>
    %57 = math.tanh %56 : vector<1x32xf32>
    %58 = vector.extract_strided_slice %55 {offsets = [0, 0], sizes = [1, 32], strides = [1, 1]} : vector<1x96xf32> to vector<1x32xf32>
    %59 = vector.extract_strided_slice %55 {offsets = [0, 32], sizes = [1, 32], strides = [1, 1]} : vector<1x96xf32> to vector<1x32xf32>
    %60 = vector.extract_strided_slice %55 {offsets = [0, 64], sizes = [1, 32], strides = [1, 1]} : vector<1x96xf32> to vector<1x32xf32>
    %61 = arith.mulf %59, %44 : vector<1x32xf32>
    %62 = arith.mulf %58, %57 : vector<1x32xf32>
    %63 = arith.addf %61, %62 : vector<1x32xf32>
    %64 = math.tanh %63 : vector<1x32xf32>
    %65 = arith.mulf %60, %64 : vector<1x32xf32>
    %66 = vector.extract_strided_slice %5 {offsets = [3, 0], sizes = [1, 128], strides = [1, 1]} : vector<12x128xf32> to vector<1x128xf32>
    %cst_15 = arith.constant dense<0.000000e+00> : vector<1x128xf32>
    %67 = tpu.matmul %65, %6, %cst_15 {dimension_numbers = #tpu.dot_dimension_numbers<[1], [0], [0], [1], [0, 0, 1, 1], [], []>} : vector<1x32xf32>, vector<32x128xf32>, vector<1x128xf32> -> vector<1x128xf32>
    %68 = arith.addf %66, %67 : vector<1x128xf32>
    %69 = vector.extract_strided_slice %68 {offsets = [0, 0], sizes = [1, 96], strides = [1, 1]} : vector<1x128xf32> to vector<1x96xf32>
    %70 = arith.negf %69 : vector<1x96xf32>
    %71 = math.exp %70 : vector<1x96xf32>
    %cst_16 = arith.constant 1.000000e+00 : f32
    %72 = vector.broadcast %cst_16 : f32 to vector<1x96xf32>
    %73 = arith.addf %72, %71 : vector<1x96xf32>
    %74 = arith.divf %72, %73 : vector<1x96xf32>
    %75 = vector.extract_strided_slice %68 {offsets = [0, 96], sizes = [1, 32], strides = [1, 1]} : vector<1x128xf32> to vector<1x32xf32>
    %76 = math.tanh %75 : vector<1x32xf32>
    %77 = vector.extract_strided_slice %74 {offsets = [0, 0], sizes = [1, 32], strides = [1, 1]} : vector<1x96xf32> to vector<1x32xf32>
    %78 = vector.extract_strided_slice %74 {offsets = [0, 32], sizes = [1, 32], strides = [1, 1]} : vector<1x96xf32> to vector<1x32xf32>
    %79 = vector.extract_strided_slice %74 {offsets = [0, 64], sizes = [1, 32], strides = [1, 1]} : vector<1x96xf32> to vector<1x32xf32>
    %80 = arith.mulf %78, %63 : vector<1x32xf32>
    %81 = arith.mulf %77, %76 : vector<1x32xf32>
    %82 = arith.addf %80, %81 : vector<1x32xf32>
    %83 = math.tanh %82 : vector<1x32xf32>
    %84 = arith.mulf %79, %83 : vector<1x32xf32>
    %85 = vector.extract_strided_slice %5 {offsets = [4, 0], sizes = [1, 128], strides = [1, 1]} : vector<12x128xf32> to vector<1x128xf32>
    %cst_17 = arith.constant dense<0.000000e+00> : vector<1x128xf32>
    %86 = tpu.matmul %84, %6, %cst_17 {dimension_numbers = #tpu.dot_dimension_numbers<[1], [0], [0], [1], [0, 0, 1, 1], [], []>} : vector<1x32xf32>, vector<32x128xf32>, vector<1x128xf32> -> vector<1x128xf32>
    %87 = arith.addf %85, %86 : vector<1x128xf32>
    %88 = vector.extract_strided_slice %87 {offsets = [0, 0], sizes = [1, 96], strides = [1, 1]} : vector<1x128xf32> to vector<1x96xf32>
    %89 = arith.negf %88 : vector<1x96xf32>
    %90 = math.exp %89 : vector<1x96xf32>
    %cst_18 = arith.constant 1.000000e+00 : f32
    %91 = vector.broadcast %cst_18 : f32 to vector<1x96xf32>
    %92 = arith.addf %91, %90 : vector<1x96xf32>
    %93 = arith.divf %91, %92 : vector<1x96xf32>
    %94 = vector.extract_strided_slice %87 {offsets = [0, 96], sizes = [1, 32], strides = [1, 1]} : vector<1x128xf32> to vector<1x32xf32>
    %95 = math.tanh %94 : vector<1x32xf32>
    %96 = vector.extract_strided_slice %93 {offsets = [0, 0], sizes = [1, 32], strides = [1, 1]} : vector<1x96xf32> to vector<1x32xf32>
    %97 = vector.extract_strided_slice %93 {offsets = [0, 32], sizes = [1, 32], strides = [1, 1]} : vector<1x96xf32> to vector<1x32xf32>
    %98 = vector.extract_strided_slice %93 {offsets = [0, 64], sizes = [1, 32], strides = [1, 1]} : vector<1x96xf32> to vector<1x32xf32>
    %99 = arith.mulf %97, %82 : vector<1x32xf32>
    %100 = arith.mulf %96, %95 : vector<1x32xf32>
    %101 = arith.addf %99, %100 : vector<1x32xf32>
    %102 = math.tanh %101 : vector<1x32xf32>
    %103 = arith.mulf %98, %102 : vector<1x32xf32>
    %104 = vector.extract_strided_slice %5 {offsets = [5, 0], sizes = [1, 128], strides = [1, 1]} : vector<12x128xf32> to vector<1x128xf32>
    %cst_19 = arith.constant dense<0.000000e+00> : vector<1x128xf32>
    %105 = tpu.matmul %103, %6, %cst_19 {dimension_numbers = #tpu.dot_dimension_numbers<[1], [0], [0], [1], [0, 0, 1, 1], [], []>} : vector<1x32xf32>, vector<32x128xf32>, vector<1x128xf32> -> vector<1x128xf32>
    %106 = arith.addf %104, %105 : vector<1x128xf32>
    %107 = vector.extract_strided_slice %106 {offsets = [0, 0], sizes = [1, 96], strides = [1, 1]} : vector<1x128xf32> to vector<1x96xf32>
    %108 = arith.negf %107 : vector<1x96xf32>
    %109 = math.exp %108 : vector<1x96xf32>
    %cst_20 = arith.constant 1.000000e+00 : f32
    %110 = vector.broadcast %cst_20 : f32 to vector<1x96xf32>
    %111 = arith.addf %110, %109 : vector<1x96xf32>
    %112 = arith.divf %110, %111 : vector<1x96xf32>
    %113 = vector.extract_strided_slice %106 {offsets = [0, 96], sizes = [1, 32], strides = [1, 1]} : vector<1x128xf32> to vector<1x32xf32>
    %114 = math.tanh %113 : vector<1x32xf32>
    %115 = vector.extract_strided_slice %112 {offsets = [0, 0], sizes = [1, 32], strides = [1, 1]} : vector<1x96xf32> to vector<1x32xf32>
    %116 = vector.extract_strided_slice %112 {offsets = [0, 32], sizes = [1, 32], strides = [1, 1]} : vector<1x96xf32> to vector<1x32xf32>
    %117 = vector.extract_strided_slice %112 {offsets = [0, 64], sizes = [1, 32], strides = [1, 1]} : vector<1x96xf32> to vector<1x32xf32>
    %118 = arith.mulf %116, %101 : vector<1x32xf32>
    %119 = arith.mulf %115, %114 : vector<1x32xf32>
    %120 = arith.addf %118, %119 : vector<1x32xf32>
    %121 = math.tanh %120 : vector<1x32xf32>
    %122 = arith.mulf %117, %121 : vector<1x32xf32>
    %123 = vector.extract_strided_slice %5 {offsets = [6, 0], sizes = [1, 128], strides = [1, 1]} : vector<12x128xf32> to vector<1x128xf32>
    %cst_21 = arith.constant dense<0.000000e+00> : vector<1x128xf32>
    %124 = tpu.matmul %122, %6, %cst_21 {dimension_numbers = #tpu.dot_dimension_numbers<[1], [0], [0], [1], [0, 0, 1, 1], [], []>} : vector<1x32xf32>, vector<32x128xf32>, vector<1x128xf32> -> vector<1x128xf32>
    %125 = arith.addf %123, %124 : vector<1x128xf32>
    %126 = vector.extract_strided_slice %125 {offsets = [0, 0], sizes = [1, 96], strides = [1, 1]} : vector<1x128xf32> to vector<1x96xf32>
    %127 = arith.negf %126 : vector<1x96xf32>
    %128 = math.exp %127 : vector<1x96xf32>
    %cst_22 = arith.constant 1.000000e+00 : f32
    %129 = vector.broadcast %cst_22 : f32 to vector<1x96xf32>
    %130 = arith.addf %129, %128 : vector<1x96xf32>
    %131 = arith.divf %129, %130 : vector<1x96xf32>
    %132 = vector.extract_strided_slice %125 {offsets = [0, 96], sizes = [1, 32], strides = [1, 1]} : vector<1x128xf32> to vector<1x32xf32>
    %133 = math.tanh %132 : vector<1x32xf32>
    %134 = vector.extract_strided_slice %131 {offsets = [0, 0], sizes = [1, 32], strides = [1, 1]} : vector<1x96xf32> to vector<1x32xf32>
    %135 = vector.extract_strided_slice %131 {offsets = [0, 32], sizes = [1, 32], strides = [1, 1]} : vector<1x96xf32> to vector<1x32xf32>
    %136 = vector.extract_strided_slice %131 {offsets = [0, 64], sizes = [1, 32], strides = [1, 1]} : vector<1x96xf32> to vector<1x32xf32>
    %137 = arith.mulf %135, %120 : vector<1x32xf32>
    %138 = arith.mulf %134, %133 : vector<1x32xf32>
    %139 = arith.addf %137, %138 : vector<1x32xf32>
    %140 = math.tanh %139 : vector<1x32xf32>
    %141 = arith.mulf %136, %140 : vector<1x32xf32>
    %142 = vector.extract_strided_slice %5 {offsets = [7, 0], sizes = [1, 128], strides = [1, 1]} : vector<12x128xf32> to vector<1x128xf32>
    %cst_23 = arith.constant dense<0.000000e+00> : vector<1x128xf32>
    %143 = tpu.matmul %141, %6, %cst_23 {dimension_numbers = #tpu.dot_dimension_numbers<[1], [0], [0], [1], [0, 0, 1, 1], [], []>} : vector<1x32xf32>, vector<32x128xf32>, vector<1x128xf32> -> vector<1x128xf32>
    %144 = arith.addf %142, %143 : vector<1x128xf32>
    %145 = vector.extract_strided_slice %144 {offsets = [0, 0], sizes = [1, 96], strides = [1, 1]} : vector<1x128xf32> to vector<1x96xf32>
    %146 = arith.negf %145 : vector<1x96xf32>
    %147 = math.exp %146 : vector<1x96xf32>
    %cst_24 = arith.constant 1.000000e+00 : f32
    %148 = vector.broadcast %cst_24 : f32 to vector<1x96xf32>
    %149 = arith.addf %148, %147 : vector<1x96xf32>
    %150 = arith.divf %148, %149 : vector<1x96xf32>
    %151 = vector.extract_strided_slice %144 {offsets = [0, 96], sizes = [1, 32], strides = [1, 1]} : vector<1x128xf32> to vector<1x32xf32>
    %152 = math.tanh %151 : vector<1x32xf32>
    %153 = vector.extract_strided_slice %150 {offsets = [0, 0], sizes = [1, 32], strides = [1, 1]} : vector<1x96xf32> to vector<1x32xf32>
    %154 = vector.extract_strided_slice %150 {offsets = [0, 32], sizes = [1, 32], strides = [1, 1]} : vector<1x96xf32> to vector<1x32xf32>
    %155 = vector.extract_strided_slice %150 {offsets = [0, 64], sizes = [1, 32], strides = [1, 1]} : vector<1x96xf32> to vector<1x32xf32>
    %156 = arith.mulf %154, %139 : vector<1x32xf32>
    %157 = arith.mulf %153, %152 : vector<1x32xf32>
    %158 = arith.addf %156, %157 : vector<1x32xf32>
    %159 = math.tanh %158 : vector<1x32xf32>
    %160 = arith.mulf %155, %159 : vector<1x32xf32>
    %161 = vector.extract_strided_slice %5 {offsets = [8, 0], sizes = [1, 128], strides = [1, 1]} : vector<12x128xf32> to vector<1x128xf32>
    %cst_25 = arith.constant dense<0.000000e+00> : vector<1x128xf32>
    %162 = tpu.matmul %160, %6, %cst_25 {dimension_numbers = #tpu.dot_dimension_numbers<[1], [0], [0], [1], [0, 0, 1, 1], [], []>} : vector<1x32xf32>, vector<32x128xf32>, vector<1x128xf32> -> vector<1x128xf32>
    %163 = arith.addf %161, %162 : vector<1x128xf32>
    %164 = vector.extract_strided_slice %163 {offsets = [0, 0], sizes = [1, 96], strides = [1, 1]} : vector<1x128xf32> to vector<1x96xf32>
    %165 = arith.negf %164 : vector<1x96xf32>
    %166 = math.exp %165 : vector<1x96xf32>
    %cst_26 = arith.constant 1.000000e+00 : f32
    %167 = vector.broadcast %cst_26 : f32 to vector<1x96xf32>
    %168 = arith.addf %167, %166 : vector<1x96xf32>
    %169 = arith.divf %167, %168 : vector<1x96xf32>
    %170 = vector.extract_strided_slice %163 {offsets = [0, 96], sizes = [1, 32], strides = [1, 1]} : vector<1x128xf32> to vector<1x32xf32>
    %171 = math.tanh %170 : vector<1x32xf32>
    %172 = vector.extract_strided_slice %169 {offsets = [0, 0], sizes = [1, 32], strides = [1, 1]} : vector<1x96xf32> to vector<1x32xf32>
    %173 = vector.extract_strided_slice %169 {offsets = [0, 32], sizes = [1, 32], strides = [1, 1]} : vector<1x96xf32> to vector<1x32xf32>
    %174 = vector.extract_strided_slice %169 {offsets = [0, 64], sizes = [1, 32], strides = [1, 1]} : vector<1x96xf32> to vector<1x32xf32>
    %175 = arith.mulf %173, %158 : vector<1x32xf32>
    %176 = arith.mulf %172, %171 : vector<1x32xf32>
    %177 = arith.addf %175, %176 : vector<1x32xf32>
    %178 = math.tanh %177 : vector<1x32xf32>
    %179 = arith.mulf %174, %178 : vector<1x32xf32>
    %180 = vector.extract_strided_slice %5 {offsets = [9, 0], sizes = [1, 128], strides = [1, 1]} : vector<12x128xf32> to vector<1x128xf32>
    %cst_27 = arith.constant dense<0.000000e+00> : vector<1x128xf32>
    %181 = tpu.matmul %179, %6, %cst_27 {dimension_numbers = #tpu.dot_dimension_numbers<[1], [0], [0], [1], [0, 0, 1, 1], [], []>} : vector<1x32xf32>, vector<32x128xf32>, vector<1x128xf32> -> vector<1x128xf32>
    %182 = arith.addf %180, %181 : vector<1x128xf32>
    %183 = vector.extract_strided_slice %182 {offsets = [0, 0], sizes = [1, 96], strides = [1, 1]} : vector<1x128xf32> to vector<1x96xf32>
    %184 = arith.negf %183 : vector<1x96xf32>
    %185 = math.exp %184 : vector<1x96xf32>
    %cst_28 = arith.constant 1.000000e+00 : f32
    %186 = vector.broadcast %cst_28 : f32 to vector<1x96xf32>
    %187 = arith.addf %186, %185 : vector<1x96xf32>
    %188 = arith.divf %186, %187 : vector<1x96xf32>
    %189 = vector.extract_strided_slice %182 {offsets = [0, 96], sizes = [1, 32], strides = [1, 1]} : vector<1x128xf32> to vector<1x32xf32>
    %190 = math.tanh %189 : vector<1x32xf32>
    %191 = vector.extract_strided_slice %188 {offsets = [0, 0], sizes = [1, 32], strides = [1, 1]} : vector<1x96xf32> to vector<1x32xf32>
    %192 = vector.extract_strided_slice %188 {offsets = [0, 32], sizes = [1, 32], strides = [1, 1]} : vector<1x96xf32> to vector<1x32xf32>
    %193 = vector.extract_strided_slice %188 {offsets = [0, 64], sizes = [1, 32], strides = [1, 1]} : vector<1x96xf32> to vector<1x32xf32>
    %194 = arith.mulf %192, %177 : vector<1x32xf32>
    %195 = arith.mulf %191, %190 : vector<1x32xf32>
    %196 = arith.addf %194, %195 : vector<1x32xf32>
    %197 = math.tanh %196 : vector<1x32xf32>
    %198 = arith.mulf %193, %197 : vector<1x32xf32>
    %199 = vector.extract_strided_slice %5 {offsets = [10, 0], sizes = [1, 128], strides = [1, 1]} : vector<12x128xf32> to vector<1x128xf32>
    %cst_29 = arith.constant dense<0.000000e+00> : vector<1x128xf32>
    %200 = tpu.matmul %198, %6, %cst_29 {dimension_numbers = #tpu.dot_dimension_numbers<[1], [0], [0], [1], [0, 0, 1, 1], [], []>} : vector<1x32xf32>, vector<32x128xf32>, vector<1x128xf32> -> vector<1x128xf32>
    %201 = arith.addf %199, %200 : vector<1x128xf32>
    %202 = vector.extract_strided_slice %201 {offsets = [0, 0], sizes = [1, 96], strides = [1, 1]} : vector<1x128xf32> to vector<1x96xf32>
    %203 = arith.negf %202 : vector<1x96xf32>
    %204 = math.exp %203 : vector<1x96xf32>
    %cst_30 = arith.constant 1.000000e+00 : f32
    %205 = vector.broadcast %cst_30 : f32 to vector<1x96xf32>
    %206 = arith.addf %205, %204 : vector<1x96xf32>
    %207 = arith.divf %205, %206 : vector<1x96xf32>
    %208 = vector.extract_strided_slice %201 {offsets = [0, 96], sizes = [1, 32], strides = [1, 1]} : vector<1x128xf32> to vector<1x32xf32>
    %209 = math.tanh %208 : vector<1x32xf32>
    %210 = vector.extract_strided_slice %207 {offsets = [0, 0], sizes = [1, 32], strides = [1, 1]} : vector<1x96xf32> to vector<1x32xf32>
    %211 = vector.extract_strided_slice %207 {offsets = [0, 32], sizes = [1, 32], strides = [1, 1]} : vector<1x96xf32> to vector<1x32xf32>
    %212 = vector.extract_strided_slice %207 {offsets = [0, 64], sizes = [1, 32], strides = [1, 1]} : vector<1x96xf32> to vector<1x32xf32>
    %213 = arith.mulf %211, %196 : vector<1x32xf32>
    %214 = arith.mulf %210, %209 : vector<1x32xf32>
    %215 = arith.addf %213, %214 : vector<1x32xf32>
    %216 = math.tanh %215 : vector<1x32xf32>
    %217 = arith.mulf %212, %216 : vector<1x32xf32>
    %218 = vector.extract_strided_slice %5 {offsets = [11, 0], sizes = [1, 128], strides = [1, 1]} : vector<12x128xf32> to vector<1x128xf32>
    %cst_31 = arith.constant dense<0.000000e+00> : vector<1x128xf32>
    %219 = tpu.matmul %217, %6, %cst_31 {dimension_numbers = #tpu.dot_dimension_numbers<[1], [0], [0], [1], [0, 0, 1, 1], [], []>} : vector<1x32xf32>, vector<32x128xf32>, vector<1x128xf32> -> vector<1x128xf32>
    %220 = arith.addf %218, %219 : vector<1x128xf32>
    %221 = vector.extract_strided_slice %220 {offsets = [0, 0], sizes = [1, 96], strides = [1, 1]} : vector<1x128xf32> to vector<1x96xf32>
    %222 = arith.negf %221 : vector<1x96xf32>
    %223 = math.exp %222 : vector<1x96xf32>
    %cst_32 = arith.constant 1.000000e+00 : f32
    %224 = vector.broadcast %cst_32 : f32 to vector<1x96xf32>
    %225 = arith.addf %224, %223 : vector<1x96xf32>
    %226 = arith.divf %224, %225 : vector<1x96xf32>
    %227 = vector.extract_strided_slice %220 {offsets = [0, 96], sizes = [1, 32], strides = [1, 1]} : vector<1x128xf32> to vector<1x32xf32>
    %228 = math.tanh %227 : vector<1x32xf32>
    %229 = vector.extract_strided_slice %226 {offsets = [0, 0], sizes = [1, 32], strides = [1, 1]} : vector<1x96xf32> to vector<1x32xf32>
    %230 = vector.extract_strided_slice %226 {offsets = [0, 32], sizes = [1, 32], strides = [1, 1]} : vector<1x96xf32> to vector<1x32xf32>
    %231 = vector.extract_strided_slice %226 {offsets = [0, 64], sizes = [1, 32], strides = [1, 1]} : vector<1x96xf32> to vector<1x32xf32>
    %232 = arith.mulf %230, %215 : vector<1x32xf32>
    %233 = arith.mulf %229, %228 : vector<1x32xf32>
    %234 = arith.addf %232, %233 : vector<1x32xf32>
    %235 = math.tanh %234 : vector<1x32xf32>
    %236 = arith.mulf %231, %235 : vector<1x32xf32>
    %cst_33 = arith.constant 0.000000e+00 : f32
    %237 = vector.broadcast %cst_33 : f32 to vector<4x32xf32>
    %238 = tpu.concatenate %27, %46, %65, %84, %103, %122, %141, %160, %179, %198, %217, %236, %237 in 0 : vector<1x32xf32>, vector<1x32xf32>, vector<1x32xf32>, vector<1x32xf32>, vector<1x32xf32>, vector<1x32xf32>, vector<1x32xf32>, vector<1x32xf32>, vector<1x32xf32>, vector<1x32xf32>, vector<1x32xf32>, vector<1x32xf32>, vector<4x32xf32> -> vector<16x32xf32>
    %c0_34 = arith.constant 0 : index
    %c0_35 = arith.constant 0 : index
    %239 = vector.load %arg8[%c0_34, %c0_35] : memref<32x8xf32, #tpu.memory_space<vmem>>, vector<32x8xf32>
    %cst_36 = arith.constant dense<0.000000e+00> : vector<16x8xf32>
    %240 = tpu.matmul %238, %239, %cst_36 {dimension_numbers = #tpu.dot_dimension_numbers<[1], [0], [0], [1], [0, 0, 1, 1], [], []>} : vector<16x32xf32>, vector<32x8xf32>, vector<16x8xf32> -> vector<16x8xf32>
    %c0_37 = arith.constant 0 : index
    %c0_38 = arith.constant 0 : index
    %241 = vector.load %arg1[%c0_37, %c0_38] : memref<8x8xf32, #tpu.memory_space<vmem>>, vector<7x8xf32>
    %c0_39 = arith.constant 0 : index
    %c0_40 = arith.constant 0 : index
    %242 = vector.load %arg5[%c0_39, %c0_40] : memref<8x16xf32, #tpu.memory_space<vmem>>, vector<8x16xf32>
    %cst_41 = arith.constant dense<0.000000e+00> : vector<7x16xf32>
    %243 = tpu.matmul %241, %242, %cst_41 {dimension_numbers = #tpu.dot_dimension_numbers<[1], [0], [0], [1], [0, 0, 1, 1], [], []>} : vector<7x8xf32>, vector<8x16xf32>, vector<7x16xf32> -> vector<7x16xf32>
    %c0_42 = arith.constant 0 : index
    %c0_43 = arith.constant 0 : index
    %244 = vector.load %arg6[%c0_42, %c0_43] : memref<1x16xf32, #tpu.memory_space<vmem>>, vector<1x16xf32>
    %245 = vector.broadcast %244 : vector<1x16xf32> to vector<7x16xf32>
    %246 = arith.addf %243, %245 : vector<7x16xf32>
    %c0_44 = arith.constant 0 : index
    %c0_45 = arith.constant 0 : index
    %247 = vector.load %arg7[%c0_44, %c0_45] : memref<8x8xf32, #tpu.memory_space<vmem>>, vector<8x8xf32>
    %cst_46 = arith.constant dense<0.000000e+00> : vector<7x8xf32>
    %248 = tpu.matmul %241, %247, %cst_46 {dimension_numbers = #tpu.dot_dimension_numbers<[1], [0], [0], [1], [0, 0, 1, 1], [], []>} : vector<7x8xf32>, vector<8x8xf32>, vector<7x8xf32> -> vector<7x8xf32>
    %c0_47 = arith.constant 0 : index
    %c0_48 = arith.constant 0 : index
    %249 = vector.load %arg9[%c0_47, %c0_48] : memref<1x8xf32, #tpu.memory_space<vmem>>, vector<1x8xf32>
    %250 = vector.broadcast %249 : vector<1x8xf32> to vector<7x8xf32>
    %251 = arith.addf %248, %250 : vector<7x8xf32>
    %c0_49 = arith.constant 0 : index
    %c0_50 = arith.constant 0 : index
    %252 = vector.load %arg10[%c0_49, %c0_50] : memref<8x128xf32, #tpu.memory_space<vmem>>, vector<8x128xf32>
    %c0_51 = arith.constant 0 : index
    %c0_52 = arith.constant 0 : index
    %253 = vector.load %arg11[%c0_51, %c0_52] : memref<1x128xf32, #tpu.memory_space<vmem>>, vector<1x128xf32>
    %c0_53 = arith.constant 0 : index
    %c0_54 = arith.constant 0 : index
    %254 = vector.load %arg12[%c0_53, %c0_54] : memref<32x144xf32, #tpu.memory_space<vmem>>, vector<32x144xf32>
    %cst_55 = arith.constant dense<0.000000e+00> : vector<1x144xf32>
    %255 = tpu.matmul %236, %254, %cst_55 {dimension_numbers = #tpu.dot_dimension_numbers<[1], [0], [0], [1], [0, 0, 1, 1], [], []>} : vector<1x32xf32>, vector<32x144xf32>, vector<1x144xf32> -> vector<1x144xf32>
    %256 = vector.extract_strided_slice %255 {offsets = [0, 0], sizes = [1, 128], strides = [1, 1]} : vector<1x144xf32> to vector<1x128xf32>
    %257 = vector.extract_strided_slice %255 {offsets = [0, 128], sizes = [1, 16], strides = [1, 1]} : vector<1x144xf32> to vector<1x16xf32>
    %258 = vector.extract_strided_slice %246 {offsets = [0, 0], sizes = [1, 16], strides = [1, 1]} : vector<7x16xf32> to vector<1x16xf32>
    %259 = arith.addf %258, %257 : vector<1x16xf32>
    %cst_56 = arith.constant dense<0xFF800000> : vector<1xf32>
    %260 = vector.multi_reduction <maximumf>, %259, %cst_56 [1] : vector<1x16xf32> to vector<1xf32>
    %cst_57 = arith.constant 0xFF800000 : f32
    %261 = vector.broadcast %cst_57 : f32 to vector<1xf32>
    %262 = arith.maximumf %261, %260 : vector<1xf32>
    %263 = vector.shape_cast %262 : vector<1xf32> to vector<1x1xf32>
    %264 = vector.broadcast %263 : vector<1x1xf32> to vector<1x16xf32>
    %265 = arith.subf %259, %264 : vector<1x16xf32>
    %266 = math.exp %265 : vector<1x16xf32>
    %cst_58 = arith.constant dense<0.000000e+00> : vector<1xf32>
    %267 = vector.multi_reduction <add>, %266, %cst_58 [1] : vector<1x16xf32> to vector<1xf32>
    %268 = vector.shape_cast %267 : vector<1xf32> to vector<1x1xf32>
    %269 = vector.broadcast %268 : vector<1x1xf32> to vector<1x16xf32>
    %270 = arith.divf %266, %269 : vector<1x16xf32>
    %271 = vector.extract_strided_slice %251 {offsets = [0, 0], sizes = [1, 8], strides = [1, 1]} : vector<7x8xf32> to vector<1x8xf32>
    %cst_59 = arith.constant dense<0.000000e+00> : vector<1x8xf32>
    %272 = tpu.matmul %270, %240, %cst_59 {dimension_numbers = #tpu.dot_dimension_numbers<[1], [0], [0], [1], [0, 0, 1, 1], [], []>} : vector<1x16xf32>, vector<16x8xf32>, vector<1x8xf32> -> vector<1x8xf32>
    %273 = arith.addf %271, %272 : vector<1x8xf32>
    %cst_60 = arith.constant 0.000000e+00 : f32
    %274 = vector.broadcast %cst_60 : f32 to vector<1x8xf32>
    %275 = arith.maximumf %273, %274 : vector<1x8xf32>
    %cst_61 = arith.constant dense<0.000000e+00> : vector<1x128xf32>
    %276 = tpu.matmul %275, %252, %cst_61 {dimension_numbers = #tpu.dot_dimension_numbers<[1], [0], [0], [1], [0, 0, 1, 1], [], []>} : vector<1x8xf32>, vector<8x128xf32>, vector<1x128xf32> -> vector<1x128xf32>
    %277 = arith.addf %276, %256 : vector<1x128xf32>
    %278 = arith.addf %277, %253 : vector<1x128xf32>
    %279 = vector.extract_strided_slice %278 {offsets = [0, 0], sizes = [1, 96], strides = [1, 1]} : vector<1x128xf32> to vector<1x96xf32>
    %280 = arith.negf %279 : vector<1x96xf32>
    %281 = math.exp %280 : vector<1x96xf32>
    %cst_62 = arith.constant 1.000000e+00 : f32
    %282 = vector.broadcast %cst_62 : f32 to vector<1x96xf32>
    %283 = arith.addf %282, %281 : vector<1x96xf32>
    %284 = arith.divf %282, %283 : vector<1x96xf32>
    %285 = vector.extract_strided_slice %278 {offsets = [0, 96], sizes = [1, 32], strides = [1, 1]} : vector<1x128xf32> to vector<1x32xf32>
    %286 = math.tanh %285 : vector<1x32xf32>
    %287 = vector.extract_strided_slice %284 {offsets = [0, 0], sizes = [1, 32], strides = [1, 1]} : vector<1x96xf32> to vector<1x32xf32>
    %288 = vector.extract_strided_slice %284 {offsets = [0, 32], sizes = [1, 32], strides = [1, 1]} : vector<1x96xf32> to vector<1x32xf32>
    %289 = vector.extract_strided_slice %284 {offsets = [0, 64], sizes = [1, 32], strides = [1, 1]} : vector<1x96xf32> to vector<1x32xf32>
    %290 = arith.mulf %288, %234 : vector<1x32xf32>
    %291 = arith.mulf %287, %286 : vector<1x32xf32>
    %292 = arith.addf %290, %291 : vector<1x32xf32>
    %293 = math.tanh %292 : vector<1x32xf32>
    %294 = arith.mulf %289, %293 : vector<1x32xf32>
    %cst_63 = arith.constant dense<0.000000e+00> : vector<1x144xf32>
    %295 = tpu.matmul %294, %254, %cst_63 {dimension_numbers = #tpu.dot_dimension_numbers<[1], [0], [0], [1], [0, 0, 1, 1], [], []>} : vector<1x32xf32>, vector<32x144xf32>, vector<1x144xf32> -> vector<1x144xf32>
    %296 = vector.extract_strided_slice %295 {offsets = [0, 0], sizes = [1, 128], strides = [1, 1]} : vector<1x144xf32> to vector<1x128xf32>
    %297 = vector.extract_strided_slice %295 {offsets = [0, 128], sizes = [1, 16], strides = [1, 1]} : vector<1x144xf32> to vector<1x16xf32>
    %298 = vector.extract_strided_slice %246 {offsets = [1, 0], sizes = [1, 16], strides = [1, 1]} : vector<7x16xf32> to vector<1x16xf32>
    %299 = arith.addf %298, %297 : vector<1x16xf32>
    %cst_64 = arith.constant dense<0xFF800000> : vector<1xf32>
    %300 = vector.multi_reduction <maximumf>, %299, %cst_64 [1] : vector<1x16xf32> to vector<1xf32>
    %cst_65 = arith.constant 0xFF800000 : f32
    %301 = vector.broadcast %cst_65 : f32 to vector<1xf32>
    %302 = arith.maximumf %301, %300 : vector<1xf32>
    %303 = vector.shape_cast %302 : vector<1xf32> to vector<1x1xf32>
    %304 = vector.broadcast %303 : vector<1x1xf32> to vector<1x16xf32>
    %305 = arith.subf %299, %304 : vector<1x16xf32>
    %306 = math.exp %305 : vector<1x16xf32>
    %cst_66 = arith.constant dense<0.000000e+00> : vector<1xf32>
    %307 = vector.multi_reduction <add>, %306, %cst_66 [1] : vector<1x16xf32> to vector<1xf32>
    %308 = vector.shape_cast %307 : vector<1xf32> to vector<1x1xf32>
    %309 = vector.broadcast %308 : vector<1x1xf32> to vector<1x16xf32>
    %310 = arith.divf %306, %309 : vector<1x16xf32>
    %311 = vector.extract_strided_slice %251 {offsets = [1, 0], sizes = [1, 8], strides = [1, 1]} : vector<7x8xf32> to vector<1x8xf32>
    %cst_67 = arith.constant dense<0.000000e+00> : vector<1x8xf32>
    %312 = tpu.matmul %310, %240, %cst_67 {dimension_numbers = #tpu.dot_dimension_numbers<[1], [0], [0], [1], [0, 0, 1, 1], [], []>} : vector<1x16xf32>, vector<16x8xf32>, vector<1x8xf32> -> vector<1x8xf32>
    %313 = arith.addf %311, %312 : vector<1x8xf32>
    %cst_68 = arith.constant 0.000000e+00 : f32
    %314 = vector.broadcast %cst_68 : f32 to vector<1x8xf32>
    %315 = arith.maximumf %313, %314 : vector<1x8xf32>
    %cst_69 = arith.constant dense<0.000000e+00> : vector<1x128xf32>
    %316 = tpu.matmul %315, %252, %cst_69 {dimension_numbers = #tpu.dot_dimension_numbers<[1], [0], [0], [1], [0, 0, 1, 1], [], []>} : vector<1x8xf32>, vector<8x128xf32>, vector<1x128xf32> -> vector<1x128xf32>
    %317 = arith.addf %316, %296 : vector<1x128xf32>
    %318 = arith.addf %317, %253 : vector<1x128xf32>
    %319 = vector.extract_strided_slice %318 {offsets = [0, 0], sizes = [1, 96], strides = [1, 1]} : vector<1x128xf32> to vector<1x96xf32>
    %320 = arith.negf %319 : vector<1x96xf32>
    %321 = math.exp %320 : vector<1x96xf32>
    %cst_70 = arith.constant 1.000000e+00 : f32
    %322 = vector.broadcast %cst_70 : f32 to vector<1x96xf32>
    %323 = arith.addf %322, %321 : vector<1x96xf32>
    %324 = arith.divf %322, %323 : vector<1x96xf32>
    %325 = vector.extract_strided_slice %318 {offsets = [0, 96], sizes = [1, 32], strides = [1, 1]} : vector<1x128xf32> to vector<1x32xf32>
    %326 = math.tanh %325 : vector<1x32xf32>
    %327 = vector.extract_strided_slice %324 {offsets = [0, 0], sizes = [1, 32], strides = [1, 1]} : vector<1x96xf32> to vector<1x32xf32>
    %328 = vector.extract_strided_slice %324 {offsets = [0, 32], sizes = [1, 32], strides = [1, 1]} : vector<1x96xf32> to vector<1x32xf32>
    %329 = vector.extract_strided_slice %324 {offsets = [0, 64], sizes = [1, 32], strides = [1, 1]} : vector<1x96xf32> to vector<1x32xf32>
    %330 = arith.mulf %328, %292 : vector<1x32xf32>
    %331 = arith.mulf %327, %326 : vector<1x32xf32>
    %332 = arith.addf %330, %331 : vector<1x32xf32>
    %333 = math.tanh %332 : vector<1x32xf32>
    %334 = arith.mulf %329, %333 : vector<1x32xf32>
    %cst_71 = arith.constant dense<0.000000e+00> : vector<1x144xf32>
    %335 = tpu.matmul %334, %254, %cst_71 {dimension_numbers = #tpu.dot_dimension_numbers<[1], [0], [0], [1], [0, 0, 1, 1], [], []>} : vector<1x32xf32>, vector<32x144xf32>, vector<1x144xf32> -> vector<1x144xf32>
    %336 = vector.extract_strided_slice %335 {offsets = [0, 0], sizes = [1, 128], strides = [1, 1]} : vector<1x144xf32> to vector<1x128xf32>
    %337 = vector.extract_strided_slice %335 {offsets = [0, 128], sizes = [1, 16], strides = [1, 1]} : vector<1x144xf32> to vector<1x16xf32>
    %338 = vector.extract_strided_slice %246 {offsets = [2, 0], sizes = [1, 16], strides = [1, 1]} : vector<7x16xf32> to vector<1x16xf32>
    %339 = arith.addf %338, %337 : vector<1x16xf32>
    %cst_72 = arith.constant dense<0xFF800000> : vector<1xf32>
    %340 = vector.multi_reduction <maximumf>, %339, %cst_72 [1] : vector<1x16xf32> to vector<1xf32>
    %cst_73 = arith.constant 0xFF800000 : f32
    %341 = vector.broadcast %cst_73 : f32 to vector<1xf32>
    %342 = arith.maximumf %341, %340 : vector<1xf32>
    %343 = vector.shape_cast %342 : vector<1xf32> to vector<1x1xf32>
    %344 = vector.broadcast %343 : vector<1x1xf32> to vector<1x16xf32>
    %345 = arith.subf %339, %344 : vector<1x16xf32>
    %346 = math.exp %345 : vector<1x16xf32>
    %cst_74 = arith.constant dense<0.000000e+00> : vector<1xf32>
    %347 = vector.multi_reduction <add>, %346, %cst_74 [1] : vector<1x16xf32> to vector<1xf32>
    %348 = vector.shape_cast %347 : vector<1xf32> to vector<1x1xf32>
    %349 = vector.broadcast %348 : vector<1x1xf32> to vector<1x16xf32>
    %350 = arith.divf %346, %349 : vector<1x16xf32>
    %351 = vector.extract_strided_slice %251 {offsets = [2, 0], sizes = [1, 8], strides = [1, 1]} : vector<7x8xf32> to vector<1x8xf32>
    %cst_75 = arith.constant dense<0.000000e+00> : vector<1x8xf32>
    %352 = tpu.matmul %350, %240, %cst_75 {dimension_numbers = #tpu.dot_dimension_numbers<[1], [0], [0], [1], [0, 0, 1, 1], [], []>} : vector<1x16xf32>, vector<16x8xf32>, vector<1x8xf32> -> vector<1x8xf32>
    %353 = arith.addf %351, %352 : vector<1x8xf32>
    %cst_76 = arith.constant 0.000000e+00 : f32
    %354 = vector.broadcast %cst_76 : f32 to vector<1x8xf32>
    %355 = arith.maximumf %353, %354 : vector<1x8xf32>
    %cst_77 = arith.constant dense<0.000000e+00> : vector<1x128xf32>
    %356 = tpu.matmul %355, %252, %cst_77 {dimension_numbers = #tpu.dot_dimension_numbers<[1], [0], [0], [1], [0, 0, 1, 1], [], []>} : vector<1x8xf32>, vector<8x128xf32>, vector<1x128xf32> -> vector<1x128xf32>
    %357 = arith.addf %356, %336 : vector<1x128xf32>
    %358 = arith.addf %357, %253 : vector<1x128xf32>
    %359 = vector.extract_strided_slice %358 {offsets = [0, 0], sizes = [1, 96], strides = [1, 1]} : vector<1x128xf32> to vector<1x96xf32>
    %360 = arith.negf %359 : vector<1x96xf32>
    %361 = math.exp %360 : vector<1x96xf32>
    %cst_78 = arith.constant 1.000000e+00 : f32
    %362 = vector.broadcast %cst_78 : f32 to vector<1x96xf32>
    %363 = arith.addf %362, %361 : vector<1x96xf32>
    %364 = arith.divf %362, %363 : vector<1x96xf32>
    %365 = vector.extract_strided_slice %358 {offsets = [0, 96], sizes = [1, 32], strides = [1, 1]} : vector<1x128xf32> to vector<1x32xf32>
    %366 = math.tanh %365 : vector<1x32xf32>
    %367 = vector.extract_strided_slice %364 {offsets = [0, 0], sizes = [1, 32], strides = [1, 1]} : vector<1x96xf32> to vector<1x32xf32>
    %368 = vector.extract_strided_slice %364 {offsets = [0, 32], sizes = [1, 32], strides = [1, 1]} : vector<1x96xf32> to vector<1x32xf32>
    %369 = vector.extract_strided_slice %364 {offsets = [0, 64], sizes = [1, 32], strides = [1, 1]} : vector<1x96xf32> to vector<1x32xf32>
    %370 = arith.mulf %368, %332 : vector<1x32xf32>
    %371 = arith.mulf %367, %366 : vector<1x32xf32>
    %372 = arith.addf %370, %371 : vector<1x32xf32>
    %373 = math.tanh %372 : vector<1x32xf32>
    %374 = arith.mulf %369, %373 : vector<1x32xf32>
    %cst_79 = arith.constant dense<0.000000e+00> : vector<1x144xf32>
    %375 = tpu.matmul %374, %254, %cst_79 {dimension_numbers = #tpu.dot_dimension_numbers<[1], [0], [0], [1], [0, 0, 1, 1], [], []>} : vector<1x32xf32>, vector<32x144xf32>, vector<1x144xf32> -> vector<1x144xf32>
    %376 = vector.extract_strided_slice %375 {offsets = [0, 0], sizes = [1, 128], strides = [1, 1]} : vector<1x144xf32> to vector<1x128xf32>
    %377 = vector.extract_strided_slice %375 {offsets = [0, 128], sizes = [1, 16], strides = [1, 1]} : vector<1x144xf32> to vector<1x16xf32>
    %378 = vector.extract_strided_slice %246 {offsets = [3, 0], sizes = [1, 16], strides = [1, 1]} : vector<7x16xf32> to vector<1x16xf32>
    %379 = arith.addf %378, %377 : vector<1x16xf32>
    %cst_80 = arith.constant dense<0xFF800000> : vector<1xf32>
    %380 = vector.multi_reduction <maximumf>, %379, %cst_80 [1] : vector<1x16xf32> to vector<1xf32>
    %cst_81 = arith.constant 0xFF800000 : f32
    %381 = vector.broadcast %cst_81 : f32 to vector<1xf32>
    %382 = arith.maximumf %381, %380 : vector<1xf32>
    %383 = vector.shape_cast %382 : vector<1xf32> to vector<1x1xf32>
    %384 = vector.broadcast %383 : vector<1x1xf32> to vector<1x16xf32>
    %385 = arith.subf %379, %384 : vector<1x16xf32>
    %386 = math.exp %385 : vector<1x16xf32>
    %cst_82 = arith.constant dense<0.000000e+00> : vector<1xf32>
    %387 = vector.multi_reduction <add>, %386, %cst_82 [1] : vector<1x16xf32> to vector<1xf32>
    %388 = vector.shape_cast %387 : vector<1xf32> to vector<1x1xf32>
    %389 = vector.broadcast %388 : vector<1x1xf32> to vector<1x16xf32>
    %390 = arith.divf %386, %389 : vector<1x16xf32>
    %391 = vector.extract_strided_slice %251 {offsets = [3, 0], sizes = [1, 8], strides = [1, 1]} : vector<7x8xf32> to vector<1x8xf32>
    %cst_83 = arith.constant dense<0.000000e+00> : vector<1x8xf32>
    %392 = tpu.matmul %390, %240, %cst_83 {dimension_numbers = #tpu.dot_dimension_numbers<[1], [0], [0], [1], [0, 0, 1, 1], [], []>} : vector<1x16xf32>, vector<16x8xf32>, vector<1x8xf32> -> vector<1x8xf32>
    %393 = arith.addf %391, %392 : vector<1x8xf32>
    %cst_84 = arith.constant 0.000000e+00 : f32
    %394 = vector.broadcast %cst_84 : f32 to vector<1x8xf32>
    %395 = arith.maximumf %393, %394 : vector<1x8xf32>
    %cst_85 = arith.constant dense<0.000000e+00> : vector<1x128xf32>
    %396 = tpu.matmul %395, %252, %cst_85 {dimension_numbers = #tpu.dot_dimension_numbers<[1], [0], [0], [1], [0, 0, 1, 1], [], []>} : vector<1x8xf32>, vector<8x128xf32>, vector<1x128xf32> -> vector<1x128xf32>
    %397 = arith.addf %396, %376 : vector<1x128xf32>
    %398 = arith.addf %397, %253 : vector<1x128xf32>
    %399 = vector.extract_strided_slice %398 {offsets = [0, 0], sizes = [1, 96], strides = [1, 1]} : vector<1x128xf32> to vector<1x96xf32>
    %400 = arith.negf %399 : vector<1x96xf32>
    %401 = math.exp %400 : vector<1x96xf32>
    %cst_86 = arith.constant 1.000000e+00 : f32
    %402 = vector.broadcast %cst_86 : f32 to vector<1x96xf32>
    %403 = arith.addf %402, %401 : vector<1x96xf32>
    %404 = arith.divf %402, %403 : vector<1x96xf32>
    %405 = vector.extract_strided_slice %398 {offsets = [0, 96], sizes = [1, 32], strides = [1, 1]} : vector<1x128xf32> to vector<1x32xf32>
    %406 = math.tanh %405 : vector<1x32xf32>
    %407 = vector.extract_strided_slice %404 {offsets = [0, 0], sizes = [1, 32], strides = [1, 1]} : vector<1x96xf32> to vector<1x32xf32>
    %408 = vector.extract_strided_slice %404 {offsets = [0, 32], sizes = [1, 32], strides = [1, 1]} : vector<1x96xf32> to vector<1x32xf32>
    %409 = vector.extract_strided_slice %404 {offsets = [0, 64], sizes = [1, 32], strides = [1, 1]} : vector<1x96xf32> to vector<1x32xf32>
    %410 = arith.mulf %408, %372 : vector<1x32xf32>
    %411 = arith.mulf %407, %406 : vector<1x32xf32>
    %412 = arith.addf %410, %411 : vector<1x32xf32>
    %413 = math.tanh %412 : vector<1x32xf32>
    %414 = arith.mulf %409, %413 : vector<1x32xf32>
    %cst_87 = arith.constant dense<0.000000e+00> : vector<1x144xf32>
    %415 = tpu.matmul %414, %254, %cst_87 {dimension_numbers = #tpu.dot_dimension_numbers<[1], [0], [0], [1], [0, 0, 1, 1], [], []>} : vector<1x32xf32>, vector<32x144xf32>, vector<1x144xf32> -> vector<1x144xf32>
    %416 = vector.extract_strided_slice %415 {offsets = [0, 0], sizes = [1, 128], strides = [1, 1]} : vector<1x144xf32> to vector<1x128xf32>
    %417 = vector.extract_strided_slice %415 {offsets = [0, 128], sizes = [1, 16], strides = [1, 1]} : vector<1x144xf32> to vector<1x16xf32>
    %418 = vector.extract_strided_slice %246 {offsets = [4, 0], sizes = [1, 16], strides = [1, 1]} : vector<7x16xf32> to vector<1x16xf32>
    %419 = arith.addf %418, %417 : vector<1x16xf32>
    %cst_88 = arith.constant dense<0xFF800000> : vector<1xf32>
    %420 = vector.multi_reduction <maximumf>, %419, %cst_88 [1] : vector<1x16xf32> to vector<1xf32>
    %cst_89 = arith.constant 0xFF800000 : f32
    %421 = vector.broadcast %cst_89 : f32 to vector<1xf32>
    %422 = arith.maximumf %421, %420 : vector<1xf32>
    %423 = vector.shape_cast %422 : vector<1xf32> to vector<1x1xf32>
    %424 = vector.broadcast %423 : vector<1x1xf32> to vector<1x16xf32>
    %425 = arith.subf %419, %424 : vector<1x16xf32>
    %426 = math.exp %425 : vector<1x16xf32>
    %cst_90 = arith.constant dense<0.000000e+00> : vector<1xf32>
    %427 = vector.multi_reduction <add>, %426, %cst_90 [1] : vector<1x16xf32> to vector<1xf32>
    %428 = vector.shape_cast %427 : vector<1xf32> to vector<1x1xf32>
    %429 = vector.broadcast %428 : vector<1x1xf32> to vector<1x16xf32>
    %430 = arith.divf %426, %429 : vector<1x16xf32>
    %431 = vector.extract_strided_slice %251 {offsets = [4, 0], sizes = [1, 8], strides = [1, 1]} : vector<7x8xf32> to vector<1x8xf32>
    %cst_91 = arith.constant dense<0.000000e+00> : vector<1x8xf32>
    %432 = tpu.matmul %430, %240, %cst_91 {dimension_numbers = #tpu.dot_dimension_numbers<[1], [0], [0], [1], [0, 0, 1, 1], [], []>} : vector<1x16xf32>, vector<16x8xf32>, vector<1x8xf32> -> vector<1x8xf32>
    %433 = arith.addf %431, %432 : vector<1x8xf32>
    %cst_92 = arith.constant 0.000000e+00 : f32
    %434 = vector.broadcast %cst_92 : f32 to vector<1x8xf32>
    %435 = arith.maximumf %433, %434 : vector<1x8xf32>
    %cst_93 = arith.constant dense<0.000000e+00> : vector<1x128xf32>
    %436 = tpu.matmul %435, %252, %cst_93 {dimension_numbers = #tpu.dot_dimension_numbers<[1], [0], [0], [1], [0, 0, 1, 1], [], []>} : vector<1x8xf32>, vector<8x128xf32>, vector<1x128xf32> -> vector<1x128xf32>
    %437 = arith.addf %436, %416 : vector<1x128xf32>
    %438 = arith.addf %437, %253 : vector<1x128xf32>
    %439 = vector.extract_strided_slice %438 {offsets = [0, 0], sizes = [1, 96], strides = [1, 1]} : vector<1x128xf32> to vector<1x96xf32>
    %440 = arith.negf %439 : vector<1x96xf32>
    %441 = math.exp %440 : vector<1x96xf32>
    %cst_94 = arith.constant 1.000000e+00 : f32
    %442 = vector.broadcast %cst_94 : f32 to vector<1x96xf32>
    %443 = arith.addf %442, %441 : vector<1x96xf32>
    %444 = arith.divf %442, %443 : vector<1x96xf32>
    %445 = vector.extract_strided_slice %438 {offsets = [0, 96], sizes = [1, 32], strides = [1, 1]} : vector<1x128xf32> to vector<1x32xf32>
    %446 = math.tanh %445 : vector<1x32xf32>
    %447 = vector.extract_strided_slice %444 {offsets = [0, 0], sizes = [1, 32], strides = [1, 1]} : vector<1x96xf32> to vector<1x32xf32>
    %448 = vector.extract_strided_slice %444 {offsets = [0, 32], sizes = [1, 32], strides = [1, 1]} : vector<1x96xf32> to vector<1x32xf32>
    %449 = vector.extract_strided_slice %444 {offsets = [0, 64], sizes = [1, 32], strides = [1, 1]} : vector<1x96xf32> to vector<1x32xf32>
    %450 = arith.mulf %448, %412 : vector<1x32xf32>
    %451 = arith.mulf %447, %446 : vector<1x32xf32>
    %452 = arith.addf %450, %451 : vector<1x32xf32>
    %453 = math.tanh %452 : vector<1x32xf32>
    %454 = arith.mulf %449, %453 : vector<1x32xf32>
    %cst_95 = arith.constant dense<0.000000e+00> : vector<1x144xf32>
    %455 = tpu.matmul %454, %254, %cst_95 {dimension_numbers = #tpu.dot_dimension_numbers<[1], [0], [0], [1], [0, 0, 1, 1], [], []>} : vector<1x32xf32>, vector<32x144xf32>, vector<1x144xf32> -> vector<1x144xf32>
    %456 = vector.extract_strided_slice %455 {offsets = [0, 0], sizes = [1, 128], strides = [1, 1]} : vector<1x144xf32> to vector<1x128xf32>
    %457 = vector.extract_strided_slice %455 {offsets = [0, 128], sizes = [1, 16], strides = [1, 1]} : vector<1x144xf32> to vector<1x16xf32>
    %458 = vector.extract_strided_slice %246 {offsets = [5, 0], sizes = [1, 16], strides = [1, 1]} : vector<7x16xf32> to vector<1x16xf32>
    %459 = arith.addf %458, %457 : vector<1x16xf32>
    %cst_96 = arith.constant dense<0xFF800000> : vector<1xf32>
    %460 = vector.multi_reduction <maximumf>, %459, %cst_96 [1] : vector<1x16xf32> to vector<1xf32>
    %cst_97 = arith.constant 0xFF800000 : f32
    %461 = vector.broadcast %cst_97 : f32 to vector<1xf32>
    %462 = arith.maximumf %461, %460 : vector<1xf32>
    %463 = vector.shape_cast %462 : vector<1xf32> to vector<1x1xf32>
    %464 = vector.broadcast %463 : vector<1x1xf32> to vector<1x16xf32>
    %465 = arith.subf %459, %464 : vector<1x16xf32>
    %466 = math.exp %465 : vector<1x16xf32>
    %cst_98 = arith.constant dense<0.000000e+00> : vector<1xf32>
    %467 = vector.multi_reduction <add>, %466, %cst_98 [1] : vector<1x16xf32> to vector<1xf32>
    %468 = vector.shape_cast %467 : vector<1xf32> to vector<1x1xf32>
    %469 = vector.broadcast %468 : vector<1x1xf32> to vector<1x16xf32>
    %470 = arith.divf %466, %469 : vector<1x16xf32>
    %471 = vector.extract_strided_slice %251 {offsets = [5, 0], sizes = [1, 8], strides = [1, 1]} : vector<7x8xf32> to vector<1x8xf32>
    %cst_99 = arith.constant dense<0.000000e+00> : vector<1x8xf32>
    %472 = tpu.matmul %470, %240, %cst_99 {dimension_numbers = #tpu.dot_dimension_numbers<[1], [0], [0], [1], [0, 0, 1, 1], [], []>} : vector<1x16xf32>, vector<16x8xf32>, vector<1x8xf32> -> vector<1x8xf32>
    %473 = arith.addf %471, %472 : vector<1x8xf32>
    %cst_100 = arith.constant 0.000000e+00 : f32
    %474 = vector.broadcast %cst_100 : f32 to vector<1x8xf32>
    %475 = arith.maximumf %473, %474 : vector<1x8xf32>
    %cst_101 = arith.constant dense<0.000000e+00> : vector<1x128xf32>
    %476 = tpu.matmul %475, %252, %cst_101 {dimension_numbers = #tpu.dot_dimension_numbers<[1], [0], [0], [1], [0, 0, 1, 1], [], []>} : vector<1x8xf32>, vector<8x128xf32>, vector<1x128xf32> -> vector<1x128xf32>
    %477 = arith.addf %476, %456 : vector<1x128xf32>
    %478 = arith.addf %477, %253 : vector<1x128xf32>
    %479 = vector.extract_strided_slice %478 {offsets = [0, 0], sizes = [1, 96], strides = [1, 1]} : vector<1x128xf32> to vector<1x96xf32>
    %480 = arith.negf %479 : vector<1x96xf32>
    %481 = math.exp %480 : vector<1x96xf32>
    %cst_102 = arith.constant 1.000000e+00 : f32
    %482 = vector.broadcast %cst_102 : f32 to vector<1x96xf32>
    %483 = arith.addf %482, %481 : vector<1x96xf32>
    %484 = arith.divf %482, %483 : vector<1x96xf32>
    %485 = vector.extract_strided_slice %478 {offsets = [0, 96], sizes = [1, 32], strides = [1, 1]} : vector<1x128xf32> to vector<1x32xf32>
    %486 = math.tanh %485 : vector<1x32xf32>
    %487 = vector.extract_strided_slice %484 {offsets = [0, 0], sizes = [1, 32], strides = [1, 1]} : vector<1x96xf32> to vector<1x32xf32>
    %488 = vector.extract_strided_slice %484 {offsets = [0, 32], sizes = [1, 32], strides = [1, 1]} : vector<1x96xf32> to vector<1x32xf32>
    %489 = vector.extract_strided_slice %484 {offsets = [0, 64], sizes = [1, 32], strides = [1, 1]} : vector<1x96xf32> to vector<1x32xf32>
    %490 = arith.mulf %488, %452 : vector<1x32xf32>
    %491 = arith.mulf %487, %486 : vector<1x32xf32>
    %492 = arith.addf %490, %491 : vector<1x32xf32>
    %493 = math.tanh %492 : vector<1x32xf32>
    %494 = arith.mulf %489, %493 : vector<1x32xf32>
    %cst_103 = arith.constant dense<0.000000e+00> : vector<1x144xf32>
    %495 = tpu.matmul %494, %254, %cst_103 {dimension_numbers = #tpu.dot_dimension_numbers<[1], [0], [0], [1], [0, 0, 1, 1], [], []>} : vector<1x32xf32>, vector<32x144xf32>, vector<1x144xf32> -> vector<1x144xf32>
    %496 = vector.extract_strided_slice %495 {offsets = [0, 0], sizes = [1, 128], strides = [1, 1]} : vector<1x144xf32> to vector<1x128xf32>
    %497 = vector.extract_strided_slice %495 {offsets = [0, 128], sizes = [1, 16], strides = [1, 1]} : vector<1x144xf32> to vector<1x16xf32>
    %498 = vector.extract_strided_slice %246 {offsets = [6, 0], sizes = [1, 16], strides = [1, 1]} : vector<7x16xf32> to vector<1x16xf32>
    %499 = arith.addf %498, %497 : vector<1x16xf32>
    %cst_104 = arith.constant dense<0xFF800000> : vector<1xf32>
    %500 = vector.multi_reduction <maximumf>, %499, %cst_104 [1] : vector<1x16xf32> to vector<1xf32>
    %cst_105 = arith.constant 0xFF800000 : f32
    %501 = vector.broadcast %cst_105 : f32 to vector<1xf32>
    %502 = arith.maximumf %501, %500 : vector<1xf32>
    %503 = vector.shape_cast %502 : vector<1xf32> to vector<1x1xf32>
    %504 = vector.broadcast %503 : vector<1x1xf32> to vector<1x16xf32>
    %505 = arith.subf %499, %504 : vector<1x16xf32>
    %506 = math.exp %505 : vector<1x16xf32>
    %cst_106 = arith.constant dense<0.000000e+00> : vector<1xf32>
    %507 = vector.multi_reduction <add>, %506, %cst_106 [1] : vector<1x16xf32> to vector<1xf32>
    %508 = vector.shape_cast %507 : vector<1xf32> to vector<1x1xf32>
    %509 = vector.broadcast %508 : vector<1x1xf32> to vector<1x16xf32>
    %510 = arith.divf %506, %509 : vector<1x16xf32>
    %511 = vector.extract_strided_slice %251 {offsets = [6, 0], sizes = [1, 8], strides = [1, 1]} : vector<7x8xf32> to vector<1x8xf32>
    %cst_107 = arith.constant dense<0.000000e+00> : vector<1x8xf32>
    %512 = tpu.matmul %510, %240, %cst_107 {dimension_numbers = #tpu.dot_dimension_numbers<[1], [0], [0], [1], [0, 0, 1, 1], [], []>} : vector<1x16xf32>, vector<16x8xf32>, vector<1x8xf32> -> vector<1x8xf32>
    %513 = arith.addf %511, %512 : vector<1x8xf32>
    %cst_108 = arith.constant 0.000000e+00 : f32
    %514 = vector.broadcast %cst_108 : f32 to vector<1x8xf32>
    %515 = arith.maximumf %513, %514 : vector<1x8xf32>
    %cst_109 = arith.constant dense<0.000000e+00> : vector<1x128xf32>
    %516 = tpu.matmul %515, %252, %cst_109 {dimension_numbers = #tpu.dot_dimension_numbers<[1], [0], [0], [1], [0, 0, 1, 1], [], []>} : vector<1x8xf32>, vector<8x128xf32>, vector<1x128xf32> -> vector<1x128xf32>
    %517 = arith.addf %516, %496 : vector<1x128xf32>
    %518 = arith.addf %517, %253 : vector<1x128xf32>
    %519 = vector.extract_strided_slice %518 {offsets = [0, 0], sizes = [1, 96], strides = [1, 1]} : vector<1x128xf32> to vector<1x96xf32>
    %520 = arith.negf %519 : vector<1x96xf32>
    %521 = math.exp %520 : vector<1x96xf32>
    %cst_110 = arith.constant 1.000000e+00 : f32
    %522 = vector.broadcast %cst_110 : f32 to vector<1x96xf32>
    %523 = arith.addf %522, %521 : vector<1x96xf32>
    %524 = arith.divf %522, %523 : vector<1x96xf32>
    %525 = vector.extract_strided_slice %518 {offsets = [0, 96], sizes = [1, 32], strides = [1, 1]} : vector<1x128xf32> to vector<1x32xf32>
    %526 = math.tanh %525 : vector<1x32xf32>
    %527 = vector.extract_strided_slice %524 {offsets = [0, 0], sizes = [1, 32], strides = [1, 1]} : vector<1x96xf32> to vector<1x32xf32>
    %528 = vector.extract_strided_slice %524 {offsets = [0, 32], sizes = [1, 32], strides = [1, 1]} : vector<1x96xf32> to vector<1x32xf32>
    %529 = vector.extract_strided_slice %524 {offsets = [0, 64], sizes = [1, 32], strides = [1, 1]} : vector<1x96xf32> to vector<1x32xf32>
    %530 = arith.mulf %528, %492 : vector<1x32xf32>
    %531 = arith.mulf %527, %526 : vector<1x32xf32>
    %532 = arith.addf %530, %531 : vector<1x32xf32>
    %533 = math.tanh %532 : vector<1x32xf32>
    %534 = arith.mulf %529, %533 : vector<1x32xf32>
    %535 = tpu.concatenate %294, %334, %374, %414, %454, %494, %534 in 0 : vector<1x32xf32>, vector<1x32xf32>, vector<1x32xf32>, vector<1x32xf32>, vector<1x32xf32>, vector<1x32xf32>, vector<1x32xf32> -> vector<7x32xf32>
    %c0_111 = arith.constant 0 : index
    %c0_112 = arith.constant 0 : index
    %536 = vector.load %arg13[%c0_111, %c0_112] : memref<32x8xf32, #tpu.memory_space<vmem>>, vector<32x8xf32>
    %cst_113 = arith.constant dense<0.000000e+00> : vector<7x8xf32>
    %537 = tpu.matmul %535, %536, %cst_113 {dimension_numbers = #tpu.dot_dimension_numbers<[1], [0], [0], [1], [0, 0, 1, 1], [], []>} : vector<7x32xf32>, vector<32x8xf32>, vector<7x8xf32> -> vector<7x8xf32>
    %c0_114 = arith.constant 0 : index
    %c0_115 = arith.constant 0 : index
    %538 = vector.load %arg14[%c0_114, %c0_115] : memref<1x8xf32, #tpu.memory_space<vmem>>, vector<1x8xf32>
    %539 = vector.broadcast %538 : vector<1x8xf32> to vector<7x8xf32>
    %540 = arith.addf %537, %539 : vector<7x8xf32>
    %cst_116 = arith.constant dense<0xFF800000> : vector<7xf32>
    %541 = vector.multi_reduction <maximumf>, %540, %cst_116 [1] : vector<7x8xf32> to vector<7xf32>
    %cst_117 = arith.constant 0xFF800000 : f32
    %542 = vector.broadcast %cst_117 : f32 to vector<7xf32>
    %543 = arith.maximumf %542, %541 : vector<7xf32>
    %544 = vector.shape_cast %543 : vector<7xf32> to vector<7x1xf32>
    %545 = vector.broadcast %544 : vector<7x1xf32> to vector<7x8xf32>
    %546 = arith.subf %540, %545 : vector<7x8xf32>
    %547 = math.exp %546 : vector<7x8xf32>
    %cst_118 = arith.constant dense<0.000000e+00> : vector<7xf32>
    %548 = vector.multi_reduction <add>, %547, %cst_118 [1] : vector<7x8xf32> to vector<7xf32>
    %549 = vector.shape_cast %548 : vector<7xf32> to vector<7x1xf32>
    %550 = vector.broadcast %549 : vector<7x1xf32> to vector<7x8xf32>
    %551 = arith.divf %547, %550 : vector<7x8xf32>
    %c0_119 = arith.constant 0 : index
    %c0_120 = arith.constant 0 : index
    %552 = vector.load %arg15[%c0_119, %c0_120] : memref<7x8xf32, #tpu.memory_space<vmem>>, vector<7x8xf32>
    tpu.vector_store %arg15[%c0_119, %c0_120], %551 {strides = array<i32>} : memref<7x8xf32, #tpu.memory_space<vmem>>, vector<7x8xf32>,
    return
  }
}

</mosaic_0001>

<llo_original>
// kernel: tpu_custom_call.1
$region0: #{tpu_custom_call.1}
  #allocation0 [shape = 'u32[]', space=smem, size = 0x4, offset = 0x4, fixed_abs, tag = 'smem constant byte address 0x4 - core index']
  #allocation1 [shape = 'u32[144,128]{1,0:T(1,128)}', space=vmem, size = 0x12000, scoped, tag = 'internal scratch']
  %s0 = inlined_call_operand.vmem [shape: f32[12,4], index: 0, kind: input, shape index: {}]
  %s1 = inlined_call_operand.vmem [shape: f32[8,8], index: 1, kind: input, shape index: {}]
  %s2 = inlined_call_operand.hbm [shape: f32[4,128], index: 2, kind: input, shape index: {}]
  %s3 = inlined_call_operand.vmem [shape: f32[32,128], index: 3, kind: input, shape index: {}]
  %s4 = inlined_call_operand.vmem [shape: f32[1,128], index: 4, kind: input, shape index: {}]
  %s5 = inlined_call_operand.vmem [shape: f32[8,16], index: 5, kind: input, shape index: {}]
  %s6 = inlined_call_operand.hbm [shape: f32[1,16], index: 6, kind: input, shape index: {}]
  %s7 = inlined_call_operand.hbm [shape: f32[8,8], index: 7, kind: input, shape index: {}]
  %s8 = inlined_call_operand.vmem [shape: f32[32,8], index: 8, kind: input, shape index: {}]
  %s9 = inlined_call_operand.hbm [shape: f32[1,8], index: 9, kind: input, shape index: {}]
  %s10 = inlined_call_operand.hbm [shape: f32[8,128], index: 10, kind: input, shape index: {}]
  %s11 = inlined_call_operand.hbm [shape: f32[1,128], index: 11, kind: input, shape index: {}]
  %s12 = inlined_call_operand.vmem [shape: f32[32,144], index: 12, kind: input, shape index: {}]
  %s13 = inlined_call_operand.vmem [shape: f32[32,8], index: 13, kind: input, shape index: {}]
  %s14 = inlined_call_operand.vmem [shape: f32[1,8], index: 14, kind: input, shape index: {}]
  %s15 = inlined_call_operand.hbm [shape: f32[7,8], index: 15, kind: output, shape index: {}]
  %s16 = sld [smem:[#allocation0]]
  $region94: #{tpu_custom_call.1} parent=0
    _
  %s18 = ssub.s32 1, %s16
  %s19 = scalar_select 0, %s18, %s16
  $region1: #{tpu_custom_call.1} parent=0
    #allocation2 [shape = 'u8[2048]{0}', space=vmem, size = 0x800, scoped, tag = 'input window, operand 2, single buffered']
    #allocation3 [shape = 's32[1]{0}', space=sflag, size = 0x4, scoped, tag = 'scoped memory for tpu_custom_call.1']
    #allocation4 [shape = 's32[1]{0}', space=sflag, size = 0x4, scoped, tag = 'scoped memory for tpu_custom_call.1']
    #allocation5 [shape = 'u8[512]{0}', space=vmem, size = 0x400, scoped, tag = 'input window, operand 6, single buffered']
    #allocation6 [shape = 's32[1]{0}', space=sflag, size = 0x4, scoped, tag = 'scoped memory for tpu_custom_call.1']
    #allocation7 [shape = 'u8[4096]{0}', space=vmem, size = 0x1000, scoped, tag = 'input window, operand 7, single buffered']
    #allocation8 [shape = 'u8[512]{0}', space=vmem, size = 0x400, scoped, tag = 'input window, operand 9, single buffered']
    #allocation9 [shape = 's32[1]{0}', space=sflag, size = 0x4, scoped, tag = 'scoped memory for tpu_custom_call.1']
    #allocation10 [shape = 'u8[4096]{0}', space=vmem, size = 0x1000, scoped, tag = 'input window, operand 10, single buffered']
    #allocation11 [shape = 'u8[512]{0}', space=vmem, size = 0x400, scoped, tag = 'input window, operand 11, single buffered']
    #allocation12 [shape = 's32[1]{0}', space=sflag, size = 0x4, scoped, tag = 'scoped memory for tpu_custom_call.1']
    #allocation13 [shape = 'u8[4096]{0}', space=vmem, size = 0x1000, scoped, tag = 'output window, operand 0, single buffered']
    %20 = vsyncpa [#allocation3], 0
    %21 = vsyncpa [#allocation6], 0
    %22 = vsyncpa [#allocation9], 0
    %23 = vsyncpa [#allocation12], 0
    %24 = vsyncpa [#allocation4], 0
    // Predicated region
    $region2: #{tpu_custom_call.1} parent=1 // pred_check
      _
    $region3: #{tpu_custom_call.1} parent=1 // pred_check_branch
      %26 = sbr.rel (0) target = $region5
    $region4: #{tpu_custom_call.1} parent=1 // pred_region
      _
    $region5: #{tpu_custom_call.1} parent=1 // pred_fallthru
      _
    // Predicated region
    $region6: #{tpu_custom_call.1} parent=1 // pred_check
      _
    $region7: #{tpu_custom_call.1} parent=1 // pred_check_branch
      %28 = sbr.rel (0) target = $region9
    $region8: #{tpu_custom_call.1} parent=1 // pred_region
      _
    $region9: #{tpu_custom_call.1} parent=1 // pred_fallthru
      _
    // Predicated region
    $region10: #{tpu_custom_call.1} parent=1 // pred_check
      _
    $region11: #{tpu_custom_call.1} parent=1 // pred_check_branch
      %30 = sbr.rel (0) target = $region13
    $region12: #{tpu_custom_call.1} parent=1 // pred_region
      %s32 = ssub.s32 64, 64
      %33 = vsyncadd [#allocation3], %s32
      %s35 = sshll.u32 [#allocation2], 4
      %s36 = int_to_ptr.vmem [resolvable:$true] %s35
      %38 = dma.hbm_to_vmem [thread:$0]  %s2, 64, %s36, [#allocation3]
    $region13: #{tpu_custom_call.1} parent=1 // pred_fallthru
      _
    // Predicated region
    $region14: #{tpu_custom_call.1} parent=1 // pred_check
      _
    $region15: #{tpu_custom_call.1} parent=1 // pred_check_branch
      %40 = sbr.rel (0) target = $region17
    $region16: #{tpu_custom_call.1} parent=1 // pred_region
      _
    $region17: #{tpu_custom_call.1} parent=1 // pred_fallthru
      _
    // Predicated region
    $region18: #{tpu_custom_call.1} parent=1 // pred_check
      _
    $region19: #{tpu_custom_call.1} parent=1 // pred_check_branch
      %42 = sbr.rel (0) target = $region21
    $region20: #{tpu_custom_call.1} parent=1 // pred_region
      _
    $region21: #{tpu_custom_call.1} parent=1 // pred_fallthru
      _
    // Predicated region
    $region22: #{tpu_custom_call.1} parent=1 // pred_check
      _
    $region23: #{tpu_custom_call.1} parent=1 // pred_check_branch
      %44 = sbr.rel (0) target = $region25
    $region24: #{tpu_custom_call.1} parent=1 // pred_region
      _
    $region25: #{tpu_custom_call.1} parent=1 // pred_fallthru
      _
    // Predicated region
    $region26: #{tpu_custom_call.1} parent=1 // pred_check
      _
    $region27: #{tpu_custom_call.1} parent=1 // pred_check_branch
      %46 = sbr.rel (0) target = $region29
    $region28: #{tpu_custom_call.1} parent=1 // pred_region
      %s48 = ssub.s32 16, 16
      %49 = vsyncadd [#allocation6], %s48
      %s51 = sshll.u32 [#allocation5], 4
      %s52 = int_to_ptr.vmem [resolvable:$true] %s51
      %54 = dma.hbm_to_vmem [thread:$0]  %s6, 16, %s52, [#allocation6]
    $region29: #{tpu_custom_call.1} parent=1 // pred_fallthru
      _
    // Predicated region
    $region30: #{tpu_custom_call.1} parent=1 // pred_check
      _
    $region31: #{tpu_custom_call.1} parent=1 // pred_check_branch
      %56 = sbr.rel (0) target = $region33
    $region32: #{tpu_custom_call.1} parent=1 // pred_region
      %s58 = ssub.s32 128, 128
      %59 = vsyncadd [#allocation6], %s58
      %s61 = sshll.u32 [#allocation7], 4
      %s62 = int_to_ptr.vmem [resolvable:$true] %s61
      %64 = dma.hbm_to_vmem [thread:$0]  %s7, 128, %s62, [#allocation6]
    $region33: #{tpu_custom_call.1} parent=1 // pred_fallthru
      _
    // Predicated region
    $region34: #{tpu_custom_call.1} parent=1 // pred_check
      _
    $region35: #{tpu_custom_call.1} parent=1 // pred_check_branch
      %66 = sbr.rel (0) target = $region37
    $region36: #{tpu_custom_call.1} parent=1 // pred_region
      _
    $region37: #{tpu_custom_call.1} parent=1 // pred_fallthru
      _
    // Predicated region
    $region38: #{tpu_custom_call.1} parent=1 // pred_check
      _
    $region39: #{tpu_custom_call.1} parent=1 // pred_check_branch
      %68 = sbr.rel (0) target = $region41
    $region40: #{tpu_custom_call.1} parent=1 // pred_region
      %s70 = ssub.s32 16, 16
      %71 = vsyncadd [#allocation9], %s70
      %s73 = sshll.u32 [#allocation8], 4
      %s74 = int_to_ptr.vmem [resolvable:$true] %s73
      %76 = dma.hbm_to_vmem [thread:$0]  %s9, 16, %s74, [#allocation9]
    $region41: #{tpu_custom_call.1} parent=1 // pred_fallthru
      _
    // Predicated region
    $region42: #{tpu_custom_call.1} parent=1 // pred_check
      _
    $region43: #{tpu_custom_call.1} parent=1 // pred_check_branch
      %78 = sbr.rel (0) target = $region45
    $region44: #{tpu_custom_call.1} parent=1 // pred_region
      %s80 = ssub.s32 128, 128
      %81 = vsyncadd [#allocation9], %s80
      %s83 = sshll.u32 [#allocation10], 4
      %s84 = int_to_ptr.vmem [resolvable:$true] %s83
      %86 = dma.hbm_to_vmem [thread:$0]  %s10, 128, %s84, [#allocation9]
    $region45: #{tpu_custom_call.1} parent=1 // pred_fallthru
      _
    // Predicated region
    $region46: #{tpu_custom_call.1} parent=1 // pred_check
      _
    $region47: #{tpu_custom_call.1} parent=1 // pred_check_branch
      %88 = sbr.rel (0) target = $region49
    $region48: #{tpu_custom_call.1} parent=1 // pred_region
      %s90 = ssub.s32 16, 16
      %91 = vsyncadd [#allocation12], %s90
      %s93 = sshll.u32 [#allocation11], 4
      %s94 = int_to_ptr.vmem [resolvable:$true] %s93
      %96 = dma.hbm_to_vmem [thread:$0]  %s11, 16, %s94, [#allocation12]
    $region49: #{tpu_custom_call.1} parent=1 // pred_fallthru
      _
    // Predicated region
    $region50: #{tpu_custom_call.1} parent=1 // pred_check
      _
    $region51: #{tpu_custom_call.1} parent=1 // pred_check_branch
      %98 = sbr.rel (0) target = $region53
    $region52: #{tpu_custom_call.1} parent=1 // pred_region
      _
    $region53: #{tpu_custom_call.1} parent=1 // pred_fallthru
      _
    // Predicated region
    $region54: #{tpu_custom_call.1} parent=1 // pred_check
      _
    $region55: #{tpu_custom_call.1} parent=1 // pred_check_branch
      %100 = sbr.rel (0) target = $region57
    $region56: #{tpu_custom_call.1} parent=1 // pred_region
      _
    $region57: #{tpu_custom_call.1} parent=1 // pred_fallthru
      _
    // Predicated region
    $region58: #{tpu_custom_call.1} parent=1 // pred_check
      _
    $region59: #{tpu_custom_call.1} parent=1 // pred_check_branch
      %102 = sbr.rel (0) target = $region61
    $region60: #{tpu_custom_call.1} parent=1 // pred_region
      _
    $region61: #{tpu_custom_call.1} parent=1 // pred_fallthru
      _
    // Predicated region
    $region62: #{tpu_custom_call.1} parent=1 // pred_check
      _
    $region63: #{tpu_custom_call.1} parent=1 // pred_check_branch
      %104 = sbr.rel (0) target = $region65
    $region64: #{tpu_custom_call.1} parent=1 // pred_region
      %105 = dma.done [#allocation3], 64
    $region65: #{tpu_custom_call.1} parent=1 // pred_fallthru
      _
    // Predicated region
    $region66: #{tpu_custom_call.1} parent=1 // pred_check
      _
    $region67: #{tpu_custom_call.1} parent=1 // pred_check_branch
      %107 = sbr.rel (0) target = $region69
    $region68: #{tpu_custom_call.1} parent=1 // pred_region
      %108 = dma.done [#allocation6], 16
    $region69: #{tpu_custom_call.1} parent=1 // pred_fallthru
      _
    // Predicated region
    $region70: #{tpu_custom_call.1} parent=1 // pred_check
      _
    $region71: #{tpu_custom_call.1} parent=1 // pred_check_branch
      %110 = sbr.rel (0) target = $region73
    $region72: #{tpu_custom_call.1} parent=1 // pred_region
      %111 = dma.done [#allocation6], 128
    $region73: #{tpu_custom_call.1} parent=1 // pred_fallthru
      _
    // Predicated region
    $region74: #{tpu_custom_call.1} parent=1 // pred_check
      _
    $region75: #{tpu_custom_call.1} parent=1 // pred_check_branch
      %113 = sbr.rel (0) target = $region77
    $region76: #{tpu_custom_call.1} parent=1 // pred_region
      %114 = dma.done [#allocation9], 16
    $region77: #{tpu_custom_call.1} parent=1 // pred_fallthru
      _
    // Predicated region
    $region78: #{tpu_custom_call.1} parent=1 // pred_check
      _
    $region79: #{tpu_custom_call.1} parent=1 // pred_check_branch
      %116 = sbr.rel (0) target = $region81
    $region80: #{tpu_custom_call.1} parent=1 // pred_region
      %117 = dma.done [#allocation9], 128
    $region81: #{tpu_custom_call.1} parent=1 // pred_fallthru
      _
    // Predicated region
    $region82: #{tpu_custom_call.1} parent=1 // pred_check
      _
    $region83: #{tpu_custom_call.1} parent=1 // pred_check_branch
      %119 = sbr.rel (0) target = $region85
    $region84: #{tpu_custom_call.1} parent=1 // pred_region
      %120 = dma.done [#allocation12], 16
    $region85: #{tpu_custom_call.1} parent=1 // pred_fallthru
      _
    %v121 = vld [vmem:[%s0] sm:$0xff]
    %v122 = vld [vmem:[%s0 + $0x8] sm:$0xf]
    %v123 = vld [vmem:[#allocation2] sm:$0xf]
    %v124 = vld [vmem:[%s4] sm:$0x1]
    %v126 = vlaneseq
    %v127 = vshrl.u32 %v126, 7
    %v128 = vsub.s32 0, %v127
    %v129 = vrot.slane %v124, %v128
    %vm131 = vcmask 31744
    %v133 = vsel %vm131, %v121, 0
    %v136 = vsel %vm131, %v122, 0
    %vm138 = vcmask 1043456
    %v140 = vsel %vm138, %v123, 0
    %142 = vmatprep.subr.mxu0 0.0
    %143 = vmatpush1.msra.mxu0 0.0
    %144 = vmatprep.subr.mxu0 0.0
    %145 = vmatpush1.msra.mxu0 0.0
    %146 = vmatprep.subr.mxu0 0.0
    %147 = vmatpush1.msra.mxu0 0.0
    %148 = vmatprep.subr.mxu0 0.0
    %149 = vmatpush1.msra.mxu0 0.0
    %150 = vmatprep.subr.mxu0 0.0
    %151 = vmatpush1.msra.mxu0 0.0
    %152 = vmatprep.subr.mxu0 0.0
    %153 = vmatpush1.msra.mxu0 0.0
    %154 = vmatprep.subr.mxu0 0.0
    %155 = vmatpush1.msra.mxu0 0.0
    %156 = vmatprep.subr.mxu0 0.0
    %157 = vmatpush1.msra.mxu0 0.0
    %158 = vmatprep.subr.mxu0 0.0
    %159 = vmatpush1.msra.mxu0 0.0
    %160 = vmatprep.subr.mxu0 0.0
    %161 = vmatpush1.msra.mxu0 0.0
    %162 = vmatprep.subr.mxu0 0.0
    %163 = vmatpush1.msra.mxu0 0.0
    %164 = vmatprep.subr.mxu0 0.0
    %165 = vmatpush1.msra.mxu0 0.0
    %166 = vmatprep.subr.mxu0 0.0
    %167 = vmatpush1.msra.mxu0 0.0
    %168 = vmatprep.subr.mxu0 0.0
    %169 = vmatpush1.msra.mxu0 0.0
    %170 = vmatprep.subr.mxu0 0.0
    %171 = vmatpush1.msra.mxu0 0.0
    %172 = vmatprep.subr.mxu0 0.0
    %173 = vmatpush1.msra.mxu0 %v140
    %174 = vmatprep.subr.mxu0 0.0
    %175 = vmatpush2.msra.mxu0 0.0
    %176 = vmatprep.subr.mxu0 0.0
    %177 = vmatpush2.msra.mxu0 0.0
    %178 = vmatprep.subr.mxu0 0.0
    %179 = vmatpush2.msra.mxu0 0.0
    %180 = vmatprep.subr.mxu0 0.0
    %181 = vmatpush2.msra.mxu0 0.0
    %182 = vmatprep.subr.mxu0 0.0
    %183 = vmatpush2.msra.mxu0 0.0
    %184 = vmatprep.subr.mxu0 0.0
    %185 = vmatpush2.msra.mxu0 0.0
    %186 = vmatprep.subr.mxu0 0.0
    %187 = vmatpush2.msra.mxu0 0.0
    %188 = vmatprep.subr.mxu0 0.0
    %189 = vmatpush2.msra.mxu0 0.0
    %190 = vmatprep.subr.mxu0 0.0
    %191 = vmatpush2.msra.mxu0 0.0
    %192 = vmatprep.subr.mxu0 0.0
    %193 = vmatpush2.msra.mxu0 0.0
    %194 = vmatprep.subr.mxu0 0.0
    %195 = vmatpush2.msra.mxu0 0.0
    %196 = vmatprep.subr.mxu0 0.0
    %197 = vmatpush2.msra.mxu0 0.0
    %198 = vmatprep.subr.mxu0 0.0
    %199 = vmatpush2.msra.mxu0 0.0
    %200 = vmatprep.subr.mxu0 0.0
    %201 = vmatpush2.msra.mxu0 0.0
    %202 = vmatprep.subr.mxu0 0.0
    %203 = vmatpush2.msra.mxu0 0.0
    %204 = vmatprep.subr.mxu0 0.0
    %205 = vmatpush2.msra.mxu0 0.0
    %206 = vmatprep.mubr.f32.mxu0 0.0
    %207 = vmatmul.mubr.f32.gmra.mxu0 %v133
    %v208 = vpop.f32.mrf.mxu0
    %v209 = vadd.f32 %v129, %v208
    %v210 = vpop.f32.mrf.mxu0
    %211 = vmatprep.mubr.f32.mxu0 0.0
    %212 = vmatmul.mubr.f32.gmra.mxu0 %v136
    %v213 = vpop.f32.mrf.mxu0
    %v214 = vadd.f32 %v129, %v213
    %v215 = vpop.f32.mrf.mxu0
    %216 = vdwg.mxu0
    %v217 = vld [vmem:[%s3] sm:$0xff]
    %v218 = vld [vmem:[%s3 + $0x8] sm:$0xff]
    %v219 = vld [vmem:[%s3 + $0x10] sm:$0xff]
    %v220 = vld [vmem:[%s3 + $0x18] sm:$0xff]
    %vm221 = vcmask 261120
    %v223 = vsel %vm221, 0.0, 0
    %225 = vmatprep.subr.mxu0 0.0
    %226 = vmatpush1.msra.mxu0 0.0
    %227 = vmatprep.subr.mxu0 0.0
    %228 = vmatpush1.msra.mxu0 0.0
    %229 = vmatprep.subr.mxu0 0.0
    %230 = vmatpush1.msra.mxu0 0.0
    %231 = vmatprep.subr.mxu0 0.0
    %232 = vmatpush1.msra.mxu0 0.0
    %233 = vmatprep.subr.mxu0 0.0
    %234 = vmatpush1.msra.mxu0 0.0
    %235 = vmatprep.subr.mxu0 0.0
    %236 = vmatpush1.msra.mxu0 0.0
    %237 = vmatprep.subr.mxu0 0.0
    %238 = vmatpush1.msra.mxu0 0.0
    %239 = vmatprep.subr.mxu0 0.0
    %240 = vmatpush1.msra.mxu0 0.0
    %241 = vmatprep.subr.mxu0 0.0
    %242 = vmatpush1.msra.mxu0 0.0
    %243 = vmatprep.subr.mxu0 0.0
    %244 = vmatpush1.msra.mxu0 0.0
    %245 = vmatprep.subr.mxu0 0.0
    %246 = vmatpush1.msra.mxu0 0.0
    %247 = vmatprep.subr.mxu0 0.0
    %248 = vmatpush1.msra.mxu0 0.0
    %249 = vmatprep.subr.mxu0 0.0
    %250 = vmatpush1.msra.mxu0 %v220
    %251 = vmatprep.subr.mxu0 0.0
    %252 = vmatpush1.msra.mxu0 %v219
    %253 = vmatprep.subr.mxu0 0.0
    %254 = vmatpush1.msra.mxu0 %v218
    %255 = vmatprep.subr.mxu0 0.0
    %256 = vmatpush1.msra.mxu0 %v217
    %257 = vmatprep.subr.mxu0 0.0
    %258 = vmatpush2.msra.mxu0 0.0
    %259 = vmatprep.subr.mxu0 0.0
    %260 = vmatpush2.msra.mxu0 0.0
    %261 = vmatprep.subr.mxu0 0.0
    %262 = vmatpush2.msra.mxu0 0.0
    %263 = vmatprep.subr.mxu0 0.0
    %264 = vmatpush2.msra.mxu0 0.0
    %265 = vmatprep.subr.mxu0 0.0
    %266 = vmatpush2.msra.mxu0 0.0
    %267 = vmatprep.subr.mxu0 0.0
    %268 = vmatpush2.msra.mxu0 0.0
    %269 = vmatprep.subr.mxu0 0.0
    %270 = vmatpush2.msra.mxu0 0.0
    %271 = vmatprep.subr.mxu0 0.0
    %272 = vmatpush2.msra.mxu0 0.0
    %273 = vmatprep.subr.mxu0 0.0
    %274 = vmatpush2.msra.mxu0 0.0
    %275 = vmatprep.subr.mxu0 0.0
    %276 = vmatpush2.msra.mxu0 0.0
    %277 = vmatprep.subr.mxu0 0.0
    %278 = vmatpush2.msra.mxu0 0.0
    %279 = vmatprep.subr.mxu0 0.0
    %280 = vmatpush2.msra.mxu0 0.0
    %281 = vmatprep.subr.mxu0 0.0
    %282 = vmatpush2.msra.mxu0 0.0
    %283 = vmatprep.subr.mxu0 0.0
    %284 = vmatpush2.msra.mxu0 0.0
    %285 = vmatprep.subr.mxu0 0.0
    %286 = vmatpush2.msra.mxu0 0.0
    %287 = vmatprep.subr.mxu0 0.0
    %288 = vmatpush2.msra.mxu0 0.0
    %289 = vmatprep.mubr.f32.mxu0 0.0
    %290 = vmatmul.mubr.f32.gmra.mxu0 %v223
    %v291 = vpop.f32.mrf.mxu0
    %v292 = vadd.f32 0.0, %v291
    %v293 = vpop.f32.mrf.mxu0
    %294 = vdwg.mxu0
    %v295 = vadd.f32 %v209, %v292
    %v296 = vxor.u32 %v295, 2147483648
    %v297 = vmul.f32 %v296, 1.442695
    %v298 = vpow.pop %v297
    %v299 = vadd.f32 %v298, 1.0
    %v300 = vrcp.pop %v299
    %v301 = vmul.f32 1.0, %v300
    %v302 = vtanh.pop %v295
    %v303 = vmul.f32 %v301, 0.0
    %305 = vrot.lane.b32.xlu0 %v302, 32
    %v306 = vpop.permute.xlu0 %305
    %v308 = vmul.f32 %v301, %v306
    %310 = vrot.lane.b32.xlu0 %v308, 32
    %v311 = vpop.permute.xlu0 %310
    %v313 = vadd.f32 %v303, %v311
    %v314 = vtanh.pop %v313
    %316 = vrot.lane.b32.xlu0 %v314, 32
    %v317 = vpop.permute.xlu0 %316
    %v319 = vmul.f32 %v301, %v317
    %321 = vrot.lane.b32.xlu0 %v319, 64
    %v322 = vpop.permute.xlu0 %321
    %v323 = vsel %vm221, %v322, 0
    %325 = vmatprep.subr.mxu0 0.0
    %326 = vmatpush1.msra.mxu0 0.0
    %327 = vmatprep.subr.mxu0 0.0
    %328 = vmatpush1.msra.mxu0 0.0
    %329 = vmatprep.subr.mxu0 0.0
    %330 = vmatpush1.msra.mxu0 0.0
    %331 = vmatprep.subr.mxu0 0.0
    %332 = vmatpush1.msra.mxu0 0.0
    %333 = vmatprep.subr.mxu0 0.0
    %334 = vmatpush1.msra.mxu0 0.0
    %335 = vmatprep.subr.mxu0 0.0
    %336 = vmatpush1.msra.mxu0 0.0
    %337 = vmatprep.subr.mxu0 0.0
    %338 = vmatpush1.msra.mxu0 0.0
    %339 = vmatprep.subr.mxu0 0.0
    %340 = vmatpush1.msra.mxu0 0.0
    %341 = vmatprep.subr.mxu0 0.0
    %342 = vmatpush1.msra.mxu0 0.0
    %343 = vmatprep.subr.mxu0 0.0
    %344 = vmatpush1.msra.mxu0 0.0
    %345 = vmatprep.subr.mxu0 0.0
    %346 = vmatpush1.msra.mxu0 0.0
    %347 = vmatprep.subr.mxu0 0.0
    %348 = vmatpush1.msra.mxu0 0.0
    %349 = vmatprep.subr.mxu0 0.0
    %350 = vmatpush1.msra.mxu0 %v220
    %351 = vmatprep.subr.mxu0 0.0
    %352 = vmatpush1.msra.mxu0 %v219
    %353 = vmatprep.subr.mxu0 0.0
    %354 = vmatpush1.msra.mxu0 %v218
    %355 = vmatprep.subr.mxu0 0.0
    %356 = vmatpush1.msra.mxu0 %v217
    %357 = vmatprep.subr.mxu0 0.0
    %358 = vmatpush2.msra.mxu0 0.0
    %359 = vmatprep.subr.mxu0 0.0
    %360 = vmatpush2.msra.mxu0 0.0
    %361 = vmatprep.subr.mxu0 0.0
    %362 = vmatpush2.msra.mxu0 0.0
    %363 = vmatprep.subr.mxu0 0.0
    %364 = vmatpush2.msra.mxu0 0.0
    %365 = vmatprep.subr.mxu0 0.0
    %366 = vmatpush2.msra.mxu0 0.0
    %367 = vmatprep.subr.mxu0 0.0
    %368 = vmatpush2.msra.mxu0 0.0
    %369 = vmatprep.subr.mxu0 0.0
    %370 = vmatpush2.msra.mxu0 0.0
    %371 = vmatprep.subr.mxu0 0.0
    %372 = vmatpush2.msra.mxu0 0.0
    %373 = vmatprep.subr.mxu0 0.0
    %374 = vmatpush2.msra.mxu0 0.0
    %375 = vmatprep.subr.mxu0 0.0
    %376 = vmatpush2.msra.mxu0 0.0
    %377 = vmatprep.subr.mxu0 0.0
    %378 = vmatpush2.msra.mxu0 0.0
    %379 = vmatprep.subr.mxu0 0.0
    %380 = vmatpush2.msra.mxu0 0.0
    %381 = vmatprep.subr.mxu0 0.0
    %382 = vmatpush2.msra.mxu0 0.0
    %383 = vmatprep.subr.mxu0 0.0
    %384 = vmatpush2.msra.mxu0 0.0
    %385 = vmatprep.subr.mxu0 0.0
    %386 = vmatpush2.msra.mxu0 0.0
    %387 = vmatprep.subr.mxu0 0.0
    %388 = vmatpush2.msra.mxu0 0.0
    %389 = vmatprep.mubr.f32.mxu0 0.0
    %390 = vmatmul.mubr.f32.gmra.mxu0 %v323
    %v391 = vpop.f32.mrf.mxu0
    %v392 = vadd.f32 0.0, %v391
    %v393 = vpop.f32.mrf.mxu0
    %394 = vdwg.mxu0
    %v396 = vrot.slane %v392, 7
    %v398 = vadd.f32 %v209, %v396
    %v399 = vxor.u32 %v398, 2147483648
    %v400 = vmul.f32 %v399, 1.442695
    %v401 = vpow.pop %v400
    %v402 = vadd.f32 %v401, 1.0
    %v403 = vrcp.pop %v402
    %v404 = vmul.f32 1.0, %v403
    %v405 = vtanh.pop %v398
    %v407 = vrot.slane %v313, 7
    %v409 = vmul.f32 %v404, %v407
    %411 = vrot.lane.b32.xlu0 %v405, 32
    %v412 = vpop.permute.xlu0 %411
    %v414 = vmul.f32 %v404, %v412
    %416 = vrot.lane.b32.xlu0 %v414, 32
    %v417 = vpop.permute.xlu0 %416
    %v419 = vadd.f32 %v409, %v417
    %v420 = vtanh.pop %v419
    %422 = vrot.lane.b32.xlu0 %v420, 32
    %v423 = vpop.permute.xlu0 %422
    %v425 = vmul.f32 %v404, %v423
    %v427 = vrot.slane %v425, 1
    %428 = vrot.lane.b32.xlu0 %v427, 64
    %v429 = vpop.permute.xlu0 %428
    %v430 = vsel %vm221, %v429, 0
    %432 = vmatprep.subr.mxu0 0.0
    %433 = vmatpush1.msra.mxu0 0.0
    %434 = vmatprep.subr.mxu0 0.0
    %435 = vmatpush1.msra.mxu0 0.0
    %436 = vmatprep.subr.mxu0 0.0
    %437 = vmatpush1.msra.mxu0 0.0
    %438 = vmatprep.subr.mxu0 0.0
    %439 = vmatpush1.msra.mxu0 0.0
    %440 = vmatprep.subr.mxu0 0.0
    %441 = vmatpush1.msra.mxu0 0.0
    %442 = vmatprep.subr.mxu0 0.0
    %443 = vmatpush1.msra.mxu0 0.0
    %444 = vmatprep.subr.mxu0 0.0
    %445 = vmatpush1.msra.mxu0 0.0
    %446 = vmatprep.subr.mxu0 0.0
    %447 = vmatpush1.msra.mxu0 0.0
    %448 = vmatprep.subr.mxu0 0.0
    %449 = vmatpush1.msra.mxu0 0.0
    %450 = vmatprep.subr.mxu0 0.0
    %451 = vmatpush1.msra.mxu0 0.0
    %452 = vmatprep.subr.mxu0 0.0
    %453 = vmatpush1.msra.mxu0 0.0
    %454 = vmatprep.subr.mxu0 0.0
    %455 = vmatpush1.msra.mxu0 0.0
    %456 = vmatprep.subr.mxu0 0.0
    %457 = vmatpush1.msra.mxu0 %v220
    %458 = vmatprep.subr.mxu0 0.0
    %459 = vmatpush1.msra.mxu0 %v219
    %460 = vmatprep.subr.mxu0 0.0
    %461 = vmatpush1.msra.mxu0 %v218
    %462 = vmatprep.subr.mxu0 0.0
    %463 = vmatpush1.msra.mxu0 %v217
    %464 = vmatprep.subr.mxu0 0.0
    %465 = vmatpush2.msra.mxu0 0.0
    %466 = vmatprep.subr.mxu0 0.0
    %467 = vmatpush2.msra.mxu0 0.0
    %468 = vmatprep.subr.mxu0 0.0
    %469 = vmatpush2.msra.mxu0 0.0
    %470 = vmatprep.subr.mxu0 0.0
    %471 = vmatpush2.msra.mxu0 0.0
    %472 = vmatprep.subr.mxu0 0.0
    %473 = vmatpush2.msra.mxu0 0.0
    %474 = vmatprep.subr.mxu0 0.0
    %475 = vmatpush2.msra.mxu0 0.0
    %476 = vmatprep.subr.mxu0 0.0
    %477 = vmatpush2.msra.mxu0 0.0
    %478 = vmatprep.subr.mxu0 0.0
    %479 = vmatpush2.msra.mxu0 0.0
    %480 = vmatprep.subr.mxu0 0.0
    %481 = vmatpush2.msra.mxu0 0.0
    %482 = vmatprep.subr.mxu0 0.0
    %483 = vmatpush2.msra.mxu0 0.0
    %484 = vmatprep.subr.mxu0 0.0
    %485 = vmatpush2.msra.mxu0 0.0
    %486 = vmatprep.subr.mxu0 0.0
    %487 = vmatpush2.msra.mxu0 0.0
    %488 = vmatprep.subr.mxu0 0.0
    %489 = vmatpush2.msra.mxu0 0.0
    %490 = vmatprep.subr.mxu0 0.0
    %491 = vmatpush2.msra.mxu0 0.0
    %492 = vmatprep.subr.mxu0 0.0
    %493 = vmatpush2.msra.mxu0 0.0
    %494 = vmatprep.subr.mxu0 0.0
    %495 = vmatpush2.msra.mxu0 0.0
    %496 = vmatprep.mubr.f32.mxu0 0.0
    %497 = vmatmul.mubr.f32.gmra.mxu0 %v430
    %v498 = vpop.f32.mrf.mxu0
    %v499 = vadd.f32 0.0, %v498
    %v500 = vpop.f32.mrf.mxu0
    %501 = vdwg.mxu0
    %v503 = vrot.slane %v499, 6
    %v505 = vadd.f32 %v209, %v503
    %v506 = vxor.u32 %v505, 2147483648
    %v507 = vmul.f32 %v506, 1.442695
    %v508 = vpow.pop %v507
    %v509 = vadd.f32 %v508, 1.0
    %v510 = vrcp.pop %v509
    %v511 = vmul.f32 1.0, %v510
    %v512 = vtanh.pop %v505
    %v514 = vrot.slane %v419, 7
    %v516 = vmul.f32 %v511, %v514
    %518 = vrot.lane.b32.xlu0 %v512, 32
    %v519 = vpop.permute.xlu0 %518
    %v521 = vmul.f32 %v511, %v519
    %523 = vrot.lane.b32.xlu0 %v521, 32
    %v524 = vpop.permute.xlu0 %523
    %v526 = vadd.f32 %v516, %v524
    %v527 = vtanh.pop %v526
    %529 = vrot.lane.b32.xlu0 %v527, 32
    %v530 = vpop.permute.xlu0 %529
    %v532 = vmul.f32 %v511, %v530
    %v534 = vrot.slane %v532, 2
    %535 = vrot.lane.b32.xlu0 %v534, 64
    %v536 = vpop.permute.xlu0 %535
    %v537 = vsel %vm221, %v536, 0
    %539 = vmatprep.subr.mxu0 0.0
    %540 = vmatpush1.msra.mxu0 0.0
    %541 = vmatprep.subr.mxu0 0.0
    %542 = vmatpush1.msra.mxu0 0.0
    %543 = vmatprep.subr.mxu0 0.0
    %544 = vmatpush1.msra.mxu0 0.0
    %545 = vmatprep.subr.mxu0 0.0
    %546 = vmatpush1.msra.mxu0 0.0
    %547 = vmatprep.subr.mxu0 0.0
    %548 = vmatpush1.msra.mxu0 0.0
    %549 = vmatprep.subr.mxu0 0.0
    %550 = vmatpush1.msra.mxu0 0.0
    %551 = vmatprep.subr.mxu0 0.0
    %552 = vmatpush1.msra.mxu0 0.0
    %553 = vmatprep.subr.mxu0 0.0
    %554 = vmatpush1.msra.mxu0 0.0
    %555 = vmatprep.subr.mxu0 0.0
    %556 = vmatpush1.msra.mxu0 0.0
    %557 = vmatprep.subr.mxu0 0.0
    %558 = vmatpush1.msra.mxu0 0.0
    %559 = vmatprep.subr.mxu0 0.0
    %560 = vmatpush1.msra.mxu0 0.0
    %561 = vmatprep.subr.mxu0 0.0
    %562 = vmatpush1.msra.mxu0 0.0
    %563 = vmatprep.subr.mxu0 0.0
    %564 = vmatpush1.msra.mxu0 %v220
    %565 = vmatprep.subr.mxu0 0.0
    %566 = vmatpush1.msra.mxu0 %v219
    %567 = vmatprep.subr.mxu0 0.0
    %568 = vmatpush1.msra.mxu0 %v218
    %569 = vmatprep.subr.mxu0 0.0
    %570 = vmatpush1.msra.mxu0 %v217
    %571 = vmatprep.subr.mxu0 0.0
    %572 = vmatpush2.msra.mxu0 0.0
    %573 = vmatprep.subr.mxu0 0.0
    %574 = vmatpush2.msra.mxu0 0.0
    %575 = vmatprep.subr.mxu0 0.0
    %576 = vmatpush2.msra.mxu0 0.0
    %577 = vmatprep.subr.mxu0 0.0
    %578 = vmatpush2.msra.mxu0 0.0
    %579 = vmatprep.subr.mxu0 0.0
    %580 = vmatpush2.msra.mxu0 0.0
    %581 = vmatprep.subr.mxu0 0.0
    %582 = vmatpush2.msra.mxu0 0.0
    %583 = vmatprep.subr.mxu0 0.0
    %584 = vmatpush2.msra.mxu0 0.0
    %585 = vmatprep.subr.mxu0 0.0
    %586 = vmatpush2.msra.mxu0 0.0
    %587 = vmatprep.subr.mxu0 0.0
    %588 = vmatpush2.msra.mxu0 0.0
    %589 = vmatprep.subr.mxu0 0.0
    %590 = vmatpush2.msra.mxu0 0.0
    %591 = vmatprep.subr.mxu0 0.0
    %592 = vmatpush2.msra.mxu0 0.0
    %593 = vmatprep.subr.mxu0 0.0
    %594 = vmatpush2.msra.mxu0 0.0
    %595 = vmatprep.subr.mxu0 0.0
    %596 = vmatpush2.msra.mxu0 0.0
    %597 = vmatprep.subr.mxu0 0.0
    %598 = vmatpush2.msra.mxu0 0.0
    %599 = vmatprep.subr.mxu0 0.0
    %600 = vmatpush2.msra.mxu0 0.0
    %601 = vmatprep.subr.mxu0 0.0
    %602 = vmatpush2.msra.mxu0 0.0
    %603 = vmatprep.mubr.f32.mxu0 0.0
    %604 = vmatmul.mubr.f32.gmra.mxu0 %v537
    %v605 = vpop.f32.mrf.mxu0
    %v606 = vadd.f32 0.0, %v605
    %v607 = vpop.f32.mrf.mxu0
    %608 = vdwg.mxu0
    %v610 = vrot.slane %v606, 5
    %v612 = vadd.f32 %v209, %v610
    %v613 = vxor.u32 %v612, 2147483648
    %v614 = vmul.f32 %v613, 1.442695
    %v615 = vpow.pop %v614
    %v616 = vadd.f32 %v615, 1.0
    %v617 = vrcp.pop %v616
    %v618 = vmul.f32 1.0, %v617
    %v619 = vtanh.pop %v612
    %v621 = vrot.slane %v526, 7
    %v623 = vmul.f32 %v618, %v621
    %625 = vrot.lane.b32.xlu0 %v619, 32
    %v626 = vpop.permute.xlu0 %625
    %v628 = vmul.f32 %v618, %v626
    %630 = vrot.lane.b32.xlu0 %v628, 32
    %v631 = vpop.permute.xlu0 %630
    %v633 = vadd.f32 %v623, %v631
    %v634 = vtanh.pop %v633
    %636 = vrot.lane.b32.xlu0 %v634, 32
    %v637 = vpop.permute.xlu0 %636
    %v639 = vmul.f32 %v618, %v637
    %v641 = vrot.slane %v639, 3
    %642 = vrot.lane.b32.xlu0 %v641, 64
    %v643 = vpop.permute.xlu0 %642
    %v644 = vsel %vm221, %v643, 0
    %646 = vmatprep.subr.mxu0 0.0
    %647 = vmatpush1.msra.mxu0 0.0
    %648 = vmatprep.subr.mxu0 0.0
    %649 = vmatpush1.msra.mxu0 0.0
    %650 = vmatprep.subr.mxu0 0.0
    %651 = vmatpush1.msra.mxu0 0.0
    %652 = vmatprep.subr.mxu0 0.0
    %653 = vmatpush1.msra.mxu0 0.0
    %654 = vmatprep.subr.mxu0 0.0
    %655 = vmatpush1.msra.mxu0 0.0
    %656 = vmatprep.subr.mxu0 0.0
    %657 = vmatpush1.msra.mxu0 0.0
    %658 = vmatprep.subr.mxu0 0.0
    %659 = vmatpush1.msra.mxu0 0.0
    %660 = vmatprep.subr.mxu0 0.0
    %661 = vmatpush1.msra.mxu0 0.0
    %662 = vmatprep.subr.mxu0 0.0
    %663 = vmatpush1.msra.mxu0 0.0
    %664 = vmatprep.subr.mxu0 0.0
    %665 = vmatpush1.msra.mxu0 0.0
    %666 = vmatprep.subr.mxu0 0.0
    %667 = vmatpush1.msra.mxu0 0.0
    %668 = vmatprep.subr.mxu0 0.0
    %669 = vmatpush1.msra.mxu0 0.0
    %670 = vmatprep.subr.mxu0 0.0
    %671 = vmatpush1.msra.mxu0 %v220
    %672 = vmatprep.subr.mxu0 0.0
    %673 = vmatpush1.msra.mxu0 %v219
    %674 = vmatprep.subr.mxu0 0.0
    %675 = vmatpush1.msra.mxu0 %v218
    %676 = vmatprep.subr.mxu0 0.0
    %677 = vmatpush1.msra.mxu0 %v217
    %678 = vmatprep.subr.mxu0 0.0
    %679 = vmatpush2.msra.mxu0 0.0
    %680 = vmatprep.subr.mxu0 0.0
    %681 = vmatpush2.msra.mxu0 0.0
    %682 = vmatprep.subr.mxu0 0.0
    %683 = vmatpush2.msra.mxu0 0.0
    %684 = vmatprep.subr.mxu0 0.0
    %685 = vmatpush2.msra.mxu0 0.0
    %686 = vmatprep.subr.mxu0 0.0
    %687 = vmatpush2.msra.mxu0 0.0
    %688 = vmatprep.subr.mxu0 0.0
    %689 = vmatpush2.msra.mxu0 0.0
    %690 = vmatprep.subr.mxu0 0.0
    %691 = vmatpush2.msra.mxu0 0.0
    %692 = vmatprep.subr.mxu0 0.0
    %693 = vmatpush2.msra.mxu0 0.0
    %694 = vmatprep.subr.mxu0 0.0
    %695 = vmatpush2.msra.mxu0 0.0
    %696 = vmatprep.subr.mxu0 0.0
    %697 = vmatpush2.msra.mxu0 0.0
    %698 = vmatprep.subr.mxu0 0.0
    %699 = vmatpush2.msra.mxu0 0.0
    %700 = vmatprep.subr.mxu0 0.0
    %701 = vmatpush2.msra.mxu0 0.0
    %702 = vmatprep.subr.mxu0 0.0
    %703 = vmatpush2.msra.mxu0 0.0
    %704 = vmatprep.subr.mxu0 0.0
    %705 = vmatpush2.msra.mxu0 0.0
    %706 = vmatprep.subr.mxu0 0.0
    %707 = vmatpush2.msra.mxu0 0.0
    %708 = vmatprep.subr.mxu0 0.0
    %709 = vmatpush2.msra.mxu0 0.0
    %710 = vmatprep.mubr.f32.mxu0 0.0
    %711 = vmatmul.mubr.f32.gmra.mxu0 %v644
    %v712 = vpop.f32.mrf.mxu0
    %v713 = vadd.f32 0.0, %v712
    %v714 = vpop.f32.mrf.mxu0
    %715 = vdwg.mxu0
    %v717 = vrot.slane %v713, 4
    %v719 = vadd.f32 %v209, %v717
    %v720 = vxor.u32 %v719, 2147483648
    %v721 = vmul.f32 %v720, 1.442695
    %v722 = vpow.pop %v721
    %v723 = vadd.f32 %v722, 1.0
    %v724 = vrcp.pop %v723
    %v725 = vmul.f32 1.0, %v724
    %v726 = vtanh.pop %v719
    %v728 = vrot.slane %v633, 7
    %v730 = vmul.f32 %v725, %v728
    %732 = vrot.lane.b32.xlu0 %v726, 32
    %v733 = vpop.permute.xlu0 %732
    %v735 = vmul.f32 %v725, %v733
    %737 = vrot.lane.b32.xlu0 %v735, 32
    %v738 = vpop.permute.xlu0 %737
    %v740 = vadd.f32 %v730, %v738
    %v741 = vtanh.pop %v740
    %743 = vrot.lane.b32.xlu0 %v741, 32
    %v744 = vpop.permute.xlu0 %743
    %v746 = vmul.f32 %v725, %v744
    %v748 = vrot.slane %v746, 4
    %749 = vrot.lane.b32.xlu0 %v748, 64
    %v750 = vpop.permute.xlu0 %749
    %v751 = vsel %vm221, %v750, 0
    %753 = vmatprep.subr.mxu0 0.0
    %754 = vmatpush1.msra.mxu0 0.0
    %755 = vmatprep.subr.mxu0 0.0
    %756 = vmatpush1.msra.mxu0 0.0
    %757 = vmatprep.subr.mxu0 0.0
    %758 = vmatpush1.msra.mxu0 0.0
    %759 = vmatprep.subr.mxu0 0.0
    %760 = vmatpush1.msra.mxu0 0.0
    %761 = vmatprep.subr.mxu0 0.0
    %762 = vmatpush1.msra.mxu0 0.0
    %763 = vmatprep.subr.mxu0 0.0
    %764 = vmatpush1.msra.mxu0 0.0
    %765 = vmatprep.subr.mxu0 0.0
    %766 = vmatpush1.msra.mxu0 0.0
    %767 = vmatprep.subr.mxu0 0.0
    %768 = vmatpush1.msra.mxu0 0.0
    %769 = vmatprep.subr.mxu0 0.0
    %770 = vmatpush1.msra.mxu0 0.0
    %771 = vmatprep.subr.mxu0 0.0
    %772 = vmatpush1.msra.mxu0 0.0
    %773 = vmatprep.subr.mxu0 0.0
    %774 = vmatpush1.msra.mxu0 0.0
    %775 = vmatprep.subr.mxu0 0.0
    %776 = vmatpush1.msra.mxu0 0.0
    %777 = vmatprep.subr.mxu0 0.0
    %778 = vmatpush1.msra.mxu0 %v220
    %779 = vmatprep.subr.mxu0 0.0
    %780 = vmatpush1.msra.mxu0 %v219
    %781 = vmatprep.subr.mxu0 0.0
    %782 = vmatpush1.msra.mxu0 %v218
    %783 = vmatprep.subr.mxu0 0.0
    %784 = vmatpush1.msra.mxu0 %v217
    %785 = vmatprep.subr.mxu0 0.0
    %786 = vmatpush2.msra.mxu0 0.0
    %787 = vmatprep.subr.mxu0 0.0
    %788 = vmatpush2.msra.mxu0 0.0
    %789 = vmatprep.subr.mxu0 0.0
    %790 = vmatpush2.msra.mxu0 0.0
    %791 = vmatprep.subr.mxu0 0.0
    %792 = vmatpush2.msra.mxu0 0.0
    %793 = vmatprep.subr.mxu0 0.0
    %794 = vmatpush2.msra.mxu0 0.0
    %795 = vmatprep.subr.mxu0 0.0
    %796 = vmatpush2.msra.mxu0 0.0
    %797 = vmatprep.subr.mxu0 0.0
    %798 = vmatpush2.msra.mxu0 0.0
    %799 = vmatprep.subr.mxu0 0.0
    %800 = vmatpush2.msra.mxu0 0.0
    %801 = vmatprep.subr.mxu0 0.0
    %802 = vmatpush2.msra.mxu0 0.0
    %803 = vmatprep.subr.mxu0 0.0
    %804 = vmatpush2.msra.mxu0 0.0
    %805 = vmatprep.subr.mxu0 0.0
    %806 = vmatpush2.msra.mxu0 0.0
    %807 = vmatprep.subr.mxu0 0.0
    %808 = vmatpush2.msra.mxu0 0.0
    %809 = vmatprep.subr.mxu0 0.0
    %810 = vmatpush2.msra.mxu0 0.0
    %811 = vmatprep.subr.mxu0 0.0
    %812 = vmatpush2.msra.mxu0 0.0
    %813 = vmatprep.subr.mxu0 0.0
    %814 = vmatpush2.msra.mxu0 0.0
    %815 = vmatprep.subr.mxu0 0.0
    %816 = vmatpush2.msra.mxu0 0.0
    %817 = vmatprep.mubr.f32.mxu0 0.0
    %818 = vmatmul.mubr.f32.gmra.mxu0 %v751
    %v819 = vpop.f32.mrf.mxu0
    %v820 = vadd.f32 0.0, %v819
    %v821 = vpop.f32.mrf.mxu0
    %822 = vdwg.mxu0
    %v824 = vrot.slane %v820, 3
    %v826 = vadd.f32 %v209, %v824
    %v827 = vxor.u32 %v826, 2147483648
    %v828 = vmul.f32 %v827, 1.442695
    %v829 = vpow.pop %v828
    %v830 = vadd.f32 %v829, 1.0
    %v831 = vrcp.pop %v830
    %v832 = vmul.f32 1.0, %v831
    %v833 = vtanh.pop %v826
    %v835 = vrot.slane %v740, 7
    %v837 = vmul.f32 %v832, %v835
    %839 = vrot.lane.b32.xlu0 %v833, 32
    %v840 = vpop.permute.xlu0 %839
    %v842 = vmul.f32 %v832, %v840
    %844 = vrot.lane.b32.xlu0 %v842, 32
    %v845 = vpop.permute.xlu0 %844
    %v847 = vadd.f32 %v837, %v845
    %v848 = vtanh.pop %v847
    %850 = vrot.lane.b32.xlu0 %v848, 32
    %v851 = vpop.permute.xlu0 %850
    %v853 = vmul.f32 %v832, %v851
    %v855 = vrot.slane %v853, 5
    %856 = vrot.lane.b32.xlu0 %v855, 64
    %v857 = vpop.permute.xlu0 %856
    %v858 = vsel %vm221, %v857, 0
    %860 = vmatprep.subr.mxu0 0.0
    %861 = vmatpush1.msra.mxu0 0.0
    %862 = vmatprep.subr.mxu0 0.0
    %863 = vmatpush1.msra.mxu0 0.0
    %864 = vmatprep.subr.mxu0 0.0
    %865 = vmatpush1.msra.mxu0 0.0
    %866 = vmatprep.subr.mxu0 0.0
    %867 = vmatpush1.msra.mxu0 0.0
    %868 = vmatprep.subr.mxu0 0.0
    %869 = vmatpush1.msra.mxu0 0.0
    %870 = vmatprep.subr.mxu0 0.0
    %871 = vmatpush1.msra.mxu0 0.0
    %872 = vmatprep.subr.mxu0 0.0
    %873 = vmatpush1.msra.mxu0 0.0
    %874 = vmatprep.subr.mxu0 0.0
    %875 = vmatpush1.msra.mxu0 0.0
    %876 = vmatprep.subr.mxu0 0.0
    %877 = vmatpush1.msra.mxu0 0.0
    %878 = vmatprep.subr.mxu0 0.0
    %879 = vmatpush1.msra.mxu0 0.0
    %880 = vmatprep.subr.mxu0 0.0
    %881 = vmatpush1.msra.mxu0 0.0
    %882 = vmatprep.subr.mxu0 0.0
    %883 = vmatpush1.msra.mxu0 0.0
    %884 = vmatprep.subr.mxu0 0.0
    %885 = vmatpush1.msra.mxu0 %v220
    %886 = vmatprep.subr.mxu0 0.0
    %887 = vmatpush1.msra.mxu0 %v219
    %888 = vmatprep.subr.mxu0 0.0
    %889 = vmatpush1.msra.mxu0 %v218
    %890 = vmatprep.subr.mxu0 0.0
    %891 = vmatpush1.msra.mxu0 %v217
    %892 = vmatprep.subr.mxu0 0.0
    %893 = vmatpush2.msra.mxu0 0.0
    %894 = vmatprep.subr.mxu0 0.0
    %895 = vmatpush2.msra.mxu0 0.0
    %896 = vmatprep.subr.mxu0 0.0
    %897 = vmatpush2.msra.mxu0 0.0
    %898 = vmatprep.subr.mxu0 0.0
    %899 = vmatpush2.msra.mxu0 0.0
    %900 = vmatprep.subr.mxu0 0.0
    %901 = vmatpush2.msra.mxu0 0.0
    %902 = vmatprep.subr.mxu0 0.0
    %903 = vmatpush2.msra.mxu0 0.0
    %904 = vmatprep.subr.mxu0 0.0
    %905 = vmatpush2.msra.mxu0 0.0
    %906 = vmatprep.subr.mxu0 0.0
    %907 = vmatpush2.msra.mxu0 0.0
    %908 = vmatprep.subr.mxu0 0.0
    %909 = vmatpush2.msra.mxu0 0.0
    %910 = vmatprep.subr.mxu0 0.0
    %911 = vmatpush2.msra.mxu0 0.0
    %912 = vmatprep.subr.mxu0 0.0
    %913 = vmatpush2.msra.mxu0 0.0
    %914 = vmatprep.subr.mxu0 0.0
    %915 = vmatpush2.msra.mxu0 0.0
    %916 = vmatprep.subr.mxu0 0.0
    %917 = vmatpush2.msra.mxu0 0.0
    %918 = vmatprep.subr.mxu0 0.0
    %919 = vmatpush2.msra.mxu0 0.0
    %920 = vmatprep.subr.mxu0 0.0
    %921 = vmatpush2.msra.mxu0 0.0
    %922 = vmatprep.subr.mxu0 0.0
    %923 = vmatpush2.msra.mxu0 0.0
    %924 = vmatprep.mubr.f32.mxu0 0.0
    %925 = vmatmul.mubr.f32.gmra.mxu0 %v858
    %v926 = vpop.f32.mrf.mxu0
    %v927 = vadd.f32 0.0, %v926
    %v928 = vpop.f32.mrf.mxu0
    %929 = vdwg.mxu0
    %v931 = vrot.slane %v927, 2
    %v933 = vadd.f32 %v209, %v931
    %v934 = vxor.u32 %v933, 2147483648
    %v935 = vmul.f32 %v934, 1.442695
    %v936 = vpow.pop %v935
    %v937 = vadd.f32 %v936, 1.0
    %v938 = vrcp.pop %v937
    %v939 = vmul.f32 1.0, %v938
    %v940 = vtanh.pop %v933
    %v942 = vrot.slane %v847, 7
    %v944 = vmul.f32 %v939, %v942
    %946 = vrot.lane.b32.xlu0 %v940, 32
    %v947 = vpop.permute.xlu0 %946
    %v949 = vmul.f32 %v939, %v947
    %951 = vrot.lane.b32.xlu0 %v949, 32
    %v952 = vpop.permute.xlu0 %951
    %v954 = vadd.f32 %v944, %v952
    %v955 = vtanh.pop %v954
    %957 = vrot.lane.b32.xlu0 %v955, 32
    %v958 = vpop.permute.xlu0 %957
    %v960 = vmul.f32 %v939, %v958
    %v962 = vrot.slane %v960, 6
    %963 = vrot.lane.b32.xlu0 %v962, 64
    %v964 = vpop.permute.xlu0 %963
    %v965 = vsel %vm221, %v964, 0
    %967 = vmatprep.subr.mxu0 0.0
    %968 = vmatpush1.msra.mxu0 0.0
    %969 = vmatprep.subr.mxu0 0.0
    %970 = vmatpush1.msra.mxu0 0.0
    %971 = vmatprep.subr.mxu0 0.0
    %972 = vmatpush1.msra.mxu0 0.0
    %973 = vmatprep.subr.mxu0 0.0
    %974 = vmatpush1.msra.mxu0 0.0
    %975 = vmatprep.subr.mxu0 0.0
    %976 = vmatpush1.msra.mxu0 0.0
    %977 = vmatprep.subr.mxu0 0.0
    %978 = vmatpush1.msra.mxu0 0.0
    %979 = vmatprep.subr.mxu0 0.0
    %980 = vmatpush1.msra.mxu0 0.0
    %981 = vmatprep.subr.mxu0 0.0
    %982 = vmatpush1.msra.mxu0 0.0
    %983 = vmatprep.subr.mxu0 0.0
    %984 = vmatpush1.msra.mxu0 0.0
    %985 = vmatprep.subr.mxu0 0.0
    %986 = vmatpush1.msra.mxu0 0.0
    %987 = vmatprep.subr.mxu0 0.0
    %988 = vmatpush1.msra.mxu0 0.0
    %989 = vmatprep.subr.mxu0 0.0
    %990 = vmatpush1.msra.mxu0 0.0
    %991 = vmatprep.subr.mxu0 0.0
    %992 = vmatpush1.msra.mxu0 %v220
    %993 = vmatprep.subr.mxu0 0.0
    %994 = vmatpush1.msra.mxu0 %v219
    %995 = vmatprep.subr.mxu0 0.0
    %996 = vmatpush1.msra.mxu0 %v218
    %997 = vmatprep.subr.mxu0 0.0
    %998 = vmatpush1.msra.mxu0 %v217
    %999 = vmatprep.subr.mxu0 0.0
    %1000 = vmatpush2.msra.mxu0 0.0
    %1001 = vmatprep.subr.mxu0 0.0
    %1002 = vmatpush2.msra.mxu0 0.0
    %1003 = vmatprep.subr.mxu0 0.0
    %1004 = vmatpush2.msra.mxu0 0.0
    %1005 = vmatprep.subr.mxu0 0.0
    %1006 = vmatpush2.msra.mxu0 0.0
    %1007 = vmatprep.subr.mxu0 0.0
    %1008 = vmatpush2.msra.mxu0 0.0
    %1009 = vmatprep.subr.mxu0 0.0
    %1010 = vmatpush2.msra.mxu0 0.0
    %1011 = vmatprep.subr.mxu0 0.0
    %1012 = vmatpush2.msra.mxu0 0.0
    %1013 = vmatprep.subr.mxu0 0.0
    %1014 = vmatpush2.msra.mxu0 0.0
    %1015 = vmatprep.subr.mxu0 0.0
    %1016 = vmatpush2.msra.mxu0 0.0
    %1017 = vmatprep.subr.mxu0 0.0
    %1018 = vmatpush2.msra.mxu0 0.0
    %1019 = vmatprep.subr.mxu0 0.0
    %1020 = vmatpush2.msra.mxu0 0.0
    %1021 = vmatprep.subr.mxu0 0.0
    %1022 = vmatpush2.msra.mxu0 0.0
    %1023 = vmatprep.subr.mxu0 0.0
    %1024 = vmatpush2.msra.mxu0 0.0
    %1025 = vmatprep.subr.mxu0 0.0
    %1026 = vmatpush2.msra.mxu0 0.0
    %1027 = vmatprep.subr.mxu0 0.0
    %1028 = vmatpush2.msra.mxu0 0.0
    %1029 = vmatprep.subr.mxu0 0.0
    %1030 = vmatpush2.msra.mxu0 0.0
    %1031 = vmatprep.mubr.f32.mxu0 0.0
    %1032 = vmatmul.mubr.f32.gmra.mxu0 %v965
    %v1033 = vpop.f32.mrf.mxu0
    %v1034 = vadd.f32 0.0, %v1033
    %v1035 = vpop.f32.mrf.mxu0
    %1036 = vdwg.mxu0
    %v1038 = vrot.slane %v1034, 1
    %v1040 = vadd.f32 %v209, %v1038
    %v1041 = vxor.u32 %v1040, 2147483648
    %v1042 = vmul.f32 %v1041, 1.442695
    %v1043 = vpow.pop %v1042
    %v1044 = vadd.f32 %v1043, 1.0
    %v1045 = vrcp.pop %v1044
    %v1046 = vmul.f32 1.0, %v1045
    %v1047 = vtanh.pop %v1040
    %v1049 = vrot.slane %v954, 7
    %v1051 = vmul.f32 %v1046, %v1049
    %1053 = vrot.lane.b32.xlu0 %v1047, 32
    %v1054 = vpop.permute.xlu0 %1053
    %v1056 = vmul.f32 %v1046, %v1054
    %1058 = vrot.lane.b32.xlu0 %v1056, 32
    %v1059 = vpop.permute.xlu0 %1058
    %v1061 = vadd.f32 %v1051, %v1059
    %v1062 = vtanh.pop %v1061
    %1064 = vrot.lane.b32.xlu0 %v1062, 32
    %v1065 = vpop.permute.xlu0 %1064
    %v1067 = vmul.f32 %v1046, %v1065
    %v1069 = vrot.slane %v1067, 7
    %1070 = vrot.lane.b32.xlu0 %v1069, 64
    %v1071 = vpop.permute.xlu0 %1070
    %v1072 = vsel %vm221, %v1071, 0
    %1074 = vmatprep.subr.mxu0 0.0
    %1075 = vmatpush1.msra.mxu0 0.0
    %1076 = vmatprep.subr.mxu0 0.0
    %1077 = vmatpush1.msra.mxu0 0.0
    %1078 = vmatprep.subr.mxu0 0.0
    %1079 = vmatpush1.msra.mxu0 0.0
    %1080 = vmatprep.subr.mxu0 0.0
    %1081 = vmatpush1.msra.mxu0 0.0
    %1082 = vmatprep.subr.mxu0 0.0
    %1083 = vmatpush1.msra.mxu0 0.0
    %1084 = vmatprep.subr.mxu0 0.0
    %1085 = vmatpush1.msra.mxu0 0.0
    %1086 = vmatprep.subr.mxu0 0.0
    %1087 = vmatpush1.msra.mxu0 0.0
    %1088 = vmatprep.subr.mxu0 0.0
    %1089 = vmatpush1.msra.mxu0 0.0
    %1090 = vmatprep.subr.mxu0 0.0
    %1091 = vmatpush1.msra.mxu0 0.0
    %1092 = vmatprep.subr.mxu0 0.0
    %1093 = vmatpush1.msra.mxu0 0.0
    %1094 = vmatprep.subr.mxu0 0.0
    %1095 = vmatpush1.msra.mxu0 0.0
    %1096 = vmatprep.subr.mxu0 0.0
    %1097 = vmatpush1.msra.mxu0 0.0
    %1098 = vmatprep.subr.mxu0 0.0
    %1099 = vmatpush1.msra.mxu0 %v220
    %1100 = vmatprep.subr.mxu0 0.0
    %1101 = vmatpush1.msra.mxu0 %v219
    %1102 = vmatprep.subr.mxu0 0.0
    %1103 = vmatpush1.msra.mxu0 %v218
    %1104 = vmatprep.subr.mxu0 0.0
    %1105 = vmatpush1.msra.mxu0 %v217
    %1106 = vmatprep.subr.mxu0 0.0
    %1107 = vmatpush2.msra.mxu0 0.0
    %1108 = vmatprep.subr.mxu0 0.0
    %1109 = vmatpush2.msra.mxu0 0.0
    %1110 = vmatprep.subr.mxu0 0.0
    %1111 = vmatpush2.msra.mxu0 0.0
    %1112 = vmatprep.subr.mxu0 0.0
    %1113 = vmatpush2.msra.mxu0 0.0
    %1114 = vmatprep.subr.mxu0 0.0
    %1115 = vmatpush2.msra.mxu0 0.0
    %1116 = vmatprep.subr.mxu0 0.0
    %1117 = vmatpush2.msra.mxu0 0.0
    %1118 = vmatprep.subr.mxu0 0.0
    %1119 = vmatpush2.msra.mxu0 0.0
    %1120 = vmatprep.subr.mxu0 0.0
    %1121 = vmatpush2.msra.mxu0 0.0
    %1122 = vmatprep.subr.mxu0 0.0
    %1123 = vmatpush2.msra.mxu0 0.0
    %1124 = vmatprep.subr.mxu0 0.0
    %1125 = vmatpush2.msra.mxu0 0.0
    %1126 = vmatprep.subr.mxu0 0.0
    %1127 = vmatpush2.msra.mxu0 0.0
    %1128 = vmatprep.subr.mxu0 0.0
    %1129 = vmatpush2.msra.mxu0 0.0
    %1130 = vmatprep.subr.mxu0 0.0
    %1131 = vmatpush2.msra.mxu0 0.0
    %1132 = vmatprep.subr.mxu0 0.0
    %1133 = vmatpush2.msra.mxu0 0.0
    %1134 = vmatprep.subr.mxu0 0.0
    %1135 = vmatpush2.msra.mxu0 0.0
    %1136 = vmatprep.subr.mxu0 0.0
    %1137 = vmatpush2.msra.mxu0 0.0
    %1138 = vmatprep.mubr.f32.mxu0 0.0
    %1139 = vmatmul.mubr.f32.gmra.mxu0 %v1072
    %v1140 = vpop.f32.mrf.mxu0
    %v1141 = vadd.f32 0.0, %v1140
    %v1142 = vpop.f32.mrf.mxu0
    %1143 = vdwg.mxu0
    %v1144 = vadd.f32 %v214, %v1141
    %v1145 = vxor.u32 %v1144, 2147483648
    %v1146 = vmul.f32 %v1145, 1.442695
    %v1147 = vpow.pop %v1146
    %v1148 = vadd.f32 %v1147, 1.0
    %v1149 = vrcp.pop %v1148
    %v1150 = vmul.f32 1.0, %v1149
    %v1151 = vtanh.pop %v1144
    %v1153 = vrot.slane %v1061, 7
    %v1155 = vmul.f32 %v1150, %v1153
    %1157 = vrot.lane.b32.xlu0 %v1151, 32
    %v1158 = vpop.permute.xlu0 %1157
    %v1160 = vmul.f32 %v1150, %v1158
    %1162 = vrot.lane.b32.xlu0 %v1160, 32
    %v1163 = vpop.permute.xlu0 %1162
    %v1165 = vadd.f32 %v1155, %v1163
    %v1166 = vtanh.pop %v1165
    %1168 = vrot.lane.b32.xlu0 %v1166, 32
    %v1169 = vpop.permute.xlu0 %1168
    %v1171 = vmul.f32 %v1150, %v1169
    %1173 = vrot.lane.b32.xlu0 %v1171, 64
    %v1174 = vpop.permute.xlu0 %1173
    %v1175 = vsel %vm221, %v1174, 0
    %1177 = vmatprep.subr.mxu0 0.0
    %1178 = vmatpush1.msra.mxu0 0.0
    %1179 = vmatprep.subr.mxu0 0.0
    %1180 = vmatpush1.msra.mxu0 0.0
    %1181 = vmatprep.subr.mxu0 0.0
    %1182 = vmatpush1.msra.mxu0 0.0
    %1183 = vmatprep.subr.mxu0 0.0
    %1184 = vmatpush1.msra.mxu0 0.0
    %1185 = vmatprep.subr.mxu0 0.0
    %1186 = vmatpush1.msra.mxu0 0.0
    %1187 = vmatprep.subr.mxu0 0.0
    %1188 = vmatpush1.msra.mxu0 0.0
    %1189 = vmatprep.subr.mxu0 0.0
    %1190 = vmatpush1.msra.mxu0 0.0
    %1191 = vmatprep.subr.mxu0 0.0
    %1192 = vmatpush1.msra.mxu0 0.0
    %1193 = vmatprep.subr.mxu0 0.0
    %1194 = vmatpush1.msra.mxu0 0.0
    %1195 = vmatprep.subr.mxu0 0.0
    %1196 = vmatpush1.msra.mxu0 0.0
    %1197 = vmatprep.subr.mxu0 0.0
    %1198 = vmatpush1.msra.mxu0 0.0
    %1199 = vmatprep.subr.mxu0 0.0
    %1200 = vmatpush1.msra.mxu0 0.0
    %1201 = vmatprep.subr.mxu0 0.0
    %1202 = vmatpush1.msra.mxu0 %v220
    %1203 = vmatprep.subr.mxu0 0.0
    %1204 = vmatpush1.msra.mxu0 %v219
    %1205 = vmatprep.subr.mxu0 0.0
    %1206 = vmatpush1.msra.mxu0 %v218
    %1207 = vmatprep.subr.mxu0 0.0
    %1208 = vmatpush1.msra.mxu0 %v217
    %1209 = vmatprep.subr.mxu0 0.0
    %1210 = vmatpush2.msra.mxu0 0.0
    %1211 = vmatprep.subr.mxu0 0.0
    %1212 = vmatpush2.msra.mxu0 0.0
    %1213 = vmatprep.subr.mxu0 0.0
    %1214 = vmatpush2.msra.mxu0 0.0
    %1215 = vmatprep.subr.mxu0 0.0
    %1216 = vmatpush2.msra.mxu0 0.0
    %1217 = vmatprep.subr.mxu0 0.0
    %1218 = vmatpush2.msra.mxu0 0.0
    %1219 = vmatprep.subr.mxu0 0.0
    %1220 = vmatpush2.msra.mxu0 0.0
    %1221 = vmatprep.subr.mxu0 0.0
    %1222 = vmatpush2.msra.mxu0 0.0
    %1223 = vmatprep.subr.mxu0 0.0
    %1224 = vmatpush2.msra.mxu0 0.0
    %1225 = vmatprep.subr.mxu0 0.0
    %1226 = vmatpush2.msra.mxu0 0.0
    %1227 = vmatprep.subr.mxu0 0.0
    %1228 = vmatpush2.msra.mxu0 0.0
    %1229 = vmatprep.subr.mxu0 0.0
    %1230 = vmatpush2.msra.mxu0 0.0
    %1231 = vmatprep.subr.mxu0 0.0
    %1232 = vmatpush2.msra.mxu0 0.0
    %1233 = vmatprep.subr.mxu0 0.0
    %1234 = vmatpush2.msra.mxu0 0.0
    %1235 = vmatprep.subr.mxu0 0.0
    %1236 = vmatpush2.msra.mxu0 0.0
    %1237 = vmatprep.subr.mxu0 0.0
    %1238 = vmatpush2.msra.mxu0 0.0
    %1239 = vmatprep.subr.mxu0 0.0
    %1240 = vmatpush2.msra.mxu0 0.0
    %1241 = vmatprep.mubr.f32.mxu0 0.0
    %1242 = vmatmul.mubr.f32.gmra.mxu0 %v1175
    %v1243 = vpop.f32.mrf.mxu0
    %v1244 = vadd.f32 0.0, %v1243
    %v1245 = vpop.f32.mrf.mxu0
    %1246 = vdwg.mxu0
    %v1248 = vrot.slane %v1244, 7
    %v1250 = vadd.f32 %v214, %v1248
    %v1251 = vxor.u32 %v1250, 2147483648
    %v1252 = vmul.f32 %v1251, 1.442695
    %v1253 = vpow.pop %v1252
    %v1254 = vadd.f32 %v1253, 1.0
    %v1255 = vrcp.pop %v1254
    %v1256 = vmul.f32 1.0, %v1255
    %v1257 = vtanh.pop %v1250
    %v1259 = vrot.slane %v1165, 7
    %v1261 = vmul.f32 %v1256, %v1259
    %1263 = vrot.lane.b32.xlu0 %v1257, 32
    %v1264 = vpop.permute.xlu0 %1263
    %v1266 = vmul.f32 %v1256, %v1264
    %1268 = vrot.lane.b32.xlu0 %v1266, 32
    %v1269 = vpop.permute.xlu0 %1268
    %v1271 = vadd.f32 %v1261, %v1269
    %v1272 = vtanh.pop %v1271
    %1274 = vrot.lane.b32.xlu0 %v1272, 32
    %v1275 = vpop.permute.xlu0 %1274
    %v1277 = vmul.f32 %v1256, %v1275
    %v1279 = vrot.slane %v1277, 1
    %1280 = vrot.lane.b32.xlu0 %v1279, 64
    %v1281 = vpop.permute.xlu0 %1280
    %v1282 = vsel %vm221, %v1281, 0
    %1284 = vmatprep.subr.mxu0 0.0
    %1285 = vmatpush1.msra.mxu0 0.0
    %1286 = vmatprep.subr.mxu0 0.0
    %1287 = vmatpush1.msra.mxu0 0.0
    %1288 = vmatprep.subr.mxu0 0.0
    %1289 = vmatpush1.msra.mxu0 0.0
    %1290 = vmatprep.subr.mxu0 0.0
    %1291 = vmatpush1.msra.mxu0 0.0
    %1292 = vmatprep.subr.mxu0 0.0
    %1293 = vmatpush1.msra.mxu0 0.0
    %1294 = vmatprep.subr.mxu0 0.0
    %1295 = vmatpush1.msra.mxu0 0.0
    %1296 = vmatprep.subr.mxu0 0.0
    %1297 = vmatpush1.msra.mxu0 0.0
    %1298 = vmatprep.subr.mxu0 0.0
    %1299 = vmatpush1.msra.mxu0 0.0
    %1300 = vmatprep.subr.mxu0 0.0
    %1301 = vmatpush1.msra.mxu0 0.0
    %1302 = vmatprep.subr.mxu0 0.0
    %1303 = vmatpush1.msra.mxu0 0.0
    %1304 = vmatprep.subr.mxu0 0.0
    %1305 = vmatpush1.msra.mxu0 0.0
    %1306 = vmatprep.subr.mxu0 0.0
    %1307 = vmatpush1.msra.mxu0 0.0
    %1308 = vmatprep.subr.mxu0 0.0
    %1309 = vmatpush1.msra.mxu0 %v220
    %1310 = vmatprep.subr.mxu0 0.0
    %1311 = vmatpush1.msra.mxu0 %v219
    %1312 = vmatprep.subr.mxu0 0.0
    %1313 = vmatpush1.msra.mxu0 %v218
    %1314 = vmatprep.subr.mxu0 0.0
    %1315 = vmatpush1.msra.mxu0 %v217
    %1316 = vmatprep.subr.mxu0 0.0
    %1317 = vmatpush2.msra.mxu0 0.0
    %1318 = vmatprep.subr.mxu0 0.0
    %1319 = vmatpush2.msra.mxu0 0.0
    %1320 = vmatprep.subr.mxu0 0.0
    %1321 = vmatpush2.msra.mxu0 0.0
    %1322 = vmatprep.subr.mxu0 0.0
    %1323 = vmatpush2.msra.mxu0 0.0
    %1324 = vmatprep.subr.mxu0 0.0
    %1325 = vmatpush2.msra.mxu0 0.0
    %1326 = vmatprep.subr.mxu0 0.0
    %1327 = vmatpush2.msra.mxu0 0.0
    %1328 = vmatprep.subr.mxu0 0.0
    %1329 = vmatpush2.msra.mxu0 0.0
    %1330 = vmatprep.subr.mxu0 0.0
    %1331 = vmatpush2.msra.mxu0 0.0
    %1332 = vmatprep.subr.mxu0 0.0
    %1333 = vmatpush2.msra.mxu0 0.0
    %1334 = vmatprep.subr.mxu0 0.0
    %1335 = vmatpush2.msra.mxu0 0.0
    %1336 = vmatprep.subr.mxu0 0.0
    %1337 = vmatpush2.msra.mxu0 0.0
    %1338 = vmatprep.subr.mxu0 0.0
    %1339 = vmatpush2.msra.mxu0 0.0
    %1340 = vmatprep.subr.mxu0 0.0
    %1341 = vmatpush2.msra.mxu0 0.0
    %1342 = vmatprep.subr.mxu0 0.0
    %1343 = vmatpush2.msra.mxu0 0.0
    %1344 = vmatprep.subr.mxu0 0.0
    %1345 = vmatpush2.msra.mxu0 0.0
    %1346 = vmatprep.subr.mxu0 0.0
    %1347 = vmatpush2.msra.mxu0 0.0
    %1348 = vmatprep.mubr.f32.mxu0 0.0
    %1349 = vmatmul.mubr.f32.gmra.mxu0 %v1282
    %v1350 = vpop.f32.mrf.mxu0
    %v1351 = vadd.f32 0.0, %v1350
    %v1352 = vpop.f32.mrf.mxu0
    %1353 = vdwg.mxu0
    %v1355 = vrot.slane %v1351, 6
    %v1357 = vadd.f32 %v214, %v1355
    %v1358 = vxor.u32 %v1357, 2147483648
    %v1359 = vmul.f32 %v1358, 1.442695
    %v1360 = vpow.pop %v1359
    %v1361 = vadd.f32 %v1360, 1.0
    %v1362 = vrcp.pop %v1361
    %v1363 = vmul.f32 1.0, %v1362
    %v1364 = vtanh.pop %v1357
    %v1366 = vrot.slane %v1271, 7
    %v1368 = vmul.f32 %v1363, %v1366
    %1370 = vrot.lane.b32.xlu0 %v1364, 32
    %v1371 = vpop.permute.xlu0 %1370
    %v1373 = vmul.f32 %v1363, %v1371
    %1375 = vrot.lane.b32.xlu0 %v1373, 32
    %v1376 = vpop.permute.xlu0 %1375
    %v1378 = vadd.f32 %v1368, %v1376
    %v1379 = vtanh.pop %v1378
    %1381 = vrot.lane.b32.xlu0 %v1379, 32
    %v1382 = vpop.permute.xlu0 %1381
    %v1384 = vmul.f32 %v1363, %v1382
    %v1386 = vrot.slane %v1384, 2
    %1387 = vrot.lane.b32.xlu0 %v1386, 64
    %v1388 = vpop.permute.xlu0 %1387
    %v1389 = vsel %vm221, %v1388, 0
    %1391 = vmatprep.subr.mxu0 0.0
    %1392 = vmatpush1.msra.mxu0 0.0
    %1393 = vmatprep.subr.mxu0 0.0
    %1394 = vmatpush1.msra.mxu0 0.0
    %1395 = vmatprep.subr.mxu0 0.0
    %1396 = vmatpush1.msra.mxu0 0.0
    %1397 = vmatprep.subr.mxu0 0.0
    %1398 = vmatpush1.msra.mxu0 0.0
    %1399 = vmatprep.subr.mxu0 0.0
    %1400 = vmatpush1.msra.mxu0 0.0
    %1401 = vmatprep.subr.mxu0 0.0
    %1402 = vmatpush1.msra.mxu0 0.0
    %1403 = vmatprep.subr.mxu0 0.0
    %1404 = vmatpush1.msra.mxu0 0.0
    %1405 = vmatprep.subr.mxu0 0.0
    %1406 = vmatpush1.msra.mxu0 0.0
    %1407 = vmatprep.subr.mxu0 0.0
    %1408 = vmatpush1.msra.mxu0 0.0
    %1409 = vmatprep.subr.mxu0 0.0
    %1410 = vmatpush1.msra.mxu0 0.0
    %1411 = vmatprep.subr.mxu0 0.0
    %1412 = vmatpush1.msra.mxu0 0.0
    %1413 = vmatprep.subr.mxu0 0.0
    %1414 = vmatpush1.msra.mxu0 0.0
    %1415 = vmatprep.subr.mxu0 0.0
    %1416 = vmatpush1.msra.mxu0 %v220
    %1417 = vmatprep.subr.mxu0 0.0
    %1418 = vmatpush1.msra.mxu0 %v219
    %1419 = vmatprep.subr.mxu0 0.0
    %1420 = vmatpush1.msra.mxu0 %v218
    %1421 = vmatprep.subr.mxu0 0.0
    %1422 = vmatpush1.msra.mxu0 %v217
    %1423 = vmatprep.subr.mxu0 0.0
    %1424 = vmatpush2.msra.mxu0 0.0
    %1425 = vmatprep.subr.mxu0 0.0
    %1426 = vmatpush2.msra.mxu0 0.0
    %1427 = vmatprep.subr.mxu0 0.0
    %1428 = vmatpush2.msra.mxu0 0.0
    %1429 = vmatprep.subr.mxu0 0.0
    %1430 = vmatpush2.msra.mxu0 0.0
    %1431 = vmatprep.subr.mxu0 0.0
    %1432 = vmatpush2.msra.mxu0 0.0
    %1433 = vmatprep.subr.mxu0 0.0
    %1434 = vmatpush2.msra.mxu0 0.0
    %1435 = vmatprep.subr.mxu0 0.0
    %1436 = vmatpush2.msra.mxu0 0.0
    %1437 = vmatprep.subr.mxu0 0.0
    %1438 = vmatpush2.msra.mxu0 0.0
    %1439 = vmatprep.subr.mxu0 0.0
    %1440 = vmatpush2.msra.mxu0 0.0
    %1441 = vmatprep.subr.mxu0 0.0
    %1442 = vmatpush2.msra.mxu0 0.0
    %1443 = vmatprep.subr.mxu0 0.0
    %1444 = vmatpush2.msra.mxu0 0.0
    %1445 = vmatprep.subr.mxu0 0.0
    %1446 = vmatpush2.msra.mxu0 0.0
    %1447 = vmatprep.subr.mxu0 0.0
    %1448 = vmatpush2.msra.mxu0 0.0
    %1449 = vmatprep.subr.mxu0 0.0
    %1450 = vmatpush2.msra.mxu0 0.0
    %1451 = vmatprep.subr.mxu0 0.0
    %1452 = vmatpush2.msra.mxu0 0.0
    %1453 = vmatprep.subr.mxu0 0.0
    %1454 = vmatpush2.msra.mxu0 0.0
    %1455 = vmatprep.mubr.f32.mxu0 0.0
    %1456 = vmatmul.mubr.f32.gmra.mxu0 %v1389
    %v1457 = vpop.f32.mrf.mxu0
    %v1458 = vadd.f32 0.0, %v1457
    %v1459 = vpop.f32.mrf.mxu0
    %1460 = vdwg.mxu0
    %v1462 = vrot.slane %v1458, 5
    %v1464 = vadd.f32 %v214, %v1462
    %v1465 = vxor.u32 %v1464, 2147483648
    %v1466 = vmul.f32 %v1465, 1.442695
    %v1467 = vpow.pop %v1466
    %v1468 = vadd.f32 %v1467, 1.0
    %v1469 = vrcp.pop %v1468
    %v1470 = vmul.f32 1.0, %v1469
    %v1471 = vtanh.pop %v1464
    %v1473 = vrot.slane %v1378, 7
    %v1475 = vmul.f32 %v1470, %v1473
    %1477 = vrot.lane.b32.xlu0 %v1471, 32
    %v1478 = vpop.permute.xlu0 %1477
    %v1480 = vmul.f32 %v1470, %v1478
    %1482 = vrot.lane.b32.xlu0 %v1480, 32
    %v1483 = vpop.permute.xlu0 %1482
    %v1485 = vadd.f32 %v1475, %v1483
    %v1486 = vtanh.pop %v1485
    %1488 = vrot.lane.b32.xlu0 %v1486, 32
    %v1489 = vpop.permute.xlu0 %1488
    %v1491 = vmul.f32 %v1470, %v1489
    %vm1492 = vcmask 1040384
    %v1493 = vsel %vm1492, %v319, %v425
    %vm1494 = vcmask 1041408
    %v1495 = vsel %vm1494, %v1493, %v532
    %vm1496 = vcmask 1042432
    %v1497 = vsel %vm1496, %v1495, %v639
    %v1498 = vsel %vm138, %v1497, %v746
    %vm1499 = vcmask 1044480
    %v1500 = vsel %vm1499, %v1498, %v853
    %vm1501 = vcmask 1045504
    %v1502 = vsel %vm1501, %v1500, %v960
    %vm1503 = vcmask 1046528
    %v1504 = vsel %vm1503, %v1502, %v1067
    %v1505 = vsel %vm1492, %v1171, %v1277
    %v1506 = vsel %vm1494, %v1505, %v1384
    %v1507 = vsel %vm1496, %v1506, %v1491
    %v1508 = vsel %vm138, %v1507, 0.0
    %v1509 = vld [vmem:[%s8] sm:$0xff]
    %v1510 = vld [vmem:[%s8 + $0x8] sm:$0xff]
    %v1511 = vld [vmem:[%s8 + $0x10] sm:$0xff]
    %v1512 = vld [vmem:[%s8 + $0x18] sm:$0xff]
    %1515 = vrot.lane.b32.xlu0 %v1504, 64
    %v1516 = vpop.permute.xlu0 %1515
    %1517 = vrot.lane.b32.xlu0 %v1508, 64
    %v1518 = vpop.permute.xlu0 %1517
    %v1519 = vsel %vm221, %v1516, 0
    %v1521 = vsel %vm221, %v1518, 0
    %1523 = vmatprep.subr.mxu0 0.0
    %1524 = vmatpush1.msra.mxu0 0.0
    %1525 = vmatprep.subr.mxu0 0.0
    %1526 = vmatpush1.msra.mxu0 0.0
    %1527 = vmatprep.subr.mxu0 0.0
    %1528 = vmatpush1.msra.mxu0 0.0
    %1529 = vmatprep.subr.mxu0 0.0
    %1530 = vmatpush1.msra.mxu0 0.0
    %1531 = vmatprep.subr.mxu0 0.0
    %1532 = vmatpush1.msra.mxu0 0.0
    %1533 = vmatprep.subr.mxu0 0.0
    %1534 = vmatpush1.msra.mxu0 0.0
    %1535 = vmatprep.subr.mxu0 0.0
    %1536 = vmatpush1.msra.mxu0 0.0
    %1537 = vmatprep.subr.mxu0 0.0
    %1538 = vmatpush1.msra.mxu0 0.0
    %1539 = vmatprep.subr.mxu0 0.0
    %1540 = vmatpush1.msra.mxu0 0.0
    %1541 = vmatprep.subr.mxu0 0.0
    %1542 = vmatpush1.msra.mxu0 0.0
    %1543 = vmatprep.subr.mxu0 0.0
    %1544 = vmatpush1.msra.mxu0 0.0
    %1545 = vmatprep.subr.mxu0 0.0
    %1546 = vmatpush1.msra.mxu0 0.0
    %1547 = vmatprep.subr.mxu0 0.0
    %1548 = vmatpush1.msra.mxu0 %v1512
    %1549 = vmatprep.subr.mxu0 0.0
    %1550 = vmatpush1.msra.mxu0 %v1511
    %1551 = vmatprep.subr.mxu0 0.0
    %1552 = vmatpush1.msra.mxu0 %v1510
    %1553 = vmatprep.subr.mxu0 0.0
    %1554 = vmatpush1.msra.mxu0 %v1509
    %1555 = vmatprep.subr.mxu0 0.0
    %1556 = vmatpush2.msra.mxu0 0.0
    %1557 = vmatprep.subr.mxu0 0.0
    %1558 = vmatpush2.msra.mxu0 0.0
    %1559 = vmatprep.subr.mxu0 0.0
    %1560 = vmatpush2.msra.mxu0 0.0
    %1561 = vmatprep.subr.mxu0 0.0
    %1562 = vmatpush2.msra.mxu0 0.0
    %1563 = vmatprep.subr.mxu0 0.0
    %1564 = vmatpush2.msra.mxu0 0.0
    %1565 = vmatprep.subr.mxu0 0.0
    %1566 = vmatpush2.msra.mxu0 0.0
    %1567 = vmatprep.subr.mxu0 0.0
    %1568 = vmatpush2.msra.mxu0 0.0
    %1569 = vmatprep.subr.mxu0 0.0
    %1570 = vmatpush2.msra.mxu0 0.0
    %1571 = vmatprep.subr.mxu0 0.0
    %1572 = vmatpush2.msra.mxu0 0.0
    %1573 = vmatprep.subr.mxu0 0.0
    %1574 = vmatpush2.msra.mxu0 0.0
    %1575 = vmatprep.subr.mxu0 0.0
    %1576 = vmatpush2.msra.mxu0 0.0
    %1577 = vmatprep.subr.mxu0 0.0
    %1578 = vmatpush2.msra.mxu0 0.0
    %1579 = vmatprep.subr.mxu0 0.0
    %1580 = vmatpush2.msra.mxu0 0.0
    %1581 = vmatprep.subr.mxu0 0.0
    %1582 = vmatpush2.msra.mxu0 0.0
    %1583 = vmatprep.subr.mxu0 0.0
    %1584 = vmatpush2.msra.mxu0 0.0
    %1585 = vmatprep.subr.mxu0 0.0
    %1586 = vmatpush2.msra.mxu0 0.0
    %1587 = vmatprep.mubr.f32.mxu0 0.0
    %1588 = vmatmul.mubr.f32.gmra.mxu0 %v1519
    %v1589 = vpop.f32.mrf.mxu0
    %v1590 = vadd.f32 0.0, %v1589
    %v1591 = vpop.f32.mrf.mxu0
    %1592 = vmatprep.mubr.f32.mxu0 0.0
    %1593 = vmatmul.mubr.f32.gmra.mxu0 %v1521
    %v1594 = vpop.f32.mrf.mxu0
    %v1595 = vadd.f32 0.0, %v1594
    %v1596 = vpop.f32.mrf.mxu0
    %1597 = vdwg.mxu0
    %v1598 = vld [vmem:[%s1] sm:$0x7f]
    %v1599 = vld [vmem:[%s5] sm:$0xff]
    %v1600 = vld [vmem:[#allocation5] sm:$0x1]
    %v1602 = vlaneseq
    %v1603 = vshrl.u32 %v1602, 7
    %v1604 = vsub.s32 0, %v1603
    %v1605 = vrot.slane %v1600, %v1604
    %vm1607 = vcmask 64512
    %v1609 = vsel %vm1607, %v1598, 0
    %1611 = vmatprep.subr.mxu0 0.0
    %1612 = vmatpush1.msra.mxu0 0.0
    %1613 = vmatprep.subr.mxu0 0.0
    %1614 = vmatpush1.msra.mxu0 0.0
    %1615 = vmatprep.subr.mxu0 0.0
    %1616 = vmatpush1.msra.mxu0 0.0
    %1617 = vmatprep.subr.mxu0 0.0
    %1618 = vmatpush1.msra.mxu0 0.0
    %1619 = vmatprep.subr.mxu0 0.0
    %1620 = vmatpush1.msra.mxu0 0.0
    %1621 = vmatprep.subr.mxu0 0.0
    %1622 = vmatpush1.msra.mxu0 0.0
    %1623 = vmatprep.subr.mxu0 0.0
    %1624 = vmatpush1.msra.mxu0 0.0
    %1625 = vmatprep.subr.mxu0 0.0
    %1626 = vmatpush1.msra.mxu0 0.0
    %1627 = vmatprep.subr.mxu0 0.0
    %1628 = vmatpush1.msra.mxu0 0.0
    %1629 = vmatprep.subr.mxu0 0.0
    %1630 = vmatpush1.msra.mxu0 0.0
    %1631 = vmatprep.subr.mxu0 0.0
    %1632 = vmatpush1.msra.mxu0 0.0
    %1633 = vmatprep.subr.mxu0 0.0
    %1634 = vmatpush1.msra.mxu0 0.0
    %1635 = vmatprep.subr.mxu0 0.0
    %1636 = vmatpush1.msra.mxu0 0.0
    %1637 = vmatprep.subr.mxu0 0.0
    %1638 = vmatpush1.msra.mxu0 0.0
    %1639 = vmatprep.subr.mxu0 0.0
    %1640 = vmatpush1.msra.mxu0 0.0
    %1641 = vmatprep.subr.mxu0 0.0
    %1642 = vmatpush1.msra.mxu0 %v1599
    %1643 = vmatprep.subr.mxu0 0.0
    %1644 = vmatpush2.msra.mxu0 0.0
    %1645 = vmatprep.subr.mxu0 0.0
    %1646 = vmatpush2.msra.mxu0 0.0
    %1647 = vmatprep.subr.mxu0 0.0
    %1648 = vmatpush2.msra.mxu0 0.0
    %1649 = vmatprep.subr.mxu0 0.0
    %1650 = vmatpush2.msra.mxu0 0.0
    %1651 = vmatprep.subr.mxu0 0.0
    %1652 = vmatpush2.msra.mxu0 0.0
    %1653 = vmatprep.subr.mxu0 0.0
    %1654 = vmatpush2.msra.mxu0 0.0
    %1655 = vmatprep.subr.mxu0 0.0
    %1656 = vmatpush2.msra.mxu0 0.0
    %1657 = vmatprep.subr.mxu0 0.0
    %1658 = vmatpush2.msra.mxu0 0.0
    %1659 = vmatprep.subr.mxu0 0.0
    %1660 = vmatpush2.msra.mxu0 0.0
    %1661 = vmatprep.subr.mxu0 0.0
    %1662 = vmatpush2.msra.mxu0 0.0
    %1663 = vmatprep.subr.mxu0 0.0
    %1664 = vmatpush2.msra.mxu0 0.0
    %1665 = vmatprep.subr.mxu0 0.0
    %1666 = vmatpush2.msra.mxu0 0.0
    %1667 = vmatprep.subr.mxu0 0.0
    %1668 = vmatpush2.msra.mxu0 0.0
    %1669 = vmatprep.subr.mxu0 0.0
    %1670 = vmatpush2.msra.mxu0 0.0
    %1671 = vmatprep.subr.mxu0 0.0
    %1672 = vmatpush2.msra.mxu0 0.0
    %1673 = vmatprep.subr.mxu0 0.0
    %1674 = vmatpush2.msra.mxu0 0.0
    %1675 = vmatprep.mubr.f32.mxu0 0.0
    %1676 = vmatmul.mubr.f32.gmra.mxu0 %v1609
    %v1677 = vpop.f32.mrf.mxu0
    %v1678 = vadd.f32 %v1605, %v1677
    %v1679 = vpop.f32.mrf.mxu0
    %1680 = vdwg.mxu0
    %v1681 = vld [vmem:[#allocation7] sm:$0xff]
    %v1682 = vld [vmem:[#allocation8] sm:$0x1]
    %v1684 = vlaneseq
    %v1685 = vshrl.u32 %v1684, 7
    %v1686 = vsub.s32 0, %v1685
    %v1687 = vrot.slane %v1682, %v1686
    %1689 = vmatprep.subr.mxu0 0.0
    %1690 = vmatpush1.msra.mxu0 0.0
    %1691 = vmatprep.subr.mxu0 0.0
    %1692 = vmatpush1.msra.mxu0 0.0
    %1693 = vmatprep.subr.mxu0 0.0
    %1694 = vmatpush1.msra.mxu0 0.0
    %1695 = vmatprep.subr.mxu0 0.0
    %1696 = vmatpush1.msra.mxu0 0.0
    %1697 = vmatprep.subr.mxu0 0.0
    %1698 = vmatpush1.msra.mxu0 0.0
    %1699 = vmatprep.subr.mxu0 0.0
    %1700 = vmatpush1.msra.mxu0 0.0
    %1701 = vmatprep.subr.mxu0 0.0
    %1702 = vmatpush1.msra.mxu0 0.0
    %1703 = vmatprep.subr.mxu0 0.0
    %1704 = vmatpush1.msra.mxu0 0.0
    %1705 = vmatprep.subr.mxu0 0.0
    %1706 = vmatpush1.msra.mxu0 0.0
    %1707 = vmatprep.subr.mxu0 0.0
    %1708 = vmatpush1.msra.mxu0 0.0
    %1709 = vmatprep.subr.mxu0 0.0
    %1710 = vmatpush1.msra.mxu0 0.0
    %1711 = vmatprep.subr.mxu0 0.0
    %1712 = vmatpush1.msra.mxu0 0.0
    %1713 = vmatprep.subr.mxu0 0.0
    %1714 = vmatpush1.msra.mxu0 0.0
    %1715 = vmatprep.subr.mxu0 0.0
    %1716 = vmatpush1.msra.mxu0 0.0
    %1717 = vmatprep.subr.mxu0 0.0
    %1718 = vmatpush1.msra.mxu0 0.0
    %1719 = vmatprep.subr.mxu0 0.0
    %1720 = vmatpush1.msra.mxu0 %v1681
    %1721 = vmatprep.subr.mxu0 0.0
    %1722 = vmatpush2.msra.mxu0 0.0
    %1723 = vmatprep.subr.mxu0 0.0
    %1724 = vmatpush2.msra.mxu0 0.0
    %1725 = vmatprep.subr.mxu0 0.0
    %1726 = vmatpush2.msra.mxu0 0.0
    %1727 = vmatprep.subr.mxu0 0.0
    %1728 = vmatpush2.msra.mxu0 0.0
    %1729 = vmatprep.subr.mxu0 0.0
    %1730 = vmatpush2.msra.mxu0 0.0
    %1731 = vmatprep.subr.mxu0 0.0
    %1732 = vmatpush2.msra.mxu0 0.0
    %1733 = vmatprep.subr.mxu0 0.0
    %1734 = vmatpush2.msra.mxu0 0.0
    %1735 = vmatprep.subr.mxu0 0.0
    %1736 = vmatpush2.msra.mxu0 0.0
    %1737 = vmatprep.subr.mxu0 0.0
    %1738 = vmatpush2.msra.mxu0 0.0
    %1739 = vmatprep.subr.mxu0 0.0
    %1740 = vmatpush2.msra.mxu0 0.0
    %1741 = vmatprep.subr.mxu0 0.0
    %1742 = vmatpush2.msra.mxu0 0.0
    %1743 = vmatprep.subr.mxu0 0.0
    %1744 = vmatpush2.msra.mxu0 0.0
    %1745 = vmatprep.subr.mxu0 0.0
    %1746 = vmatpush2.msra.mxu0 0.0
    %1747 = vmatprep.subr.mxu0 0.0
    %1748 = vmatpush2.msra.mxu0 0.0
    %1749 = vmatprep.subr.mxu0 0.0
    %1750 = vmatpush2.msra.mxu0 0.0
    %1751 = vmatprep.subr.mxu0 0.0
    %1752 = vmatpush2.msra.mxu0 0.0
    %1753 = vmatprep.mubr.f32.mxu0 0.0
    %1754 = vmatmul.mubr.f32.gmra.mxu0 %v1609
    %v1755 = vpop.f32.mrf.mxu0
    %v1756 = vadd.f32 %v1687, %v1755
    %v1757 = vpop.f32.mrf.mxu0
    %1758 = vdwg.mxu0
    %v1759 = vld [vmem:[#allocation10] sm:$0xff]
    %v1760 = vld [vmem:[#allocation11] sm:$0x1]
    %v1761 = vld [vmem:[%s12] sm:$0xff]
    %v1762 = vld [vmem:[%s12 + $0x8] sm:$0xff]
    %v1763 = vld [vmem:[%s12 + $0x10] sm:$0xff]
    %v1764 = vld [vmem:[%s12 + $0x18] sm:$0xff]
    %v1765 = vld [vmem:[%s12 + $0x20] sm:$0xff]
    %v1766 = vld [vmem:[%s12 + $0x28] sm:$0xff]
    %v1767 = vld [vmem:[%s12 + $0x30] sm:$0xff]
    %v1768 = vld [vmem:[%s12 + $0x38] sm:$0xff]
    %v1770 = vrot.slane %v1491, 3
    %1771 = vrot.lane.b32.xlu0 %v1770, 64
    %v1772 = vpop.permute.xlu0 %1771
    %v1773 = vsel %vm221, %v1772, 0
    %1775 = vmatprep.subr.mxu0 0.0
    %1776 = vmatpush1.msra.mxu0 0.0
    %1777 = vmatprep.subr.mxu0 0.0
    %1778 = vmatpush1.msra.mxu0 0.0
    %1779 = vmatprep.subr.mxu0 0.0
    %1780 = vmatpush1.msra.mxu0 0.0
    %1781 = vmatprep.subr.mxu0 0.0
    %1782 = vmatpush1.msra.mxu0 0.0
    %1783 = vmatprep.subr.mxu0 0.0
    %1784 = vmatpush1.msra.mxu0 0.0
    %1785 = vmatprep.subr.mxu0 0.0
    %1786 = vmatpush1.msra.mxu0 0.0
    %1787 = vmatprep.subr.mxu0 0.0
    %1788 = vmatpush1.msra.mxu0 0.0
    %1789 = vmatprep.subr.mxu0 0.0
    %1790 = vmatpush1.msra.mxu0 0.0
    %1791 = vmatprep.subr.mxu0 0.0
    %1792 = vmatpush1.msra.mxu0 0.0
    %1793 = vmatprep.subr.mxu0 0.0
    %1794 = vmatpush1.msra.mxu0 0.0
    %1795 = vmatprep.subr.mxu0 0.0
    %1796 = vmatpush1.msra.mxu0 0.0
    %1797 = vmatprep.subr.mxu0 0.0
    %1798 = vmatpush1.msra.mxu0 0.0
    %1799 = vmatprep.subr.mxu0 %v1768
    %1800 = vmatpush1.msra.mxu0 %v1767
    %1801 = vmatprep.subr.mxu0 %v1766
    %1802 = vmatpush1.msra.mxu0 %v1765
    %1803 = vmatprep.subr.mxu0 %v1764
    %1804 = vmatpush1.msra.mxu0 %v1763
    %1805 = vmatprep.subr.mxu0 %v1762
    %1806 = vmatpush1.msra.mxu0 %v1761
    %1807 = vmatprep.subr.mxu0 0.0
    %1808 = vmatpush2.msra.mxu0 0.0
    %1809 = vmatprep.subr.mxu0 0.0
    %1810 = vmatpush2.msra.mxu0 0.0
    %1811 = vmatprep.subr.mxu0 0.0
    %1812 = vmatpush2.msra.mxu0 0.0
    %1813 = vmatprep.subr.mxu0 0.0
    %1814 = vmatpush2.msra.mxu0 0.0
    %1815 = vmatprep.subr.mxu0 0.0
    %1816 = vmatpush2.msra.mxu0 0.0
    %1817 = vmatprep.subr.mxu0 0.0
    %1818 = vmatpush2.msra.mxu0 0.0
    %1819 = vmatprep.subr.mxu0 0.0
    %1820 = vmatpush2.msra.mxu0 0.0
    %1821 = vmatprep.subr.mxu0 0.0
    %1822 = vmatpush2.msra.mxu0 0.0
    %1823 = vmatprep.subr.mxu0 0.0
    %1824 = vmatpush2.msra.mxu0 0.0
    %1825 = vmatprep.subr.mxu0 0.0
    %1826 = vmatpush2.msra.mxu0 0.0
    %1827 = vmatprep.subr.mxu0 0.0
    %1828 = vmatpush2.msra.mxu0 0.0
    %1829 = vmatprep.subr.mxu0 0.0
    %1830 = vmatpush2.msra.mxu0 0.0
    %1831 = vmatprep.subr.mxu0 0.0
    %1832 = vmatpush2.msra.mxu0 0.0
    %1833 = vmatprep.subr.mxu0 0.0
    %1834 = vmatpush2.msra.mxu0 0.0
    %1835 = vmatprep.subr.mxu0 0.0
    %1836 = vmatpush2.msra.mxu0 0.0
    %1837 = vmatprep.subr.mxu0 0.0
    %1838 = vmatpush2.msra.mxu0 0.0
    %1839 = vmatprep.mubr.f32.mxu0 0.0
    %1840 = vmatmul.mubr.f32.gmra.mxu0 %v1773
    %v1841 = vpop.f32.mrf.mxu0
    %v1842 = vadd.f32 0.0, %v1841
    %v1843 = vpop.f32.mrf.mxu0
    %v1844 = vadd.f32 0.0, %v1843
    %1845 = vdwg.mxu0
    %v1846 = vadd.f32 %v1678, %v1844
    %vm1847 = vcmask 122880
    %v1848 = vsel %vm1847, %v1846, -inf
    %1849 = vmax.xlane.f32.xlu0 %v1848
    %v1850 = vpop.xlane.xlu0 %1849
    %v1851 = vsub.f32 %v1846, %v1850
    %v1852 = vmul.f32 %v1851, 1.442695
    %v1853 = vpow.pop %v1852
    %v1854 = vsel %vm1847, %v1853, 0.0
    %1855 = vadd.xlane.f32.xlu0 %v1854
    %v1856 = vpop.xlane.xlu0 %1855
    %v1857 = vrcp.pop %v1856
    %v1858 = vmul.f32 %v1853, %v1857
    %vm1859 = vcmask 130048
    %v1861 = vsel %vm1859, %v1858, 0
    %1863 = vmatprep.subr.mxu0 0.0
    %1864 = vmatpush1.msra.mxu0 0.0
    %1865 = vmatprep.subr.mxu0 0.0
    %1866 = vmatpush1.msra.mxu0 0.0
    %1867 = vmatprep.subr.mxu0 0.0
    %1868 = vmatpush1.msra.mxu0 0.0
    %1869 = vmatprep.subr.mxu0 0.0
    %1870 = vmatpush1.msra.mxu0 0.0
    %1871 = vmatprep.subr.mxu0 0.0
    %1872 = vmatpush1.msra.mxu0 0.0
    %1873 = vmatprep.subr.mxu0 0.0
    %1874 = vmatpush1.msra.mxu0 0.0
    %1875 = vmatprep.subr.mxu0 0.0
    %1876 = vmatpush1.msra.mxu0 0.0
    %1877 = vmatprep.subr.mxu0 0.0
    %1878 = vmatpush1.msra.mxu0 0.0
    %1879 = vmatprep.subr.mxu0 0.0
    %1880 = vmatpush1.msra.mxu0 0.0
    %1881 = vmatprep.subr.mxu0 0.0
    %1882 = vmatpush1.msra.mxu0 0.0
    %1883 = vmatprep.subr.mxu0 0.0
    %1884 = vmatpush1.msra.mxu0 0.0
    %1885 = vmatprep.subr.mxu0 0.0
    %1886 = vmatpush1.msra.mxu0 0.0
    %1887 = vmatprep.subr.mxu0 0.0
    %1888 = vmatpush1.msra.mxu0 0.0
    %1889 = vmatprep.subr.mxu0 0.0
    %1890 = vmatpush1.msra.mxu0 0.0
    %1891 = vmatprep.subr.mxu0 0.0
    %1892 = vmatpush1.msra.mxu0 %v1595
    %1893 = vmatprep.subr.mxu0 0.0
    %1894 = vmatpush1.msra.mxu0 %v1590
    %1895 = vmatprep.subr.mxu0 0.0
    %1896 = vmatpush2.msra.mxu0 0.0
    %1897 = vmatprep.subr.mxu0 0.0
    %1898 = vmatpush2.msra.mxu0 0.0
    %1899 = vmatprep.subr.mxu0 0.0
    %1900 = vmatpush2.msra.mxu0 0.0
    %1901 = vmatprep.subr.mxu0 0.0
    %1902 = vmatpush2.msra.mxu0 0.0
    %1903 = vmatprep.subr.mxu0 0.0
    %1904 = vmatpush2.msra.mxu0 0.0
    %1905 = vmatprep.subr.mxu0 0.0
    %1906 = vmatpush2.msra.mxu0 0.0
    %1907 = vmatprep.subr.mxu0 0.0
    %1908 = vmatpush2.msra.mxu0 0.0
    %1909 = vmatprep.subr.mxu0 0.0
    %1910 = vmatpush2.msra.mxu0 0.0
    %1911 = vmatprep.subr.mxu0 0.0
    %1912 = vmatpush2.msra.mxu0 0.0
    %1913 = vmatprep.subr.mxu0 0.0
    %1914 = vmatpush2.msra.mxu0 0.0
    %1915 = vmatprep.subr.mxu0 0.0
    %1916 = vmatpush2.msra.mxu0 0.0
    %1917 = vmatprep.subr.mxu0 0.0
    %1918 = vmatpush2.msra.mxu0 0.0
    %1919 = vmatprep.subr.mxu0 0.0
    %1920 = vmatpush2.msra.mxu0 0.0
    %1921 = vmatprep.subr.mxu0 0.0
    %1922 = vmatpush2.msra.mxu0 0.0
    %1923 = vmatprep.subr.mxu0 0.0
    %1924 = vmatpush2.msra.mxu0 0.0
    %1925 = vmatprep.subr.mxu0 0.0
    %1926 = vmatpush2.msra.mxu0 0.0
    %1927 = vmatprep.mubr.f32.mxu0 0.0
    %1928 = vmatmul.mubr.f32.gmra.mxu0 %v1861
    %v1929 = vpop.f32.mrf.mxu0
    %v1930 = vadd.f32 0.0, %v1929
    %v1931 = vpop.f32.mrf.mxu0
    %1932 = vdwg.mxu0
    %v1933 = vadd.f32 %v1756, %v1930
    %v1934 = vmax.f32 %v1933, 0.0
    %v1936 = vsel %vm1607, %v1934, 0
    %1938 = vmatprep.subr.mxu0 0.0
    %1939 = vmatpush1.msra.mxu0 0.0
    %1940 = vmatprep.subr.mxu0 0.0
    %1941 = vmatpush1.msra.mxu0 0.0
    %1942 = vmatprep.subr.mxu0 0.0
    %1943 = vmatpush1.msra.mxu0 0.0
    %1944 = vmatprep.subr.mxu0 0.0
    %1945 = vmatpush1.msra.mxu0 0.0
    %1946 = vmatprep.subr.mxu0 0.0
    %1947 = vmatpush1.msra.mxu0 0.0
    %1948 = vmatprep.subr.mxu0 0.0
    %1949 = vmatpush1.msra.mxu0 0.0
    %1950 = vmatprep.subr.mxu0 0.0
    %1951 = vmatpush1.msra.mxu0 0.0
    %1952 = vmatprep.subr.mxu0 0.0
    %1953 = vmatpush1.msra.mxu0 0.0
    %1954 = vmatprep.subr.mxu0 0.0
    %1955 = vmatpush1.msra.mxu0 0.0
    %1956 = vmatprep.subr.mxu0 0.0
    %1957 = vmatpush1.msra.mxu0 0.0
    %1958 = vmatprep.subr.mxu0 0.0
    %1959 = vmatpush1.msra.mxu0 0.0
    %1960 = vmatprep.subr.mxu0 0.0
    %1961 = vmatpush1.msra.mxu0 0.0
    %1962 = vmatprep.subr.mxu0 0.0
    %1963 = vmatpush1.msra.mxu0 0.0
    %1964 = vmatprep.subr.mxu0 0.0
    %1965 = vmatpush1.msra.mxu0 0.0
    %1966 = vmatprep.subr.mxu0 0.0
    %1967 = vmatpush1.msra.mxu0 0.0
    %1968 = vmatprep.subr.mxu0 0.0
    %1969 = vmatpush1.msra.mxu0 %v1759
    %1970 = vmatprep.subr.mxu0 0.0
    %1971 = vmatpush2.msra.mxu0 0.0
    %1972 = vmatprep.subr.mxu0 0.0
    %1973 = vmatpush2.msra.mxu0 0.0
    %1974 = vmatprep.subr.mxu0 0.0
    %1975 = vmatpush2.msra.mxu0 0.0
    %1976 = vmatprep.subr.mxu0 0.0
    %1977 = vmatpush2.msra.mxu0 0.0
    %1978 = vmatprep.subr.mxu0 0.0
    %1979 = vmatpush2.msra.mxu0 0.0
    %1980 = vmatprep.subr.mxu0 0.0
    %1981 = vmatpush2.msra.mxu0 0.0
    %1982 = vmatprep.subr.mxu0 0.0
    %1983 = vmatpush2.msra.mxu0 0.0
    %1984 = vmatprep.subr.mxu0 0.0
    %1985 = vmatpush2.msra.mxu0 0.0
    %1986 = vmatprep.subr.mxu0 0.0
    %1987 = vmatpush2.msra.mxu0 0.0
    %1988 = vmatprep.subr.mxu0 0.0
    %1989 = vmatpush2.msra.mxu0 0.0
    %1990 = vmatprep.subr.mxu0 0.0
    %1991 = vmatpush2.msra.mxu0 0.0
    %1992 = vmatprep.subr.mxu0 0.0
    %1993 = vmatpush2.msra.mxu0 0.0
    %1994 = vmatprep.subr.mxu0 0.0
    %1995 = vmatpush2.msra.mxu0 0.0
    %1996 = vmatprep.subr.mxu0 0.0
    %1997 = vmatpush2.msra.mxu0 0.0
    %1998 = vmatprep.subr.mxu0 0.0
    %1999 = vmatpush2.msra.mxu0 0.0
    %2000 = vmatprep.subr.mxu0 0.0
    %2001 = vmatpush2.msra.mxu0 0.0
    %2002 = vmatprep.mubr.f32.mxu0 0.0
    %2003 = vmatmul.mubr.f32.gmra.mxu0 %v1936
    %v2004 = vpop.f32.mrf.mxu0
    %v2005 = vadd.f32 %v1842, %v2004
    %v2006 = vpop.f32.mrf.mxu0
    %2007 = vdwg.mxu0
    %v2008 = vadd.f32 %v2005, %v1760
    %v2009 = vxor.u32 %v2008, 2147483648
    %v2010 = vmul.f32 %v2009, 1.442695
    %v2011 = vpow.pop %v2010
    %v2012 = vadd.f32 %v2011, 1.0
    %v2013 = vrcp.pop %v2012
    %v2014 = vmul.f32 1.0, %v2013
    %v2015 = vtanh.pop %v2008
    %v2017 = vrot.slane %v1485, 3
    %v2019 = vmul.f32 %v2014, %v2017
    %2021 = vrot.lane.b32.xlu0 %v2015, 32
    %v2022 = vpop.permute.xlu0 %2021
    %v2024 = vmul.f32 %v2014, %v2022
    %2026 = vrot.lane.b32.xlu0 %v2024, 32
    %v2027 = vpop.permute.xlu0 %2026
    %v2029 = vadd.f32 %v2019, %v2027
    %v2030 = vtanh.pop %v2029
    %2032 = vrot.lane.b32.xlu0 %v2030, 32
    %v2033 = vpop.permute.xlu0 %2032
    %v2035 = vmul.f32 %v2014, %v2033
    %2037 = vrot.lane.b32.xlu0 %v2035, 64
    %v2038 = vpop.permute.xlu0 %2037
    %v2039 = vsel %vm221, %v2038, 0
    %2041 = vmatprep.subr.mxu0 0.0
    %2042 = vmatpush1.msra.mxu0 0.0
    %2043 = vmatprep.subr.mxu0 0.0
    %2044 = vmatpush1.msra.mxu0 0.0
    %2045 = vmatprep.subr.mxu0 0.0
    %2046 = vmatpush1.msra.mxu0 0.0
    %2047 = vmatprep.subr.mxu0 0.0
    %2048 = vmatpush1.msra.mxu0 0.0
    %2049 = vmatprep.subr.mxu0 0.0
    %2050 = vmatpush1.msra.mxu0 0.0
    %2051 = vmatprep.subr.mxu0 0.0
    %2052 = vmatpush1.msra.mxu0 0.0
    %2053 = vmatprep.subr.mxu0 0.0
    %2054 = vmatpush1.msra.mxu0 0.0
    %2055 = vmatprep.subr.mxu0 0.0
    %2056 = vmatpush1.msra.mxu0 0.0
    %2057 = vmatprep.subr.mxu0 0.0
    %2058 = vmatpush1.msra.mxu0 0.0
    %2059 = vmatprep.subr.mxu0 0.0
    %2060 = vmatpush1.msra.mxu0 0.0
    %2061 = vmatprep.subr.mxu0 0.0
    %2062 = vmatpush1.msra.mxu0 0.0
    %2063 = vmatprep.subr.mxu0 0.0
    %2064 = vmatpush1.msra.mxu0 0.0
    %2065 = vmatprep.subr.mxu0 %v1768
    %2066 = vmatpush1.msra.mxu0 %v1767
    %2067 = vmatprep.subr.mxu0 %v1766
    %2068 = vmatpush1.msra.mxu0 %v1765
    %2069 = vmatprep.subr.mxu0 %v1764
    %2070 = vmatpush1.msra.mxu0 %v1763
    %2071 = vmatprep.subr.mxu0 %v1762
    %2072 = vmatpush1.msra.mxu0 %v1761
    %2073 = vmatprep.subr.mxu0 0.0
    %2074 = vmatpush2.msra.mxu0 0.0
    %2075 = vmatprep.subr.mxu0 0.0
    %2076 = vmatpush2.msra.mxu0 0.0
    %2077 = vmatprep.subr.mxu0 0.0
    %2078 = vmatpush2.msra.mxu0 0.0
    %2079 = vmatprep.subr.mxu0 0.0
    %2080 = vmatpush2.msra.mxu0 0.0
    %2081 = vmatprep.subr.mxu0 0.0
    %2082 = vmatpush2.msra.mxu0 0.0
    %2083 = vmatprep.subr.mxu0 0.0
    %2084 = vmatpush2.msra.mxu0 0.0
    %2085 = vmatprep.subr.mxu0 0.0
    %2086 = vmatpush2.msra.mxu0 0.0
    %2087 = vmatprep.subr.mxu0 0.0
    %2088 = vmatpush2.msra.mxu0 0.0
    %2089 = vmatprep.subr.mxu0 0.0
    %2090 = vmatpush2.msra.mxu0 0.0
    %2091 = vmatprep.subr.mxu0 0.0
    %2092 = vmatpush2.msra.mxu0 0.0
    %2093 = vmatprep.subr.mxu0 0.0
    %2094 = vmatpush2.msra.mxu0 0.0
    %2095 = vmatprep.subr.mxu0 0.0
    %2096 = vmatpush2.msra.mxu0 0.0
    %2097 = vmatprep.subr.mxu0 0.0
    %2098 = vmatpush2.msra.mxu0 0.0
    %2099 = vmatprep.subr.mxu0 0.0
    %2100 = vmatpush2.msra.mxu0 0.0
    %2101 = vmatprep.subr.mxu0 0.0
    %2102 = vmatpush2.msra.mxu0 0.0
    %2103 = vmatprep.subr.mxu0 0.0
    %2104 = vmatpush2.msra.mxu0 0.0
    %2105 = vmatprep.mubr.f32.mxu0 0.0
    %2106 = vmatmul.mubr.f32.gmra.mxu0 %v2039
    %v2107 = vpop.f32.mrf.mxu0
    %v2108 = vadd.f32 0.0, %v2107
    %v2109 = vpop.f32.mrf.mxu0
    %v2110 = vadd.f32 0.0, %v2109
    %2111 = vdwg.mxu0
    %v2113 = vrot.slane %v2110, 7
    %v2115 = vadd.f32 %v1678, %v2113
    %vm2116 = vcmask 123905
    %v2117 = vsel %vm2116, %v2115, -inf
    %2118 = vmax.xlane.f32.xlu0 %v2117
    %v2119 = vpop.xlane.xlu0 %2118
    %v2120 = vsub.f32 %v2115, %v2119
    %v2121 = vmul.f32 %v2120, 1.442695
    %v2122 = vpow.pop %v2121
    %v2123 = vsel %vm2116, %v2122, 0.0
    %2124 = vadd.xlane.f32.xlu0 %v2123
    %v2125 = vpop.xlane.xlu0 %2124
    %v2126 = vrcp.pop %v2125
    %v2127 = vmul.f32 %v2122, %v2126
    %v2129 = vrot.slane %v2127, 1
    %v2130 = vsel %vm1859, %v2129, 0
    %2132 = vmatprep.subr.mxu0 0.0
    %2133 = vmatpush1.msra.mxu0 0.0
    %2134 = vmatprep.subr.mxu0 0.0
    %2135 = vmatpush1.msra.mxu0 0.0
    %2136 = vmatprep.subr.mxu0 0.0
    %2137 = vmatpush1.msra.mxu0 0.0
    %2138 = vmatprep.subr.mxu0 0.0
    %2139 = vmatpush1.msra.mxu0 0.0
    %2140 = vmatprep.subr.mxu0 0.0
    %2141 = vmatpush1.msra.mxu0 0.0
    %2142 = vmatprep.subr.mxu0 0.0
    %2143 = vmatpush1.msra.mxu0 0.0
    %2144 = vmatprep.subr.mxu0 0.0
    %2145 = vmatpush1.msra.mxu0 0.0
    %2146 = vmatprep.subr.mxu0 0.0
    %2147 = vmatpush1.msra.mxu0 0.0
    %2148 = vmatprep.subr.mxu0 0.0
    %2149 = vmatpush1.msra.mxu0 0.0
    %2150 = vmatprep.subr.mxu0 0.0
    %2151 = vmatpush1.msra.mxu0 0.0
    %2152 = vmatprep.subr.mxu0 0.0
    %2153 = vmatpush1.msra.mxu0 0.0
    %2154 = vmatprep.subr.mxu0 0.0
    %2155 = vmatpush1.msra.mxu0 0.0
    %2156 = vmatprep.subr.mxu0 0.0
    %2157 = vmatpush1.msra.mxu0 0.0
    %2158 = vmatprep.subr.mxu0 0.0
    %2159 = vmatpush1.msra.mxu0 0.0
    %2160 = vmatprep.subr.mxu0 0.0
    %2161 = vmatpush1.msra.mxu0 %v1595
    %2162 = vmatprep.subr.mxu0 0.0
    %2163 = vmatpush1.msra.mxu0 %v1590
    %2164 = vmatprep.subr.mxu0 0.0
    %2165 = vmatpush2.msra.mxu0 0.0
    %2166 = vmatprep.subr.mxu0 0.0
    %2167 = vmatpush2.msra.mxu0 0.0
    %2168 = vmatprep.subr.mxu0 0.0
    %2169 = vmatpush2.msra.mxu0 0.0
    %2170 = vmatprep.subr.mxu0 0.0
    %2171 = vmatpush2.msra.mxu0 0.0
    %2172 = vmatprep.subr.mxu0 0.0
    %2173 = vmatpush2.msra.mxu0 0.0
    %2174 = vmatprep.subr.mxu0 0.0
    %2175 = vmatpush2.msra.mxu0 0.0
    %2176 = vmatprep.subr.mxu0 0.0
    %2177 = vmatpush2.msra.mxu0 0.0
    %2178 = vmatprep.subr.mxu0 0.0
    %2179 = vmatpush2.msra.mxu0 0.0
    %2180 = vmatprep.subr.mxu0 0.0
    %2181 = vmatpush2.msra.mxu0 0.0
    %2182 = vmatprep.subr.mxu0 0.0
    %2183 = vmatpush2.msra.mxu0 0.0
    %2184 = vmatprep.subr.mxu0 0.0
    %2185 = vmatpush2.msra.mxu0 0.0
    %2186 = vmatprep.subr.mxu0 0.0
    %2187 = vmatpush2.msra.mxu0 0.0
    %2188 = vmatprep.subr.mxu0 0.0
    %2189 = vmatpush2.msra.mxu0 0.0
    %2190 = vmatprep.subr.mxu0 0.0
    %2191 = vmatpush2.msra.mxu0 0.0
    %2192 = vmatprep.subr.mxu0 0.0
    %2193 = vmatpush2.msra.mxu0 0.0
    %2194 = vmatprep.subr.mxu0 0.0
    %2195 = vmatpush2.msra.mxu0 0.0
    %2196 = vmatprep.mubr.f32.mxu0 0.0
    %2197 = vmatmul.mubr.f32.gmra.mxu0 %v2130
    %v2198 = vpop.f32.mrf.mxu0
    %v2199 = vadd.f32 0.0, %v2198
    %v2200 = vpop.f32.mrf.mxu0
    %2201 = vdwg.mxu0
    %v2203 = vrot.slane %v2199, 7
    %v2205 = vadd.f32 %v1756, %v2203
    %v2206 = vmax.f32 %v2205, 0.0
    %v2208 = vrot.slane %v2206, 1
    %v2209 = vsel %vm1607, %v2208, 0
    %2211 = vmatprep.subr.mxu0 0.0
    %2212 = vmatpush1.msra.mxu0 0.0
    %2213 = vmatprep.subr.mxu0 0.0
    %2214 = vmatpush1.msra.mxu0 0.0
    %2215 = vmatprep.subr.mxu0 0.0
    %2216 = vmatpush1.msra.mxu0 0.0
    %2217 = vmatprep.subr.mxu0 0.0
    %2218 = vmatpush1.msra.mxu0 0.0
    %2219 = vmatprep.subr.mxu0 0.0
    %2220 = vmatpush1.msra.mxu0 0.0
    %2221 = vmatprep.subr.mxu0 0.0
    %2222 = vmatpush1.msra.mxu0 0.0
    %2223 = vmatprep.subr.mxu0 0.0
    %2224 = vmatpush1.msra.mxu0 0.0
    %2225 = vmatprep.subr.mxu0 0.0
    %2226 = vmatpush1.msra.mxu0 0.0
    %2227 = vmatprep.subr.mxu0 0.0
    %2228 = vmatpush1.msra.mxu0 0.0
    %2229 = vmatprep.subr.mxu0 0.0
    %2230 = vmatpush1.msra.mxu0 0.0
    %2231 = vmatprep.subr.mxu0 0.0
    %2232 = vmatpush1.msra.mxu0 0.0
    %2233 = vmatprep.subr.mxu0 0.0
    %2234 = vmatpush1.msra.mxu0 0.0
    %2235 = vmatprep.subr.mxu0 0.0
    %2236 = vmatpush1.msra.mxu0 0.0
    %2237 = vmatprep.subr.mxu0 0.0
    %2238 = vmatpush1.msra.mxu0 0.0
    %2239 = vmatprep.subr.mxu0 0.0
    %2240 = vmatpush1.msra.mxu0 0.0
    %2241 = vmatprep.subr.mxu0 0.0
    %2242 = vmatpush1.msra.mxu0 %v1759
    %2243 = vmatprep.subr.mxu0 0.0
    %2244 = vmatpush2.msra.mxu0 0.0
    %2245 = vmatprep.subr.mxu0 0.0
    %2246 = vmatpush2.msra.mxu0 0.0
    %2247 = vmatprep.subr.mxu0 0.0
    %2248 = vmatpush2.msra.mxu0 0.0
    %2249 = vmatprep.subr.mxu0 0.0
    %2250 = vmatpush2.msra.mxu0 0.0
    %2251 = vmatprep.subr.mxu0 0.0
    %2252 = vmatpush2.msra.mxu0 0.0
    %2253 = vmatprep.subr.mxu0 0.0
    %2254 = vmatpush2.msra.mxu0 0.0
    %2255 = vmatprep.subr.mxu0 0.0
    %2256 = vmatpush2.msra.mxu0 0.0
    %2257 = vmatprep.subr.mxu0 0.0
    %2258 = vmatpush2.msra.mxu0 0.0
    %2259 = vmatprep.subr.mxu0 0.0
    %2260 = vmatpush2.msra.mxu0 0.0
    %2261 = vmatprep.subr.mxu0 0.0
    %2262 = vmatpush2.msra.mxu0 0.0
    %2263 = vmatprep.subr.mxu0 0.0
    %2264 = vmatpush2.msra.mxu0 0.0
    %2265 = vmatprep.subr.mxu0 0.0
    %2266 = vmatpush2.msra.mxu0 0.0
    %2267 = vmatprep.subr.mxu0 0.0
    %2268 = vmatpush2.msra.mxu0 0.0
    %2269 = vmatprep.subr.mxu0 0.0
    %2270 = vmatpush2.msra.mxu0 0.0
    %2271 = vmatprep.subr.mxu0 0.0
    %2272 = vmatpush2.msra.mxu0 0.0
    %2273 = vmatprep.subr.mxu0 0.0
    %2274 = vmatpush2.msra.mxu0 0.0
    %2275 = vmatprep.mubr.f32.mxu0 0.0
    %2276 = vmatmul.mubr.f32.gmra.mxu0 %v2209
    %v2277 = vpop.f32.mrf.mxu0
    %v2278 = vadd.f32 %v2108, %v2277
    %v2279 = vpop.f32.mrf.mxu0
    %2280 = vdwg.mxu0
    %v2281 = vadd.f32 %v2278, %v1760
    %v2282 = vxor.u32 %v2281, 2147483648
    %v2283 = vmul.f32 %v2282, 1.442695
    %v2284 = vpow.pop %v2283
    %v2285 = vadd.f32 %v2284, 1.0
    %v2286 = vrcp.pop %v2285
    %v2287 = vmul.f32 1.0, %v2286
    %v2288 = vtanh.pop %v2281
    %v2289 = vmul.f32 %v2287, %v2029
    %2291 = vrot.lane.b32.xlu0 %v2288, 32
    %v2292 = vpop.permute.xlu0 %2291
    %v2294 = vmul.f32 %v2287, %v2292
    %2296 = vrot.lane.b32.xlu0 %v2294, 32
    %v2297 = vpop.permute.xlu0 %2296
    %v2299 = vadd.f32 %v2289, %v2297
    %v2300 = vtanh.pop %v2299
    %2302 = vrot.lane.b32.xlu0 %v2300, 32
    %v2303 = vpop.permute.xlu0 %2302
    %v2305 = vmul.f32 %v2287, %v2303
    %2307 = vrot.lane.b32.xlu0 %v2305, 64
    %v2308 = vpop.permute.xlu0 %2307
    %v2309 = vsel %vm221, %v2308, 0
    %2311 = vmatprep.subr.mxu0 0.0
    %2312 = vmatpush1.msra.mxu0 0.0
    %2313 = vmatprep.subr.mxu0 0.0
    %2314 = vmatpush1.msra.mxu0 0.0
    %2315 = vmatprep.subr.mxu0 0.0
    %2316 = vmatpush1.msra.mxu0 0.0
    %2317 = vmatprep.subr.mxu0 0.0
    %2318 = vmatpush1.msra.mxu0 0.0
    %2319 = vmatprep.subr.mxu0 0.0
    %2320 = vmatpush1.msra.mxu0 0.0
    %2321 = vmatprep.subr.mxu0 0.0
    %2322 = vmatpush1.msra.mxu0 0.0
    %2323 = vmatprep.subr.mxu0 0.0
    %2324 = vmatpush1.msra.mxu0 0.0
    %2325 = vmatprep.subr.mxu0 0.0
    %2326 = vmatpush1.msra.mxu0 0.0
    %2327 = vmatprep.subr.mxu0 0.0
    %2328 = vmatpush1.msra.mxu0 0.0
    %2329 = vmatprep.subr.mxu0 0.0
    %2330 = vmatpush1.msra.mxu0 0.0
    %2331 = vmatprep.subr.mxu0 0.0
    %2332 = vmatpush1.msra.mxu0 0.0
    %2333 = vmatprep.subr.mxu0 0.0
    %2334 = vmatpush1.msra.mxu0 0.0
    %2335 = vmatprep.subr.mxu0 %v1768
    %2336 = vmatpush1.msra.mxu0 %v1767
    %2337 = vmatprep.subr.mxu0 %v1766
    %2338 = vmatpush1.msra.mxu0 %v1765
    %2339 = vmatprep.subr.mxu0 %v1764
    %2340 = vmatpush1.msra.mxu0 %v1763
    %2341 = vmatprep.subr.mxu0 %v1762
    %2342 = vmatpush1.msra.mxu0 %v1761
    %2343 = vmatprep.subr.mxu0 0.0
    %2344 = vmatpush2.msra.mxu0 0.0
    %2345 = vmatprep.subr.mxu0 0.0
    %2346 = vmatpush2.msra.mxu0 0.0
    %2347 = vmatprep.subr.mxu0 0.0
    %2348 = vmatpush2.msra.mxu0 0.0
    %2349 = vmatprep.subr.mxu0 0.0
    %2350 = vmatpush2.msra.mxu0 0.0
    %2351 = vmatprep.subr.mxu0 0.0
    %2352 = vmatpush2.msra.mxu0 0.0
    %2353 = vmatprep.subr.mxu0 0.0
    %2354 = vmatpush2.msra.mxu0 0.0
    %2355 = vmatprep.subr.mxu0 0.0
    %2356 = vmatpush2.msra.mxu0 0.0
    %2357 = vmatprep.subr.mxu0 0.0
    %2358 = vmatpush2.msra.mxu0 0.0
    %2359 = vmatprep.subr.mxu0 0.0
    %2360 = vmatpush2.msra.mxu0 0.0
    %2361 = vmatprep.subr.mxu0 0.0
    %2362 = vmatpush2.msra.mxu0 0.0
    %2363 = vmatprep.subr.mxu0 0.0
    %2364 = vmatpush2.msra.mxu0 0.0
    %2365 = vmatprep.subr.mxu0 0.0
    %2366 = vmatpush2.msra.mxu0 0.0
    %2367 = vmatprep.subr.mxu0 0.0
    %2368 = vmatpush2.msra.mxu0 0.0
    %2369 = vmatprep.subr.mxu0 0.0
    %2370 = vmatpush2.msra.mxu0 0.0
    %2371 = vmatprep.subr.mxu0 0.0
    %2372 = vmatpush2.msra.mxu0 0.0
    %2373 = vmatprep.subr.mxu0 0.0
    %2374 = vmatpush2.msra.mxu0 0.0
    %2375 = vmatprep.mubr.f32.mxu0 0.0
    %2376 = vmatmul.mubr.f32.gmra.mxu0 %v2309
    %v2377 = vpop.f32.mrf.mxu0
    %v2378 = vadd.f32 0.0, %v2377
    %v2379 = vpop.f32.mrf.mxu0
    %v2380 = vadd.f32 0.0, %v2379
    %2381 = vdwg.mxu0
    %v2383 = vrot.slane %v2380, 6
    %v2385 = vadd.f32 %v1678, %v2383
    %vm2386 = vcmask 124930
    %v2387 = vsel %vm2386, %v2385, -inf
    %2388 = vmax.xlane.f32.xlu0 %v2387
    %v2389 = vpop.xlane.xlu0 %2388
    %v2390 = vsub.f32 %v2385, %v2389
    %v2391 = vmul.f32 %v2390, 1.442695
    %v2392 = vpow.pop %v2391
    %v2393 = vsel %vm2386, %v2392, 0.0
    %2394 = vadd.xlane.f32.xlu0 %v2393
    %v2395 = vpop.xlane.xlu0 %2394
    %v2396 = vrcp.pop %v2395
    %v2397 = vmul.f32 %v2392, %v2396
    %v2399 = vrot.slane %v2397, 2
    %v2400 = vsel %vm1859, %v2399, 0
    %2402 = vmatprep.subr.mxu0 0.0
    %2403 = vmatpush1.msra.mxu0 0.0
    %2404 = vmatprep.subr.mxu0 0.0
    %2405 = vmatpush1.msra.mxu0 0.0
    %2406 = vmatprep.subr.mxu0 0.0
    %2407 = vmatpush1.msra.mxu0 0.0
    %2408 = vmatprep.subr.mxu0 0.0
    %2409 = vmatpush1.msra.mxu0 0.0
    %2410 = vmatprep.subr.mxu0 0.0
    %2411 = vmatpush1.msra.mxu0 0.0
    %2412 = vmatprep.subr.mxu0 0.0
    %2413 = vmatpush1.msra.mxu0 0.0
    %2414 = vmatprep.subr.mxu0 0.0
    %2415 = vmatpush1.msra.mxu0 0.0
    %2416 = vmatprep.subr.mxu0 0.0
    %2417 = vmatpush1.msra.mxu0 0.0
    %2418 = vmatprep.subr.mxu0 0.0
    %2419 = vmatpush1.msra.mxu0 0.0
    %2420 = vmatprep.subr.mxu0 0.0
    %2421 = vmatpush1.msra.mxu0 0.0
    %2422 = vmatprep.subr.mxu0 0.0
    %2423 = vmatpush1.msra.mxu0 0.0
    %2424 = vmatprep.subr.mxu0 0.0
    %2425 = vmatpush1.msra.mxu0 0.0
    %2426 = vmatprep.subr.mxu0 0.0
    %2427 = vmatpush1.msra.mxu0 0.0
    %2428 = vmatprep.subr.mxu0 0.0
    %2429 = vmatpush1.msra.mxu0 0.0
    %2430 = vmatprep.subr.mxu0 0.0
    %2431 = vmatpush1.msra.mxu0 %v1595
    %2432 = vmatprep.subr.mxu0 0.0
    %2433 = vmatpush1.msra.mxu0 %v1590
    %2434 = vmatprep.subr.mxu0 0.0
    %2435 = vmatpush2.msra.mxu0 0.0
    %2436 = vmatprep.subr.mxu0 0.0
    %2437 = vmatpush2.msra.mxu0 0.0
    %2438 = vmatprep.subr.mxu0 0.0
    %2439 = vmatpush2.msra.mxu0 0.0
    %2440 = vmatprep.subr.mxu0 0.0
    %2441 = vmatpush2.msra.mxu0 0.0
    %2442 = vmatprep.subr.mxu0 0.0
    %2443 = vmatpush2.msra.mxu0 0.0
    %2444 = vmatprep.subr.mxu0 0.0
    %2445 = vmatpush2.msra.mxu0 0.0
    %2446 = vmatprep.subr.mxu0 0.0
    %2447 = vmatpush2.msra.mxu0 0.0
    %2448 = vmatprep.subr.mxu0 0.0
    %2449 = vmatpush2.msra.mxu0 0.0
    %2450 = vmatprep.subr.mxu0 0.0
    %2451 = vmatpush2.msra.mxu0 0.0
    %2452 = vmatprep.subr.mxu0 0.0
    %2453 = vmatpush2.msra.mxu0 0.0
    %2454 = vmatprep.subr.mxu0 0.0
    %2455 = vmatpush2.msra.mxu0 0.0
    %2456 = vmatprep.subr.mxu0 0.0
    %2457 = vmatpush2.msra.mxu0 0.0
    %2458 = vmatprep.subr.mxu0 0.0
    %2459 = vmatpush2.msra.mxu0 0.0
    %2460 = vmatprep.subr.mxu0 0.0
    %2461 = vmatpush2.msra.mxu0 0.0
    %2462 = vmatprep.subr.mxu0 0.0
    %2463 = vmatpush2.msra.mxu0 0.0
    %2464 = vmatprep.subr.mxu0 0.0
    %2465 = vmatpush2.msra.mxu0 0.0
    %2466 = vmatprep.mubr.f32.mxu0 0.0
    %2467 = vmatmul.mubr.f32.gmra.mxu0 %v2400
    %v2468 = vpop.f32.mrf.mxu0
    %v2469 = vadd.f32 0.0, %v2468
    %v2470 = vpop.f32.mrf.mxu0
    %2471 = vdwg.mxu0
    %v2473 = vrot.slane %v2469, 6
    %v2475 = vadd.f32 %v1756, %v2473
    %v2476 = vmax.f32 %v2475, 0.0
    %v2478 = vrot.slane %v2476, 2
    %v2479 = vsel %vm1607, %v2478, 0
    %2481 = vmatprep.subr.mxu0 0.0
    %2482 = vmatpush1.msra.mxu0 0.0
    %2483 = vmatprep.subr.mxu0 0.0
    %2484 = vmatpush1.msra.mxu0 0.0
    %2485 = vmatprep.subr.mxu0 0.0
    %2486 = vmatpush1.msra.mxu0 0.0
    %2487 = vmatprep.subr.mxu0 0.0
    %2488 = vmatpush1.msra.mxu0 0.0
    %2489 = vmatprep.subr.mxu0 0.0
    %2490 = vmatpush1.msra.mxu0 0.0
    %2491 = vmatprep.subr.mxu0 0.0
    %2492 = vmatpush1.msra.mxu0 0.0
    %2493 = vmatprep.subr.mxu0 0.0
    %2494 = vmatpush1.msra.mxu0 0.0
    %2495 = vmatprep.subr.mxu0 0.0
    %2496 = vmatpush1.msra.mxu0 0.0
    %2497 = vmatprep.subr.mxu0 0.0
    %2498 = vmatpush1.msra.mxu0 0.0
    %2499 = vmatprep.subr.mxu0 0.0
    %2500 = vmatpush1.msra.mxu0 0.0
    %2501 = vmatprep.subr.mxu0 0.0
    %2502 = vmatpush1.msra.mxu0 0.0
    %2503 = vmatprep.subr.mxu0 0.0
    %2504 = vmatpush1.msra.mxu0 0.0
    %2505 = vmatprep.subr.mxu0 0.0
    %2506 = vmatpush1.msra.mxu0 0.0
    %2507 = vmatprep.subr.mxu0 0.0
    %2508 = vmatpush1.msra.mxu0 0.0
    %2509 = vmatprep.subr.mxu0 0.0
    %2510 = vmatpush1.msra.mxu0 0.0
    %2511 = vmatprep.subr.mxu0 0.0
    %2512 = vmatpush1.msra.mxu0 %v1759
    %2513 = vmatprep.subr.mxu0 0.0
    %2514 = vmatpush2.msra.mxu0 0.0
    %2515 = vmatprep.subr.mxu0 0.0
    %2516 = vmatpush2.msra.mxu0 0.0
    %2517 = vmatprep.subr.mxu0 0.0
    %2518 = vmatpush2.msra.mxu0 0.0
    %2519 = vmatprep.subr.mxu0 0.0
    %2520 = vmatpush2.msra.mxu0 0.0
    %2521 = vmatprep.subr.mxu0 0.0
    %2522 = vmatpush2.msra.mxu0 0.0
    %2523 = vmatprep.subr.mxu0 0.0
    %2524 = vmatpush2.msra.mxu0 0.0
    %2525 = vmatprep.subr.mxu0 0.0
    %2526 = vmatpush2.msra.mxu0 0.0
    %2527 = vmatprep.subr.mxu0 0.0
    %2528 = vmatpush2.msra.mxu0 0.0
    %2529 = vmatprep.subr.mxu0 0.0
    %2530 = vmatpush2.msra.mxu0 0.0
    %2531 = vmatprep.subr.mxu0 0.0
    %2532 = vmatpush2.msra.mxu0 0.0
    %2533 = vmatprep.subr.mxu0 0.0
    %2534 = vmatpush2.msra.mxu0 0.0
    %2535 = vmatprep.subr.mxu0 0.0
    %2536 = vmatpush2.msra.mxu0 0.0
    %2537 = vmatprep.subr.mxu0 0.0
    %2538 = vmatpush2.msra.mxu0 0.0
    %2539 = vmatprep.subr.mxu0 0.0
    %2540 = vmatpush2.msra.mxu0 0.0
    %2541 = vmatprep.subr.mxu0 0.0
    %2542 = vmatpush2.msra.mxu0 0.0
    %2543 = vmatprep.subr.mxu0 0.0
    %2544 = vmatpush2.msra.mxu0 0.0
    %2545 = vmatprep.mubr.f32.mxu0 0.0
    %2546 = vmatmul.mubr.f32.gmra.mxu0 %v2479
    %v2547 = vpop.f32.mrf.mxu0
    %v2548 = vadd.f32 %v2378, %v2547
    %v2549 = vpop.f32.mrf.mxu0
    %2550 = vdwg.mxu0
    %v2551 = vadd.f32 %v2548, %v1760
    %v2552 = vxor.u32 %v2551, 2147483648
    %v2553 = vmul.f32 %v2552, 1.442695
    %v2554 = vpow.pop %v2553
    %v2555 = vadd.f32 %v2554, 1.0
    %v2556 = vrcp.pop %v2555
    %v2557 = vmul.f32 1.0, %v2556
    %v2558 = vtanh.pop %v2551
    %v2559 = vmul.f32 %v2557, %v2299
    %2561 = vrot.lane.b32.xlu0 %v2558, 32
    %v2562 = vpop.permute.xlu0 %2561
    %v2564 = vmul.f32 %v2557, %v2562
    %2566 = vrot.lane.b32.xlu0 %v2564, 32
    %v2567 = vpop.permute.xlu0 %2566
    %v2569 = vadd.f32 %v2559, %v2567
    %v2570 = vtanh.pop %v2569
    %2572 = vrot.lane.b32.xlu0 %v2570, 32
    %v2573 = vpop.permute.xlu0 %2572
    %v2575 = vmul.f32 %v2557, %v2573
    %2577 = vrot.lane.b32.xlu0 %v2575, 64
    %v2578 = vpop.permute.xlu0 %2577
    %v2579 = vsel %vm221, %v2578, 0
    %2581 = vmatprep.subr.mxu0 0.0
    %2582 = vmatpush1.msra.mxu0 0.0
    %2583 = vmatprep.subr.mxu0 0.0
    %2584 = vmatpush1.msra.mxu0 0.0
    %2585 = vmatprep.subr.mxu0 0.0
    %2586 = vmatpush1.msra.mxu0 0.0
    %2587 = vmatprep.subr.mxu0 0.0
    %2588 = vmatpush1.msra.mxu0 0.0
    %2589 = vmatprep.subr.mxu0 0.0
    %2590 = vmatpush1.msra.mxu0 0.0
    %2591 = vmatprep.subr.mxu0 0.0
    %2592 = vmatpush1.msra.mxu0 0.0
    %2593 = vmatprep.subr.mxu0 0.0
    %2594 = vmatpush1.msra.mxu0 0.0
    %2595 = vmatprep.subr.mxu0 0.0
    %2596 = vmatpush1.msra.mxu0 0.0
    %2597 = vmatprep.subr.mxu0 0.0
    %2598 = vmatpush1.msra.mxu0 0.0
    %2599 = vmatprep.subr.mxu0 0.0
    %2600 = vmatpush1.msra.mxu0 0.0
    %2601 = vmatprep.subr.mxu0 0.0
    %2602 = vmatpush1.msra.mxu0 0.0
    %2603 = vmatprep.subr.mxu0 0.0
    %2604 = vmatpush1.msra.mxu0 0.0
    %2605 = vmatprep.subr.mxu0 %v1768
    %2606 = vmatpush1.msra.mxu0 %v1767
    %2607 = vmatprep.subr.mxu0 %v1766
    %2608 = vmatpush1.msra.mxu0 %v1765
    %2609 = vmatprep.subr.mxu0 %v1764
    %2610 = vmatpush1.msra.mxu0 %v1763
    %2611 = vmatprep.subr.mxu0 %v1762
    %2612 = vmatpush1.msra.mxu0 %v1761
    %2613 = vmatprep.subr.mxu0 0.0
    %2614 = vmatpush2.msra.mxu0 0.0
    %2615 = vmatprep.subr.mxu0 0.0
    %2616 = vmatpush2.msra.mxu0 0.0
    %2617 = vmatprep.subr.mxu0 0.0
    %2618 = vmatpush2.msra.mxu0 0.0
    %2619 = vmatprep.subr.mxu0 0.0
    %2620 = vmatpush2.msra.mxu0 0.0
    %2621 = vmatprep.subr.mxu0 0.0
    %2622 = vmatpush2.msra.mxu0 0.0
    %2623 = vmatprep.subr.mxu0 0.0
    %2624 = vmatpush2.msra.mxu0 0.0
    %2625 = vmatprep.subr.mxu0 0.0
    %2626 = vmatpush2.msra.mxu0 0.0
    %2627 = vmatprep.subr.mxu0 0.0
    %2628 = vmatpush2.msra.mxu0 0.0
    %2629 = vmatprep.subr.mxu0 0.0
    %2630 = vmatpush2.msra.mxu0 0.0
    %2631 = vmatprep.subr.mxu0 0.0
    %2632 = vmatpush2.msra.mxu0 0.0
    %2633 = vmatprep.subr.mxu0 0.0
    %2634 = vmatpush2.msra.mxu0 0.0
    %2635 = vmatprep.subr.mxu0 0.0
    %2636 = vmatpush2.msra.mxu0 0.0
    %2637 = vmatprep.subr.mxu0 0.0
    %2638 = vmatpush2.msra.mxu0 0.0
    %2639 = vmatprep.subr.mxu0 0.0
    %2640 = vmatpush2.msra.mxu0 0.0
    %2641 = vmatprep.subr.mxu0 0.0
    %2642 = vmatpush2.msra.mxu0 0.0
    %2643 = vmatprep.subr.mxu0 0.0
    %2644 = vmatpush2.msra.mxu0 0.0
    %2645 = vmatprep.mubr.f32.mxu0 0.0
    %2646 = vmatmul.mubr.f32.gmra.mxu0 %v2579
    %v2647 = vpop.f32.mrf.mxu0
    %v2648 = vadd.f32 0.0, %v2647
    %v2649 = vpop.f32.mrf.mxu0
    %v2650 = vadd.f32 0.0, %v2649
    %2651 = vdwg.mxu0
    %v2653 = vrot.slane %v2650, 5
    %v2655 = vadd.f32 %v1678, %v2653
    %vm2656 = vcmask 125955
    %v2657 = vsel %vm2656, %v2655, -inf
    %2658 = vmax.xlane.f32.xlu0 %v2657
    %v2659 = vpop.xlane.xlu0 %2658
    %v2660 = vsub.f32 %v2655, %v2659
    %v2661 = vmul.f32 %v2660, 1.442695
    %v2662 = vpow.pop %v2661
    %v2663 = vsel %vm2656, %v2662, 0.0
    %2664 = vadd.xlane.f32.xlu0 %v2663
    %v2665 = vpop.xlane.xlu0 %2664
    %v2666 = vrcp.pop %v2665
    %v2667 = vmul.f32 %v2662, %v2666
    %v2669 = vrot.slane %v2667, 3
    %v2670 = vsel %vm1859, %v2669, 0
    %2672 = vmatprep.subr.mxu0 0.0
    %2673 = vmatpush1.msra.mxu0 0.0
    %2674 = vmatprep.subr.mxu0 0.0
    %2675 = vmatpush1.msra.mxu0 0.0
    %2676 = vmatprep.subr.mxu0 0.0
    %2677 = vmatpush1.msra.mxu0 0.0
    %2678 = vmatprep.subr.mxu0 0.0
    %2679 = vmatpush1.msra.mxu0 0.0
    %2680 = vmatprep.subr.mxu0 0.0
    %2681 = vmatpush1.msra.mxu0 0.0
    %2682 = vmatprep.subr.mxu0 0.0
    %2683 = vmatpush1.msra.mxu0 0.0
    %2684 = vmatprep.subr.mxu0 0.0
    %2685 = vmatpush1.msra.mxu0 0.0
    %2686 = vmatprep.subr.mxu0 0.0
    %2687 = vmatpush1.msra.mxu0 0.0
    %2688 = vmatprep.subr.mxu0 0.0
    %2689 = vmatpush1.msra.mxu0 0.0
    %2690 = vmatprep.subr.mxu0 0.0
    %2691 = vmatpush1.msra.mxu0 0.0
    %2692 = vmatprep.subr.mxu0 0.0
    %2693 = vmatpush1.msra.mxu0 0.0
    %2694 = vmatprep.subr.mxu0 0.0
    %2695 = vmatpush1.msra.mxu0 0.0
    %2696 = vmatprep.subr.mxu0 0.0
    %2697 = vmatpush1.msra.mxu0 0.0
    %2698 = vmatprep.subr.mxu0 0.0
    %2699 = vmatpush1.msra.mxu0 0.0
    %2700 = vmatprep.subr.mxu0 0.0
    %2701 = vmatpush1.msra.mxu0 %v1595
    %2702 = vmatprep.subr.mxu0 0.0
    %2703 = vmatpush1.msra.mxu0 %v1590
    %2704 = vmatprep.subr.mxu0 0.0
    %2705 = vmatpush2.msra.mxu0 0.0
    %2706 = vmatprep.subr.mxu0 0.0
    %2707 = vmatpush2.msra.mxu0 0.0
    %2708 = vmatprep.subr.mxu0 0.0
    %2709 = vmatpush2.msra.mxu0 0.0
    %2710 = vmatprep.subr.mxu0 0.0
    %2711 = vmatpush2.msra.mxu0 0.0
    %2712 = vmatprep.subr.mxu0 0.0
    %2713 = vmatpush2.msra.mxu0 0.0
    %2714 = vmatprep.subr.mxu0 0.0
    %2715 = vmatpush2.msra.mxu0 0.0
    %2716 = vmatprep.subr.mxu0 0.0
    %2717 = vmatpush2.msra.mxu0 0.0
    %2718 = vmatprep.subr.mxu0 0.0
    %2719 = vmatpush2.msra.mxu0 0.0
    %2720 = vmatprep.subr.mxu0 0.0
    %2721 = vmatpush2.msra.mxu0 0.0
    %2722 = vmatprep.subr.mxu0 0.0
    %2723 = vmatpush2.msra.mxu0 0.0
    %2724 = vmatprep.subr.mxu0 0.0
    %2725 = vmatpush2.msra.mxu0 0.0
    %2726 = vmatprep.subr.mxu0 0.0
    %2727 = vmatpush2.msra.mxu0 0.0
    %2728 = vmatprep.subr.mxu0 0.0
    %2729 = vmatpush2.msra.mxu0 0.0
    %2730 = vmatprep.subr.mxu0 0.0
    %2731 = vmatpush2.msra.mxu0 0.0
    %2732 = vmatprep.subr.mxu0 0.0
    %2733 = vmatpush2.msra.mxu0 0.0
    %2734 = vmatprep.subr.mxu0 0.0
    %2735 = vmatpush2.msra.mxu0 0.0
    %2736 = vmatprep.mubr.f32.mxu0 0.0
    %2737 = vmatmul.mubr.f32.gmra.mxu0 %v2670
    %v2738 = vpop.f32.mrf.mxu0
    %v2739 = vadd.f32 0.0, %v2738
    %v2740 = vpop.f32.mrf.mxu0
    %2741 = vdwg.mxu0
    %v2743 = vrot.slane %v2739, 5
    %v2745 = vadd.f32 %v1756, %v2743
    %v2746 = vmax.f32 %v2745, 0.0
    %v2748 = vrot.slane %v2746, 3
    %v2749 = vsel %vm1607, %v2748, 0
    %2751 = vmatprep.subr.mxu0 0.0
    %2752 = vmatpush1.msra.mxu0 0.0
    %2753 = vmatprep.subr.mxu0 0.0
    %2754 = vmatpush1.msra.mxu0 0.0
    %2755 = vmatprep.subr.mxu0 0.0
    %2756 = vmatpush1.msra.mxu0 0.0
    %2757 = vmatprep.subr.mxu0 0.0
    %2758 = vmatpush1.msra.mxu0 0.0
    %2759 = vmatprep.subr.mxu0 0.0
    %2760 = vmatpush1.msra.mxu0 0.0
    %2761 = vmatprep.subr.mxu0 0.0
    %2762 = vmatpush1.msra.mxu0 0.0
    %2763 = vmatprep.subr.mxu0 0.0
    %2764 = vmatpush1.msra.mxu0 0.0
    %2765 = vmatprep.subr.mxu0 0.0
    %2766 = vmatpush1.msra.mxu0 0.0
    %2767 = vmatprep.subr.mxu0 0.0
    %2768 = vmatpush1.msra.mxu0 0.0
    %2769 = vmatprep.subr.mxu0 0.0
    %2770 = vmatpush1.msra.mxu0 0.0
    %2771 = vmatprep.subr.mxu0 0.0
    %2772 = vmatpush1.msra.mxu0 0.0
    %2773 = vmatprep.subr.mxu0 0.0
    %2774 = vmatpush1.msra.mxu0 0.0
    %2775 = vmatprep.subr.mxu0 0.0
    %2776 = vmatpush1.msra.mxu0 0.0
    %2777 = vmatprep.subr.mxu0 0.0
    %2778 = vmatpush1.msra.mxu0 0.0
    %2779 = vmatprep.subr.mxu0 0.0
    %2780 = vmatpush1.msra.mxu0 0.0
    %2781 = vmatprep.subr.mxu0 0.0
    %2782 = vmatpush1.msra.mxu0 %v1759
    %2783 = vmatprep.subr.mxu0 0.0
    %2784 = vmatpush2.msra.mxu0 0.0
    %2785 = vmatprep.subr.mxu0 0.0
    %2786 = vmatpush2.msra.mxu0 0.0
    %2787 = vmatprep.subr.mxu0 0.0
    %2788 = vmatpush2.msra.mxu0 0.0
    %2789 = vmatprep.subr.mxu0 0.0
    %2790 = vmatpush2.msra.mxu0 0.0
    %2791 = vmatprep.subr.mxu0 0.0
    %2792 = vmatpush2.msra.mxu0 0.0
    %2793 = vmatprep.subr.mxu0 0.0
    %2794 = vmatpush2.msra.mxu0 0.0
    %2795 = vmatprep.subr.mxu0 0.0
    %2796 = vmatpush2.msra.mxu0 0.0
    %2797 = vmatprep.subr.mxu0 0.0
    %2798 = vmatpush2.msra.mxu0 0.0
    %2799 = vmatprep.subr.mxu0 0.0
    %2800 = vmatpush2.msra.mxu0 0.0
    %2801 = vmatprep.subr.mxu0 0.0
    %2802 = vmatpush2.msra.mxu0 0.0
    %2803 = vmatprep.subr.mxu0 0.0
    %2804 = vmatpush2.msra.mxu0 0.0
    %2805 = vmatprep.subr.mxu0 0.0
    %2806 = vmatpush2.msra.mxu0 0.0
    %2807 = vmatprep.subr.mxu0 0.0
    %2808 = vmatpush2.msra.mxu0 0.0
    %2809 = vmatprep.subr.mxu0 0.0
    %2810 = vmatpush2.msra.mxu0 0.0
    %2811 = vmatprep.subr.mxu0 0.0
    %2812 = vmatpush2.msra.mxu0 0.0
    %2813 = vmatprep.subr.mxu0 0.0
    %2814 = vmatpush2.msra.mxu0 0.0
    %2815 = vmatprep.mubr.f32.mxu0 0.0
    %2816 = vmatmul.mubr.f32.gmra.mxu0 %v2749
    %v2817 = vpop.f32.mrf.mxu0
    %v2818 = vadd.f32 %v2648, %v2817
    %v2819 = vpop.f32.mrf.mxu0
    %2820 = vdwg.mxu0
    %v2821 = vadd.f32 %v2818, %v1760
    %v2822 = vxor.u32 %v2821, 2147483648
    %v2823 = vmul.f32 %v2822, 1.442695
    %v2824 = vpow.pop %v2823
    %v2825 = vadd.f32 %v2824, 1.0
    %v2826 = vrcp.pop %v2825
    %v2827 = vmul.f32 1.0, %v2826
    %v2828 = vtanh.pop %v2821
    %v2829 = vmul.f32 %v2827, %v2569
    %2831 = vrot.lane.b32.xlu0 %v2828, 32
    %v2832 = vpop.permute.xlu0 %2831
    %v2834 = vmul.f32 %v2827, %v2832
    %2836 = vrot.lane.b32.xlu0 %v2834, 32
    %v2837 = vpop.permute.xlu0 %2836
    %v2839 = vadd.f32 %v2829, %v2837
    %v2840 = vtanh.pop %v2839
    %2842 = vrot.lane.b32.xlu0 %v2840, 32
    %v2843 = vpop.permute.xlu0 %2842
    %v2845 = vmul.f32 %v2827, %v2843
    %2847 = vrot.lane.b32.xlu0 %v2845, 64
    %v2848 = vpop.permute.xlu0 %2847
    %v2849 = vsel %vm221, %v2848, 0
    %2851 = vmatprep.subr.mxu0 0.0
    %2852 = vmatpush1.msra.mxu0 0.0
    %2853 = vmatprep.subr.mxu0 0.0
    %2854 = vmatpush1.msra.mxu0 0.0
    %2855 = vmatprep.subr.mxu0 0.0
    %2856 = vmatpush1.msra.mxu0 0.0
    %2857 = vmatprep.subr.mxu0 0.0
    %2858 = vmatpush1.msra.mxu0 0.0
    %2859 = vmatprep.subr.mxu0 0.0
    %2860 = vmatpush1.msra.mxu0 0.0
    %2861 = vmatprep.subr.mxu0 0.0
    %2862 = vmatpush1.msra.mxu0 0.0
    %2863 = vmatprep.subr.mxu0 0.0
    %2864 = vmatpush1.msra.mxu0 0.0
    %2865 = vmatprep.subr.mxu0 0.0
    %2866 = vmatpush1.msra.mxu0 0.0
    %2867 = vmatprep.subr.mxu0 0.0
    %2868 = vmatpush1.msra.mxu0 0.0
    %2869 = vmatprep.subr.mxu0 0.0
    %2870 = vmatpush1.msra.mxu0 0.0
    %2871 = vmatprep.subr.mxu0 0.0
    %2872 = vmatpush1.msra.mxu0 0.0
    %2873 = vmatprep.subr.mxu0 0.0
    %2874 = vmatpush1.msra.mxu0 0.0
    %2875 = vmatprep.subr.mxu0 %v1768
    %2876 = vmatpush1.msra.mxu0 %v1767
    %2877 = vmatprep.subr.mxu0 %v1766
    %2878 = vmatpush1.msra.mxu0 %v1765
    %2879 = vmatprep.subr.mxu0 %v1764
    %2880 = vmatpush1.msra.mxu0 %v1763
    %2881 = vmatprep.subr.mxu0 %v1762
    %2882 = vmatpush1.msra.mxu0 %v1761
    %2883 = vmatprep.subr.mxu0 0.0
    %2884 = vmatpush2.msra.mxu0 0.0
    %2885 = vmatprep.subr.mxu0 0.0
    %2886 = vmatpush2.msra.mxu0 0.0
    %2887 = vmatprep.subr.mxu0 0.0
    %2888 = vmatpush2.msra.mxu0 0.0
    %2889 = vmatprep.subr.mxu0 0.0
    %2890 = vmatpush2.msra.mxu0 0.0
    %2891 = vmatprep.subr.mxu0 0.0
    %2892 = vmatpush2.msra.mxu0 0.0
    %2893 = vmatprep.subr.mxu0 0.0
    %2894 = vmatpush2.msra.mxu0 0.0
    %2895 = vmatprep.subr.mxu0 0.0
    %2896 = vmatpush2.msra.mxu0 0.0
    %2897 = vmatprep.subr.mxu0 0.0
    %2898 = vmatpush2.msra.mxu0 0.0
    %2899 = vmatprep.subr.mxu0 0.0
    %2900 = vmatpush2.msra.mxu0 0.0
    %2901 = vmatprep.subr.mxu0 0.0
    %2902 = vmatpush2.msra.mxu0 0.0
    %2903 = vmatprep.subr.mxu0 0.0
    %2904 = vmatpush2.msra.mxu0 0.0
    %2905 = vmatprep.subr.mxu0 0.0
    %2906 = vmatpush2.msra.mxu0 0.0
    %2907 = vmatprep.subr.mxu0 0.0
    %2908 = vmatpush2.msra.mxu0 0.0
    %2909 = vmatprep.subr.mxu0 0.0
    %2910 = vmatpush2.msra.mxu0 0.0
    %2911 = vmatprep.subr.mxu0 0.0
    %2912 = vmatpush2.msra.mxu0 0.0
    %2913 = vmatprep.subr.mxu0 0.0
    %2914 = vmatpush2.msra.mxu0 0.0
    %2915 = vmatprep.mubr.f32.mxu0 0.0
    %2916 = vmatmul.mubr.f32.gmra.mxu0 %v2849
    %v2917 = vpop.f32.mrf.mxu0
    %v2918 = vadd.f32 0.0, %v2917
    %v2919 = vpop.f32.mrf.mxu0
    %v2920 = vadd.f32 0.0, %v2919
    %2921 = vdwg.mxu0
    %v2923 = vrot.slane %v2920, 4
    %v2925 = vadd.f32 %v1678, %v2923
    %vm2926 = vcmask 126980
    %v2927 = vsel %vm2926, %v2925, -inf
    %2928 = vmax.xlane.f32.xlu0 %v2927
    %v2929 = vpop.xlane.xlu0 %2928
    %v2930 = vsub.f32 %v2925, %v2929
    %v2931 = vmul.f32 %v2930, 1.442695
    %v2932 = vpow.pop %v2931
    %v2933 = vsel %vm2926, %v2932, 0.0
    %2934 = vadd.xlane.f32.xlu0 %v2933
    %v2935 = vpop.xlane.xlu0 %2934
    %v2936 = vrcp.pop %v2935
    %v2937 = vmul.f32 %v2932, %v2936
    %v2939 = vrot.slane %v2937, 4
    %v2940 = vsel %vm1859, %v2939, 0
    %2942 = vmatprep.subr.mxu0 0.0
    %2943 = vmatpush1.msra.mxu0 0.0
    %2944 = vmatprep.subr.mxu0 0.0
    %2945 = vmatpush1.msra.mxu0 0.0
    %2946 = vmatprep.subr.mxu0 0.0
    %2947 = vmatpush1.msra.mxu0 0.0
    %2948 = vmatprep.subr.mxu0 0.0
    %2949 = vmatpush1.msra.mxu0 0.0
    %2950 = vmatprep.subr.mxu0 0.0
    %2951 = vmatpush1.msra.mxu0 0.0
    %2952 = vmatprep.subr.mxu0 0.0
    %2953 = vmatpush1.msra.mxu0 0.0
    %2954 = vmatprep.subr.mxu0 0.0
    %2955 = vmatpush1.msra.mxu0 0.0
    %2956 = vmatprep.subr.mxu0 0.0
    %2957 = vmatpush1.msra.mxu0 0.0
    %2958 = vmatprep.subr.mxu0 0.0
    %2959 = vmatpush1.msra.mxu0 0.0
    %2960 = vmatprep.subr.mxu0 0.0
    %2961 = vmatpush1.msra.mxu0 0.0
    %2962 = vmatprep.subr.mxu0 0.0
    %2963 = vmatpush1.msra.mxu0 0.0
    %2964 = vmatprep.subr.mxu0 0.0
    %2965 = vmatpush1.msra.mxu0 0.0
    %2966 = vmatprep.subr.mxu0 0.0
    %2967 = vmatpush1.msra.mxu0 0.0
    %2968 = vmatprep.subr.mxu0 0.0
    %2969 = vmatpush1.msra.mxu0 0.0
    %2970 = vmatprep.subr.mxu0 0.0
    %2971 = vmatpush1.msra.mxu0 %v1595
    %2972 = vmatprep.subr.mxu0 0.0
    %2973 = vmatpush1.msra.mxu0 %v1590
    %2974 = vmatprep.subr.mxu0 0.0
    %2975 = vmatpush2.msra.mxu0 0.0
    %2976 = vmatprep.subr.mxu0 0.0
    %2977 = vmatpush2.msra.mxu0 0.0
    %2978 = vmatprep.subr.mxu0 0.0
    %2979 = vmatpush2.msra.mxu0 0.0
    %2980 = vmatprep.subr.mxu0 0.0
    %2981 = vmatpush2.msra.mxu0 0.0
    %2982 = vmatprep.subr.mxu0 0.0
    %2983 = vmatpush2.msra.mxu0 0.0
    %2984 = vmatprep.subr.mxu0 0.0
    %2985 = vmatpush2.msra.mxu0 0.0
    %2986 = vmatprep.subr.mxu0 0.0
    %2987 = vmatpush2.msra.mxu0 0.0
    %2988 = vmatprep.subr.mxu0 0.0
    %2989 = vmatpush2.msra.mxu0 0.0
    %2990 = vmatprep.subr.mxu0 0.0
    %2991 = vmatpush2.msra.mxu0 0.0
    %2992 = vmatprep.subr.mxu0 0.0
    %2993 = vmatpush2.msra.mxu0 0.0
    %2994 = vmatprep.subr.mxu0 0.0
    %2995 = vmatpush2.msra.mxu0 0.0
    %2996 = vmatprep.subr.mxu0 0.0
    %2997 = vmatpush2.msra.mxu0 0.0
    %2998 = vmatprep.subr.mxu0 0.0
    %2999 = vmatpush2.msra.mxu0 0.0
    %3000 = vmatprep.subr.mxu0 0.0
    %3001 = vmatpush2.msra.mxu0 0.0
    %3002 = vmatprep.subr.mxu0 0.0
    %3003 = vmatpush2.msra.mxu0 0.0
    %3004 = vmatprep.subr.mxu0 0.0
    %3005 = vmatpush2.msra.mxu0 0.0
    %3006 = vmatprep.mubr.f32.mxu0 0.0
    %3007 = vmatmul.mubr.f32.gmra.mxu0 %v2940
    %v3008 = vpop.f32.mrf.mxu0
    %v3009 = vadd.f32 0.0, %v3008
    %v3010 = vpop.f32.mrf.mxu0
    %3011 = vdwg.mxu0
    %v3013 = vrot.slane %v3009, 4
    %v3015 = vadd.f32 %v1756, %v3013
    %v3016 = vmax.f32 %v3015, 0.0
    %v3018 = vrot.slane %v3016, 4
    %v3019 = vsel %vm1607, %v3018, 0
    %3021 = vmatprep.subr.mxu0 0.0
    %3022 = vmatpush1.msra.mxu0 0.0
    %3023 = vmatprep.subr.mxu0 0.0
    %3024 = vmatpush1.msra.mxu0 0.0
    %3025 = vmatprep.subr.mxu0 0.0
    %3026 = vmatpush1.msra.mxu0 0.0
    %3027 = vmatprep.subr.mxu0 0.0
    %3028 = vmatpush1.msra.mxu0 0.0
    %3029 = vmatprep.subr.mxu0 0.0
    %3030 = vmatpush1.msra.mxu0 0.0
    %3031 = vmatprep.subr.mxu0 0.0
    %3032 = vmatpush1.msra.mxu0 0.0
    %3033 = vmatprep.subr.mxu0 0.0
    %3034 = vmatpush1.msra.mxu0 0.0
    %3035 = vmatprep.subr.mxu0 0.0
    %3036 = vmatpush1.msra.mxu0 0.0
    %3037 = vmatprep.subr.mxu0 0.0
    %3038 = vmatpush1.msra.mxu0 0.0
    %3039 = vmatprep.subr.mxu0 0.0
    %3040 = vmatpush1.msra.mxu0 0.0
    %3041 = vmatprep.subr.mxu0 0.0
    %3042 = vmatpush1.msra.mxu0 0.0
    %3043 = vmatprep.subr.mxu0 0.0
    %3044 = vmatpush1.msra.mxu0 0.0
    %3045 = vmatprep.subr.mxu0 0.0
    %3046 = vmatpush1.msra.mxu0 0.0
    %3047 = vmatprep.subr.mxu0 0.0
    %3048 = vmatpush1.msra.mxu0 0.0
    %3049 = vmatprep.subr.mxu0 0.0
    %3050 = vmatpush1.msra.mxu0 0.0
    %3051 = vmatprep.subr.mxu0 0.0
    %3052 = vmatpush1.msra.mxu0 %v1759
    %3053 = vmatprep.subr.mxu0 0.0
    %3054 = vmatpush2.msra.mxu0 0.0
    %3055 = vmatprep.subr.mxu0 0.0
    %3056 = vmatpush2.msra.mxu0 0.0
    %3057 = vmatprep.subr.mxu0 0.0
    %3058 = vmatpush2.msra.mxu0 0.0
    %3059 = vmatprep.subr.mxu0 0.0
    %3060 = vmatpush2.msra.mxu0 0.0
    %3061 = vmatprep.subr.mxu0 0.0
    %3062 = vmatpush2.msra.mxu0 0.0
    %3063 = vmatprep.subr.mxu0 0.0
    %3064 = vmatpush2.msra.mxu0 0.0
    %3065 = vmatprep.subr.mxu0 0.0
    %3066 = vmatpush2.msra.mxu0 0.0
    %3067 = vmatprep.subr.mxu0 0.0
    %3068 = vmatpush2.msra.mxu0 0.0
    %3069 = vmatprep.subr.mxu0 0.0
    %3070 = vmatpush2.msra.mxu0 0.0
    %3071 = vmatprep.subr.mxu0 0.0
    %3072 = vmatpush2.msra.mxu0 0.0
    %3073 = vmatprep.subr.mxu0 0.0
    %3074 = vmatpush2.msra.mxu0 0.0
    %3075 = vmatprep.subr.mxu0 0.0
    %3076 = vmatpush2.msra.mxu0 0.0
    %3077 = vmatprep.subr.mxu0 0.0
    %3078 = vmatpush2.msra.mxu0 0.0
    %3079 = vmatprep.subr.mxu0 0.0
    %3080 = vmatpush2.msra.mxu0 0.0
    %3081 = vmatprep.subr.mxu0 0.0
    %3082 = vmatpush2.msra.mxu0 0.0
    %3083 = vmatprep.subr.mxu0 0.0
    %3084 = vmatpush2.msra.mxu0 0.0
    %3085 = vmatprep.mubr.f32.mxu0 0.0
    %3086 = vmatmul.mubr.f32.gmra.mxu0 %v3019
    %v3087 = vpop.f32.mrf.mxu0
    %v3088 = vadd.f32 %v2918, %v3087
    %v3089 = vpop.f32.mrf.mxu0
    %3090 = vdwg.mxu0
    %v3091 = vadd.f32 %v3088, %v1760
    %v3092 = vxor.u32 %v3091, 2147483648
    %v3093 = vmul.f32 %v3092, 1.442695
    %v3094 = vpow.pop %v3093
    %v3095 = vadd.f32 %v3094, 1.0
    %v3096 = vrcp.pop %v3095
    %v3097 = vmul.f32 1.0, %v3096
    %v3098 = vtanh.pop %v3091
    %v3099 = vmul.f32 %v3097, %v2839
    %3101 = vrot.lane.b32.xlu0 %v3098, 32
    %v3102 = vpop.permute.xlu0 %3101
    %v3104 = vmul.f32 %v3097, %v3102
    %3106 = vrot.lane.b32.xlu0 %v3104, 32
    %v3107 = vpop.permute.xlu0 %3106
    %v3109 = vadd.f32 %v3099, %v3107
    %v3110 = vtanh.pop %v3109
    %3112 = vrot.lane.b32.xlu0 %v3110, 32
    %v3113 = vpop.permute.xlu0 %3112
    %v3115 = vmul.f32 %v3097, %v3113
    %3117 = vrot.lane.b32.xlu0 %v3115, 64
    %v3118 = vpop.permute.xlu0 %3117
    %v3119 = vsel %vm221, %v3118, 0
    %3121 = vmatprep.subr.mxu0 0.0
    %3122 = vmatpush1.msra.mxu0 0.0
    %3123 = vmatprep.subr.mxu0 0.0
    %3124 = vmatpush1.msra.mxu0 0.0
    %3125 = vmatprep.subr.mxu0 0.0
    %3126 = vmatpush1.msra.mxu0 0.0
    %3127 = vmatprep.subr.mxu0 0.0
    %3128 = vmatpush1.msra.mxu0 0.0
    %3129 = vmatprep.subr.mxu0 0.0
    %3130 = vmatpush1.msra.mxu0 0.0
    %3131 = vmatprep.subr.mxu0 0.0
    %3132 = vmatpush1.msra.mxu0 0.0
    %3133 = vmatprep.subr.mxu0 0.0
    %3134 = vmatpush1.msra.mxu0 0.0
    %3135 = vmatprep.subr.mxu0 0.0
    %3136 = vmatpush1.msra.mxu0 0.0
    %3137 = vmatprep.subr.mxu0 0.0
    %3138 = vmatpush1.msra.mxu0 0.0
    %3139 = vmatprep.subr.mxu0 0.0
    %3140 = vmatpush1.msra.mxu0 0.0
    %3141 = vmatprep.subr.mxu0 0.0
    %3142 = vmatpush1.msra.mxu0 0.0
    %3143 = vmatprep.subr.mxu0 0.0
    %3144 = vmatpush1.msra.mxu0 0.0
    %3145 = vmatprep.subr.mxu0 %v1768
    %3146 = vmatpush1.msra.mxu0 %v1767
    %3147 = vmatprep.subr.mxu0 %v1766
    %3148 = vmatpush1.msra.mxu0 %v1765
    %3149 = vmatprep.subr.mxu0 %v1764
    %3150 = vmatpush1.msra.mxu0 %v1763
    %3151 = vmatprep.subr.mxu0 %v1762
    %3152 = vmatpush1.msra.mxu0 %v1761
    %3153 = vmatprep.subr.mxu0 0.0
    %3154 = vmatpush2.msra.mxu0 0.0
    %3155 = vmatprep.subr.mxu0 0.0
    %3156 = vmatpush2.msra.mxu0 0.0
    %3157 = vmatprep.subr.mxu0 0.0
    %3158 = vmatpush2.msra.mxu0 0.0
    %3159 = vmatprep.subr.mxu0 0.0
    %3160 = vmatpush2.msra.mxu0 0.0
    %3161 = vmatprep.subr.mxu0 0.0
    %3162 = vmatpush2.msra.mxu0 0.0
    %3163 = vmatprep.subr.mxu0 0.0
    %3164 = vmatpush2.msra.mxu0 0.0
    %3165 = vmatprep.subr.mxu0 0.0
    %3166 = vmatpush2.msra.mxu0 0.0
    %3167 = vmatprep.subr.mxu0 0.0
    %3168 = vmatpush2.msra.mxu0 0.0
    %3169 = vmatprep.subr.mxu0 0.0
    %3170 = vmatpush2.msra.mxu0 0.0
    %3171 = vmatprep.subr.mxu0 0.0
    %3172 = vmatpush2.msra.mxu0 0.0
    %3173 = vmatprep.subr.mxu0 0.0
    %3174 = vmatpush2.msra.mxu0 0.0
    %3175 = vmatprep.subr.mxu0 0.0
    %3176 = vmatpush2.msra.mxu0 0.0
    %3177 = vmatprep.subr.mxu0 0.0
    %3178 = vmatpush2.msra.mxu0 0.0
    %3179 = vmatprep.subr.mxu0 0.0
    %3180 = vmatpush2.msra.mxu0 0.0
    %3181 = vmatprep.subr.mxu0 0.0
    %3182 = vmatpush2.msra.mxu0 0.0
    %3183 = vmatprep.subr.mxu0 0.0
    %3184 = vmatpush2.msra.mxu0 0.0
    %3185 = vmatprep.mubr.f32.mxu0 0.0
    %3186 = vmatmul.mubr.f32.gmra.mxu0 %v3119
    %v3187 = vpop.f32.mrf.mxu0
    %v3188 = vadd.f32 0.0, %v3187
    %v3189 = vpop.f32.mrf.mxu0
    %v3190 = vadd.f32 0.0, %v3189
    %3191 = vdwg.mxu0
    %v3193 = vrot.slane %v3190, 3
    %v3195 = vadd.f32 %v1678, %v3193
    %vm3196 = vcmask 128005
    %v3197 = vsel %vm3196, %v3195, -inf
    %3198 = vmax.xlane.f32.xlu0 %v3197
    %v3199 = vpop.xlane.xlu0 %3198
    %v3200 = vsub.f32 %v3195, %v3199
    %v3201 = vmul.f32 %v3200, 1.442695
    %v3202 = vpow.pop %v3201
    %v3203 = vsel %vm3196, %v3202, 0.0
    %3204 = vadd.xlane.f32.xlu0 %v3203
    %v3205 = vpop.xlane.xlu0 %3204
    %v3206 = vrcp.pop %v3205
    %v3207 = vmul.f32 %v3202, %v3206
    %v3209 = vrot.slane %v3207, 5
    %v3210 = vsel %vm1859, %v3209, 0
    %3212 = vmatprep.subr.mxu0 0.0
    %3213 = vmatpush1.msra.mxu0 0.0
    %3214 = vmatprep.subr.mxu0 0.0
    %3215 = vmatpush1.msra.mxu0 0.0
    %3216 = vmatprep.subr.mxu0 0.0
    %3217 = vmatpush1.msra.mxu0 0.0
    %3218 = vmatprep.subr.mxu0 0.0
    %3219 = vmatpush1.msra.mxu0 0.0
    %3220 = vmatprep.subr.mxu0 0.0
    %3221 = vmatpush1.msra.mxu0 0.0
    %3222 = vmatprep.subr.mxu0 0.0
    %3223 = vmatpush1.msra.mxu0 0.0
    %3224 = vmatprep.subr.mxu0 0.0
    %3225 = vmatpush1.msra.mxu0 0.0
    %3226 = vmatprep.subr.mxu0 0.0
    %3227 = vmatpush1.msra.mxu0 0.0
    %3228 = vmatprep.subr.mxu0 0.0
    %3229 = vmatpush1.msra.mxu0 0.0
    %3230 = vmatprep.subr.mxu0 0.0
    %3231 = vmatpush1.msra.mxu0 0.0
    %3232 = vmatprep.subr.mxu0 0.0
    %3233 = vmatpush1.msra.mxu0 0.0
    %3234 = vmatprep.subr.mxu0 0.0
    %3235 = vmatpush1.msra.mxu0 0.0
    %3236 = vmatprep.subr.mxu0 0.0
    %3237 = vmatpush1.msra.mxu0 0.0
    %3238 = vmatprep.subr.mxu0 0.0
    %3239 = vmatpush1.msra.mxu0 0.0
    %3240 = vmatprep.subr.mxu0 0.0
    %3241 = vmatpush1.msra.mxu0 %v1595
    %3242 = vmatprep.subr.mxu0 0.0
    %3243 = vmatpush1.msra.mxu0 %v1590
    %3244 = vmatprep.subr.mxu0 0.0
    %3245 = vmatpush2.msra.mxu0 0.0
    %3246 = vmatprep.subr.mxu0 0.0
    %3247 = vmatpush2.msra.mxu0 0.0
    %3248 = vmatprep.subr.mxu0 0.0
    %3249 = vmatpush2.msra.mxu0 0.0
    %3250 = vmatprep.subr.mxu0 0.0
    %3251 = vmatpush2.msra.mxu0 0.0
    %3252 = vmatprep.subr.mxu0 0.0
    %3253 = vmatpush2.msra.mxu0 0.0
    %3254 = vmatprep.subr.mxu0 0.0
    %3255 = vmatpush2.msra.mxu0 0.0
    %3256 = vmatprep.subr.mxu0 0.0
    %3257 = vmatpush2.msra.mxu0 0.0
    %3258 = vmatprep.subr.mxu0 0.0
    %3259 = vmatpush2.msra.mxu0 0.0
    %3260 = vmatprep.subr.mxu0 0.0
    %3261 = vmatpush2.msra.mxu0 0.0
    %3262 = vmatprep.subr.mxu0 0.0
    %3263 = vmatpush2.msra.mxu0 0.0
    %3264 = vmatprep.subr.mxu0 0.0
    %3265 = vmatpush2.msra.mxu0 0.0
    %3266 = vmatprep.subr.mxu0 0.0
    %3267 = vmatpush2.msra.mxu0 0.0
    %3268 = vmatprep.subr.mxu0 0.0
    %3269 = vmatpush2.msra.mxu0 0.0
    %3270 = vmatprep.subr.mxu0 0.0
    %3271 = vmatpush2.msra.mxu0 0.0
    %3272 = vmatprep.subr.mxu0 0.0
    %3273 = vmatpush2.msra.mxu0 0.0
    %3274 = vmatprep.subr.mxu0 0.0
    %3275 = vmatpush2.msra.mxu0 0.0
    %3276 = vmatprep.mubr.f32.mxu0 0.0
    %3277 = vmatmul.mubr.f32.gmra.mxu0 %v3210
    %v3278 = vpop.f32.mrf.mxu0
    %v3279 = vadd.f32 0.0, %v3278
    %v3280 = vpop.f32.mrf.mxu0
    %3281 = vdwg.mxu0
    %v3283 = vrot.slane %v3279, 3
    %v3285 = vadd.f32 %v1756, %v3283
    %v3286 = vmax.f32 %v3285, 0.0
    %v3288 = vrot.slane %v3286, 5
    %v3289 = vsel %vm1607, %v3288, 0
    %3291 = vmatprep.subr.mxu0 0.0
    %3292 = vmatpush1.msra.mxu0 0.0
    %3293 = vmatprep.subr.mxu0 0.0
    %3294 = vmatpush1.msra.mxu0 0.0
    %3295 = vmatprep.subr.mxu0 0.0
    %3296 = vmatpush1.msra.mxu0 0.0
    %3297 = vmatprep.subr.mxu0 0.0
    %3298 = vmatpush1.msra.mxu0 0.0
    %3299 = vmatprep.subr.mxu0 0.0
    %3300 = vmatpush1.msra.mxu0 0.0
    %3301 = vmatprep.subr.mxu0 0.0
    %3302 = vmatpush1.msra.mxu0 0.0
    %3303 = vmatprep.subr.mxu0 0.0
    %3304 = vmatpush1.msra.mxu0 0.0
    %3305 = vmatprep.subr.mxu0 0.0
    %3306 = vmatpush1.msra.mxu0 0.0
    %3307 = vmatprep.subr.mxu0 0.0
    %3308 = vmatpush1.msra.mxu0 0.0
    %3309 = vmatprep.subr.mxu0 0.0
    %3310 = vmatpush1.msra.mxu0 0.0
    %3311 = vmatprep.subr.mxu0 0.0
    %3312 = vmatpush1.msra.mxu0 0.0
    %3313 = vmatprep.subr.mxu0 0.0
    %3314 = vmatpush1.msra.mxu0 0.0
    %3315 = vmatprep.subr.mxu0 0.0
    %3316 = vmatpush1.msra.mxu0 0.0
    %3317 = vmatprep.subr.mxu0 0.0
    %3318 = vmatpush1.msra.mxu0 0.0
    %3319 = vmatprep.subr.mxu0 0.0
    %3320 = vmatpush1.msra.mxu0 0.0
    %3321 = vmatprep.subr.mxu0 0.0
    %3322 = vmatpush1.msra.mxu0 %v1759
    %3323 = vmatprep.subr.mxu0 0.0
    %3324 = vmatpush2.msra.mxu0 0.0
    %3325 = vmatprep.subr.mxu0 0.0
    %3326 = vmatpush2.msra.mxu0 0.0
    %3327 = vmatprep.subr.mxu0 0.0
    %3328 = vmatpush2.msra.mxu0 0.0
    %3329 = vmatprep.subr.mxu0 0.0
    %3330 = vmatpush2.msra.mxu0 0.0
    %3331 = vmatprep.subr.mxu0 0.0
    %3332 = vmatpush2.msra.mxu0 0.0
    %3333 = vmatprep.subr.mxu0 0.0
    %3334 = vmatpush2.msra.mxu0 0.0
    %3335 = vmatprep.subr.mxu0 0.0
    %3336 = vmatpush2.msra.mxu0 0.0
    %3337 = vmatprep.subr.mxu0 0.0
    %3338 = vmatpush2.msra.mxu0 0.0
    %3339 = vmatprep.subr.mxu0 0.0
    %3340 = vmatpush2.msra.mxu0 0.0
    %3341 = vmatprep.subr.mxu0 0.0
    %3342 = vmatpush2.msra.mxu0 0.0
    %3343 = vmatprep.subr.mxu0 0.0
    %3344 = vmatpush2.msra.mxu0 0.0
    %3345 = vmatprep.subr.mxu0 0.0
    %3346 = vmatpush2.msra.mxu0 0.0
    %3347 = vmatprep.subr.mxu0 0.0
    %3348 = vmatpush2.msra.mxu0 0.0
    %3349 = vmatprep.subr.mxu0 0.0
    %3350 = vmatpush2.msra.mxu0 0.0
    %3351 = vmatprep.subr.mxu0 0.0
    %3352 = vmatpush2.msra.mxu0 0.0
    %3353 = vmatprep.subr.mxu0 0.0
    %3354 = vmatpush2.msra.mxu0 0.0
    %3355 = vmatprep.mubr.f32.mxu0 0.0
    %3356 = vmatmul.mubr.f32.gmra.mxu0 %v3289
    %v3357 = vpop.f32.mrf.mxu0
    %v3358 = vadd.f32 %v3188, %v3357
    %v3359 = vpop.f32.mrf.mxu0
    %3360 = vdwg.mxu0
    %v3361 = vadd.f32 %v3358, %v1760
    %v3362 = vxor.u32 %v3361, 2147483648
    %v3363 = vmul.f32 %v3362, 1.442695
    %v3364 = vpow.pop %v3363
    %v3365 = vadd.f32 %v3364, 1.0
    %v3366 = vrcp.pop %v3365
    %v3367 = vmul.f32 1.0, %v3366
    %v3368 = vtanh.pop %v3361
    %v3369 = vmul.f32 %v3367, %v3109
    %3371 = vrot.lane.b32.xlu0 %v3368, 32
    %v3372 = vpop.permute.xlu0 %3371
    %v3374 = vmul.f32 %v3367, %v3372
    %3376 = vrot.lane.b32.xlu0 %v3374, 32
    %v3377 = vpop.permute.xlu0 %3376
    %v3379 = vadd.f32 %v3369, %v3377
    %v3380 = vtanh.pop %v3379
    %3382 = vrot.lane.b32.xlu0 %v3380, 32
    %v3383 = vpop.permute.xlu0 %3382
    %v3385 = vmul.f32 %v3367, %v3383
    %3387 = vrot.lane.b32.xlu0 %v3385, 64
    %v3388 = vpop.permute.xlu0 %3387
    %v3389 = vsel %vm221, %v3388, 0
    %3391 = vmatprep.subr.mxu0 0.0
    %3392 = vmatpush1.msra.mxu0 0.0
    %3393 = vmatprep.subr.mxu0 0.0
    %3394 = vmatpush1.msra.mxu0 0.0
    %3395 = vmatprep.subr.mxu0 0.0
    %3396 = vmatpush1.msra.mxu0 0.0
    %3397 = vmatprep.subr.mxu0 0.0
    %3398 = vmatpush1.msra.mxu0 0.0
    %3399 = vmatprep.subr.mxu0 0.0
    %3400 = vmatpush1.msra.mxu0 0.0
    %3401 = vmatprep.subr.mxu0 0.0
    %3402 = vmatpush1.msra.mxu0 0.0
    %3403 = vmatprep.subr.mxu0 0.0
    %3404 = vmatpush1.msra.mxu0 0.0
    %3405 = vmatprep.subr.mxu0 0.0
    %3406 = vmatpush1.msra.mxu0 0.0
    %3407 = vmatprep.subr.mxu0 0.0
    %3408 = vmatpush1.msra.mxu0 0.0
    %3409 = vmatprep.subr.mxu0 0.0
    %3410 = vmatpush1.msra.mxu0 0.0
    %3411 = vmatprep.subr.mxu0 0.0
    %3412 = vmatpush1.msra.mxu0 0.0
    %3413 = vmatprep.subr.mxu0 0.0
    %3414 = vmatpush1.msra.mxu0 0.0
    %3415 = vmatprep.subr.mxu0 %v1768
    %3416 = vmatpush1.msra.mxu0 %v1767
    %3417 = vmatprep.subr.mxu0 %v1766
    %3418 = vmatpush1.msra.mxu0 %v1765
    %3419 = vmatprep.subr.mxu0 %v1764
    %3420 = vmatpush1.msra.mxu0 %v1763
    %3421 = vmatprep.subr.mxu0 %v1762
    %3422 = vmatpush1.msra.mxu0 %v1761
    %3423 = vmatprep.subr.mxu0 0.0
    %3424 = vmatpush2.msra.mxu0 0.0
    %3425 = vmatprep.subr.mxu0 0.0
    %3426 = vmatpush2.msra.mxu0 0.0
    %3427 = vmatprep.subr.mxu0 0.0
    %3428 = vmatpush2.msra.mxu0 0.0
    %3429 = vmatprep.subr.mxu0 0.0
    %3430 = vmatpush2.msra.mxu0 0.0
    %3431 = vmatprep.subr.mxu0 0.0
    %3432 = vmatpush2.msra.mxu0 0.0
    %3433 = vmatprep.subr.mxu0 0.0
    %3434 = vmatpush2.msra.mxu0 0.0
    %3435 = vmatprep.subr.mxu0 0.0
    %3436 = vmatpush2.msra.mxu0 0.0
    %3437 = vmatprep.subr.mxu0 0.0
    %3438 = vmatpush2.msra.mxu0 0.0
    %3439 = vmatprep.subr.mxu0 0.0
    %3440 = vmatpush2.msra.mxu0 0.0
    %3441 = vmatprep.subr.mxu0 0.0
    %3442 = vmatpush2.msra.mxu0 0.0
    %3443 = vmatprep.subr.mxu0 0.0
    %3444 = vmatpush2.msra.mxu0 0.0
    %3445 = vmatprep.subr.mxu0 0.0
    %3446 = vmatpush2.msra.mxu0 0.0
    %3447 = vmatprep.subr.mxu0 0.0
    %3448 = vmatpush2.msra.mxu0 0.0
    %3449 = vmatprep.subr.mxu0 0.0
    %3450 = vmatpush2.msra.mxu0 0.0
    %3451 = vmatprep.subr.mxu0 0.0
    %3452 = vmatpush2.msra.mxu0 0.0
    %3453 = vmatprep.subr.mxu0 0.0
    %3454 = vmatpush2.msra.mxu0 0.0
    %3455 = vmatprep.mubr.f32.mxu0 0.0
    %3456 = vmatmul.mubr.f32.gmra.mxu0 %v3389
    %v3457 = vpop.f32.mrf.mxu0
    %v3458 = vadd.f32 0.0, %v3457
    %v3459 = vpop.f32.mrf.mxu0
    %v3460 = vadd.f32 0.0, %v3459
    %3461 = vdwg.mxu0
    %v3463 = vrot.slane %v3460, 2
    %v3465 = vadd.f32 %v1678, %v3463
    %vm3466 = vcmask 129030
    %v3467 = vsel %vm3466, %v3465, -inf
    %3468 = vmax.xlane.f32.xlu0 %v3467
    %v3469 = vpop.xlane.xlu0 %3468
    %v3470 = vsub.f32 %v3465, %v3469
    %v3471 = vmul.f32 %v3470, 1.442695
    %v3472 = vpow.pop %v3471
    %v3473 = vsel %vm3466, %v3472, 0.0
    %3474 = vadd.xlane.f32.xlu0 %v3473
    %v3475 = vpop.xlane.xlu0 %3474
    %v3476 = vrcp.pop %v3475
    %v3477 = vmul.f32 %v3472, %v3476
    %v3479 = vrot.slane %v3477, 6
    %v3480 = vsel %vm1859, %v3479, 0
    %3482 = vmatprep.subr.mxu0 0.0
    %3483 = vmatpush1.msra.mxu0 0.0
    %3484 = vmatprep.subr.mxu0 0.0
    %3485 = vmatpush1.msra.mxu0 0.0
    %3486 = vmatprep.subr.mxu0 0.0
    %3487 = vmatpush1.msra.mxu0 0.0
    %3488 = vmatprep.subr.mxu0 0.0
    %3489 = vmatpush1.msra.mxu0 0.0
    %3490 = vmatprep.subr.mxu0 0.0
    %3491 = vmatpush1.msra.mxu0 0.0
    %3492 = vmatprep.subr.mxu0 0.0
    %3493 = vmatpush1.msra.mxu0 0.0
    %3494 = vmatprep.subr.mxu0 0.0
    %3495 = vmatpush1.msra.mxu0 0.0
    %3496 = vmatprep.subr.mxu0 0.0
    %3497 = vmatpush1.msra.mxu0 0.0
    %3498 = vmatprep.subr.mxu0 0.0
    %3499 = vmatpush1.msra.mxu0 0.0
    %3500 = vmatprep.subr.mxu0 0.0
    %3501 = vmatpush1.msra.mxu0 0.0
    %3502 = vmatprep.subr.mxu0 0.0
    %3503 = vmatpush1.msra.mxu0 0.0
    %3504 = vmatprep.subr.mxu0 0.0
    %3505 = vmatpush1.msra.mxu0 0.0
    %3506 = vmatprep.subr.mxu0 0.0
    %3507 = vmatpush1.msra.mxu0 0.0
    %3508 = vmatprep.subr.mxu0 0.0
    %3509 = vmatpush1.msra.mxu0 0.0
    %3510 = vmatprep.subr.mxu0 0.0
    %3511 = vmatpush1.msra.mxu0 %v1595
    %3512 = vmatprep.subr.mxu0 0.0
    %3513 = vmatpush1.msra.mxu0 %v1590
    %3514 = vmatprep.subr.mxu0 0.0
    %3515 = vmatpush2.msra.mxu0 0.0
    %3516 = vmatprep.subr.mxu0 0.0
    %3517 = vmatpush2.msra.mxu0 0.0
    %3518 = vmatprep.subr.mxu0 0.0
    %3519 = vmatpush2.msra.mxu0 0.0
    %3520 = vmatprep.subr.mxu0 0.0
    %3521 = vmatpush2.msra.mxu0 0.0
    %3522 = vmatprep.subr.mxu0 0.0
    %3523 = vmatpush2.msra.mxu0 0.0
    %3524 = vmatprep.subr.mxu0 0.0
    %3525 = vmatpush2.msra.mxu0 0.0
    %3526 = vmatprep.subr.mxu0 0.0
    %3527 = vmatpush2.msra.mxu0 0.0
    %3528 = vmatprep.subr.mxu0 0.0
    %3529 = vmatpush2.msra.mxu0 0.0
    %3530 = vmatprep.subr.mxu0 0.0
    %3531 = vmatpush2.msra.mxu0 0.0
    %3532 = vmatprep.subr.mxu0 0.0
    %3533 = vmatpush2.msra.mxu0 0.0
    %3534 = vmatprep.subr.mxu0 0.0
    %3535 = vmatpush2.msra.mxu0 0.0
    %3536 = vmatprep.subr.mxu0 0.0
    %3537 = vmatpush2.msra.mxu0 0.0
    %3538 = vmatprep.subr.mxu0 0.0
    %3539 = vmatpush2.msra.mxu0 0.0
    %3540 = vmatprep.subr.mxu0 0.0
    %3541 = vmatpush2.msra.mxu0 0.0
    %3542 = vmatprep.subr.mxu0 0.0
    %3543 = vmatpush2.msra.mxu0 0.0
    %3544 = vmatprep.subr.mxu0 0.0
    %3545 = vmatpush2.msra.mxu0 0.0
    %3546 = vmatprep.mubr.f32.mxu0 0.0
    %3547 = vmatmul.mubr.f32.gmra.mxu0 %v3480
    %v3548 = vpop.f32.mrf.mxu0
    %v3549 = vadd.f32 0.0, %v3548
    %v3550 = vpop.f32.mrf.mxu0
    %3551 = vdwg.mxu0
    %v3553 = vrot.slane %v3549, 2
    %v3555 = vadd.f32 %v1756, %v3553
    %v3556 = vmax.f32 %v3555, 0.0
    %v3558 = vrot.slane %v3556, 6
    %v3559 = vsel %vm1607, %v3558, 0
    %3561 = vmatprep.subr.mxu0 0.0
    %3562 = vmatpush1.msra.mxu0 0.0
    %3563 = vmatprep.subr.mxu0 0.0
    %3564 = vmatpush1.msra.mxu0 0.0
    %3565 = vmatprep.subr.mxu0 0.0
    %3566 = vmatpush1.msra.mxu0 0.0
    %3567 = vmatprep.subr.mxu0 0.0
    %3568 = vmatpush1.msra.mxu0 0.0
    %3569 = vmatprep.subr.mxu0 0.0
    %3570 = vmatpush1.msra.mxu0 0.0
    %3571 = vmatprep.subr.mxu0 0.0
    %3572 = vmatpush1.msra.mxu0 0.0
    %3573 = vmatprep.subr.mxu0 0.0
    %3574 = vmatpush1.msra.mxu0 0.0
    %3575 = vmatprep.subr.mxu0 0.0
    %3576 = vmatpush1.msra.mxu0 0.0
    %3577 = vmatprep.subr.mxu0 0.0
    %3578 = vmatpush1.msra.mxu0 0.0
    %3579 = vmatprep.subr.mxu0 0.0
    %3580 = vmatpush1.msra.mxu0 0.0
    %3581 = vmatprep.subr.mxu0 0.0
    %3582 = vmatpush1.msra.mxu0 0.0
    %3583 = vmatprep.subr.mxu0 0.0
    %3584 = vmatpush1.msra.mxu0 0.0
    %3585 = vmatprep.subr.mxu0 0.0
    %3586 = vmatpush1.msra.mxu0 0.0
    %3587 = vmatprep.subr.mxu0 0.0
    %3588 = vmatpush1.msra.mxu0 0.0
    %3589 = vmatprep.subr.mxu0 0.0
    %3590 = vmatpush1.msra.mxu0 0.0
    %3591 = vmatprep.subr.mxu0 0.0
    %3592 = vmatpush1.msra.mxu0 %v1759
    %3593 = vmatprep.subr.mxu0 0.0
    %3594 = vmatpush2.msra.mxu0 0.0
    %3595 = vmatprep.subr.mxu0 0.0
    %3596 = vmatpush2.msra.mxu0 0.0
    %3597 = vmatprep.subr.mxu0 0.0
    %3598 = vmatpush2.msra.mxu0 0.0
    %3599 = vmatprep.subr.mxu0 0.0
    %3600 = vmatpush2.msra.mxu0 0.0
    %3601 = vmatprep.subr.mxu0 0.0
    %3602 = vmatpush2.msra.mxu0 0.0
    %3603 = vmatprep.subr.mxu0 0.0
    %3604 = vmatpush2.msra.mxu0 0.0
    %3605 = vmatprep.subr.mxu0 0.0
    %3606 = vmatpush2.msra.mxu0 0.0
    %3607 = vmatprep.subr.mxu0 0.0
    %3608 = vmatpush2.msra.mxu0 0.0
    %3609 = vmatprep.subr.mxu0 0.0
    %3610 = vmatpush2.msra.mxu0 0.0
    %3611 = vmatprep.subr.mxu0 0.0
    %3612 = vmatpush2.msra.mxu0 0.0
    %3613 = vmatprep.subr.mxu0 0.0
    %3614 = vmatpush2.msra.mxu0 0.0
    %3615 = vmatprep.subr.mxu0 0.0
    %3616 = vmatpush2.msra.mxu0 0.0
    %3617 = vmatprep.subr.mxu0 0.0
    %3618 = vmatpush2.msra.mxu0 0.0
    %3619 = vmatprep.subr.mxu0 0.0
    %3620 = vmatpush2.msra.mxu0 0.0
    %3621 = vmatprep.subr.mxu0 0.0
    %3622 = vmatpush2.msra.mxu0 0.0
    %3623 = vmatprep.subr.mxu0 0.0
    %3624 = vmatpush2.msra.mxu0 0.0
    %3625 = vmatprep.mubr.f32.mxu0 0.0
    %3626 = vmatmul.mubr.f32.gmra.mxu0 %v3559
    %v3627 = vpop.f32.mrf.mxu0
    %v3628 = vadd.f32 %v3458, %v3627
    %v3629 = vpop.f32.mrf.mxu0
    %3630 = vdwg.mxu0
    %v3631 = vadd.f32 %v3628, %v1760
    %v3632 = vxor.u32 %v3631, 2147483648
    %v3633 = vmul.f32 %v3632, 1.442695
    %v3634 = vpow.pop %v3633
    %v3635 = vadd.f32 %v3634, 1.0
    %v3636 = vrcp.pop %v3635
    %v3637 = vmul.f32 1.0, %v3636
    %v3638 = vtanh.pop %v3631
    %v3639 = vmul.f32 %v3637, %v3379
    %3641 = vrot.lane.b32.xlu0 %v3638, 32
    %v3642 = vpop.permute.xlu0 %3641
    %v3644 = vmul.f32 %v3637, %v3642
    %3646 = vrot.lane.b32.xlu0 %v3644, 32
    %v3647 = vpop.permute.xlu0 %3646
    %v3649 = vadd.f32 %v3639, %v3647
    %v3650 = vtanh.pop %v3649
    %3652 = vrot.lane.b32.xlu0 %v3650, 32
    %v3653 = vpop.permute.xlu0 %3652
    %v3655 = vmul.f32 %v3637, %v3653
    %v3656 = vrot.slane %v2305, 7
    %v3658 = vrot.slane %v2575, 6
    %v3660 = vrot.slane %v2845, 5
    %v3662 = vrot.slane %v3115, 4
    %v3664 = vrot.slane %v3385, 3
    %v3667 = vrot.slane %v3655, 2
    %v3669 = vsel %vm1492, %v2035, %v3656
    %v3670 = vsel %vm1494, %v3669, %v3658
    %v3671 = vsel %vm1496, %v3670, %v3660
    %v3672 = vsel %vm138, %v3671, %v3662
    %v3673 = vsel %vm1499, %v3672, %v3664
    %v3674 = vsel %vm1501, %v3673, %v3667
    %v3675 = vld [vmem:[%s13] sm:$0xff]
    %v3676 = vld [vmem:[%s13 + $0x8] sm:$0xff]
    %v3677 = vld [vmem:[%s13 + $0x10] sm:$0xff]
    %v3678 = vld [vmem:[%s13 + $0x18] sm:$0xff]
    %v3679 = vld [vmem:[%s14] sm:$0x1]
    %v3681 = vlaneseq
    %v3682 = vshrl.u32 %v3681, 7
    %v3683 = vsub.s32 0, %v3682
    %v3684 = vrot.slane %v3679, %v3683
    %3687 = vrot.lane.b32.xlu0 %v3674, 64
    %v3688 = vpop.permute.xlu0 %3687
    %v3689 = vsel %vm221, %v3688, 0
    %3691 = vmatprep.subr.mxu0 0.0
    %3692 = vmatpush1.msra.mxu0 0.0
    %3693 = vmatprep.subr.mxu0 0.0
    %3694 = vmatpush1.msra.mxu0 0.0
    %3695 = vmatprep.subr.mxu0 0.0
    %3696 = vmatpush1.msra.mxu0 0.0
    %3697 = vmatprep.subr.mxu0 0.0
    %3698 = vmatpush1.msra.mxu0 0.0
    %3699 = vmatprep.subr.mxu0 0.0
    %3700 = vmatpush1.msra.mxu0 0.0
    %3701 = vmatprep.subr.mxu0 0.0
    %3702 = vmatpush1.msra.mxu0 0.0
    %3703 = vmatprep.subr.mxu0 0.0
    %3704 = vmatpush1.msra.mxu0 0.0
    %3705 = vmatprep.subr.mxu0 0.0
    %3706 = vmatpush1.msra.mxu0 0.0
    %3707 = vmatprep.subr.mxu0 0.0
    %3708 = vmatpush1.msra.mxu0 0.0
    %3709 = vmatprep.subr.mxu0 0.0
    %3710 = vmatpush1.msra.mxu0 0.0
    %3711 = vmatprep.subr.mxu0 0.0
    %3712 = vmatpush1.msra.mxu0 0.0
    %3713 = vmatprep.subr.mxu0 0.0
    %3714 = vmatpush1.msra.mxu0 0.0
    %3715 = vmatprep.subr.mxu0 0.0
    %3716 = vmatpush1.msra.mxu0 %v3678
    %3717 = vmatprep.subr.mxu0 0.0
    %3718 = vmatpush1.msra.mxu0 %v3677
    %3719 = vmatprep.subr.mxu0 0.0
    %3720 = vmatpush1.msra.mxu0 %v3676
    %3721 = vmatprep.subr.mxu0 0.0
    %3722 = vmatpush1.msra.mxu0 %v3675
    %3723 = vmatprep.subr.mxu0 0.0
    %3724 = vmatpush2.msra.mxu0 0.0
    %3725 = vmatprep.subr.mxu0 0.0
    %3726 = vmatpush2.msra.mxu0 0.0
    %3727 = vmatprep.subr.mxu0 0.0
    %3728 = vmatpush2.msra.mxu0 0.0
    %3729 = vmatprep.subr.mxu0 0.0
    %3730 = vmatpush2.msra.mxu0 0.0
    %3731 = vmatprep.subr.mxu0 0.0
    %3732 = vmatpush2.msra.mxu0 0.0
    %3733 = vmatprep.subr.mxu0 0.0
    %3734 = vmatpush2.msra.mxu0 0.0
    %3735 = vmatprep.subr.mxu0 0.0
    %3736 = vmatpush2.msra.mxu0 0.0
    %3737 = vmatprep.subr.mxu0 0.0
    %3738 = vmatpush2.msra.mxu0 0.0
    %3739 = vmatprep.subr.mxu0 0.0
    %3740 = vmatpush2.msra.mxu0 0.0
    %3741 = vmatprep.subr.mxu0 0.0
    %3742 = vmatpush2.msra.mxu0 0.0
    %3743 = vmatprep.subr.mxu0 0.0
    %3744 = vmatpush2.msra.mxu0 0.0
    %3745 = vmatprep.subr.mxu0 0.0
    %3746 = vmatpush2.msra.mxu0 0.0
    %3747 = vmatprep.subr.mxu0 0.0
    %3748 = vmatpush2.msra.mxu0 0.0
    %3749 = vmatprep.subr.mxu0 0.0
    %3750 = vmatpush2.msra.mxu0 0.0
    %3751 = vmatprep.subr.mxu0 0.0
    %3752 = vmatpush2.msra.mxu0 0.0
    %3753 = vmatprep.subr.mxu0 0.0
    %3754 = vmatpush2.msra.mxu0 0.0
    %3755 = vmatprep.mubr.f32.mxu0 0.0
    %3756 = vmatmul.mubr.f32.gmra.mxu0 %v3689
    %v3757 = vpop.f32.mrf.mxu0
    %v3758 = vadd.f32 %v3684, %v3757
    %v3759 = vpop.f32.mrf.mxu0
    %3760 = vdwg.mxu0
    %vm3761 = vcmask 63488
    %v3762 = vsel %vm3761, %v3758, -inf
    %3763 = vmax.xlane.f32.xlu0 %v3762
    %v3764 = vpop.xlane.xlu0 %3763
    %v3765 = vsub.f32 %v3758, %v3764
    %v3766 = vmul.f32 %v3765, 1.442695
    %v3767 = vpow.pop %v3766
    %v3768 = vsel %vm3761, %v3767, 0.0
    %3769 = vadd.xlane.f32.xlu0 %v3768
    %v3770 = vpop.xlane.xlu0 %3769
    %v3771 = vrcp.pop %v3770
    %v3772 = vmul.f32 %v3767, %v3771
    %3773 = vst.msk [vmem:[#allocation13] sm:$0x7f] %vm3761, %v3772
    // Predicated region
    $region86: #{tpu_custom_call.1} parent=1 // pred_check
      _
    $region87: #{tpu_custom_call.1} parent=1 // pred_check_branch
      %3775 = sbr.rel (0) target = $region89
    $region88: #{tpu_custom_call.1} parent=1 // pred_region
      %s3777 = ssub.s32 128, 128
      %3778 = vsyncadd [#allocation4], %s3777
      %s3780 = sshll.u32 [#allocation13], 4
      %s3781 = int_to_ptr.vmem [resolvable:$true] %s3780
      %3783 = dma.vmem_to_hbm [thread:$0]  %s3781, 128, %s15, [#allocation4]
    $region89: #{tpu_custom_call.1} parent=1 // pred_fallthru
      _
    // Predicated region
    $region90: #{tpu_custom_call.1} parent=1 // pred_check
      _
    $region91: #{tpu_custom_call.1} parent=1 // pred_check_branch
      %3785 = sbr.rel (0) target = $region93
    $region92: #{tpu_custom_call.1} parent=1 // pred_region
      %3786 = dma.done [#allocation4], 128
    $region93: #{tpu_custom_call.1} parent=1 // pred_fallthru
      _
    %3787 = vsyncpa [#allocation3], 1
    %3788 = vsyncpa [#allocation6], 1
    %3789 = vsyncpa [#allocation9], 1
    %3790 = vsyncpa [#allocation12], 1
    %3791 = vsyncpa [#allocation4], 1

</llo_original>
